<compile_context>
chip_gen: v7x
topology: tpu7x:2x2x1
jax: 0.10.0
libtpu: 0.0.40
codegen_flags: <defaults>
</compile_context>

<pallas_src>
import functools

import jax
import jax.numpy as jnp
from jax import lax
from jax.experimental import pallas as pl
from jax.experimental.pallas import tpu as pltpu


def _round_up(x, m):
    return ((x + m - 1) // m) * m


def gru_bidir_layer_kernel(len_ref, xpf_ref, xpb_ref, whhf_ref, whhb_ref,
                           bhnf_ref, bhnb_ref,
                           outf_ref, outb_ref, hnf_ref, hnb_ref):
    """Fused fwd+bwd single-layer GRU recurrence over the full (masked) sequence.

    len_ref : [B, 1]       int32  valid lengths
    xpf_ref : [T, B, 3*HP] f32    forward  input projection x@W_ih + folded biases
    xpb_ref : [T, B, 3*HP] f32    backward input projection (original time order)
    whh*_ref: [HP, 3*HP]   bf16   fused hidden->hidden weights, gate order (r, z, n)
    bhn*_ref: [1, HP]      f32    b_hn (the only bias that cannot be folded)
    outf_ref: [T, B, HP]   f32    forward outputs (0 at padded positions)
    outb_ref: [T, B, HP]   f32    backward outputs, already in original time order
    hn*_ref : [B, HP]      f32    final hidden state per direction
    """
    T, B, GP = xpf_ref.shape
    HP = GP // 3

    lengths = len_ref[...]            # [B, 1] int32
    bhn_f = bhnf_ref[...]             # [1, HP]  (hoisted out of the loop)
    bhn_b = bhnb_ref[...]

    def gates(gx, gh, bhn, h):
        # PyTorch GRU: r = sig(x_r + h_r), z = sig(x_z + h_z),
        #              n = tanh(x_n + b_in + r * (h@W_hn + b_hn))
        # (b_ir+b_hr, b_iz+b_hz, b_in are pre-folded into gx.)
        r = jax.nn.sigmoid(gx[:, 0:HP] + gh[:, 0:HP])
        z = jax.nn.sigmoid(gx[:, HP:2 * HP] + gh[:, HP:2 * HP])
        n = jnp.tanh(gx[:, 2 * HP:3 * HP] + r * (gh[:, 2 * HP:3 * HP] + bhn))
        return (1.0 - z) * n + z * h

    def step(t, carry):
        h_f, h_b = carry
        rt = T - 1 - t
        m_f = t < lengths             # [B, 1] bool (packed-sequence mask, forward)
        m_b = rt < lengths            # backward direction mask

        # Forward direction: single fused [B,HP] x [HP,3HP] MXU matmul per step.
        gh_f = jnp.dot(h_f.astype(jnp.bfloat16), whhf_ref[...],
                       preferred_element_type=jnp.float32)
        hf_new = gates(xpf_ref[t], gh_f, bhn_f, h_f)

        # Backward direction: reads/writes original time index T-1-t (no flips).
        gh_b = jnp.dot(h_b.astype(jnp.bfloat16), whhb_ref[...],
                       preferred_element_type=jnp.float32)
        hb_new = gates(xpb_ref[rt], gh_b, bhn_b, h_b)

        # pad_packed_sequence semantics: padded positions emit 0, state freezes.
        outf_ref[t] = jnp.where(m_f, hf_new, 0.0)
        outb_ref[rt] = jnp.where(m_b, hb_new, 0.0)
        return (jnp.where(m_f, hf_new, h_f), jnp.where(m_b, hb_new, h_b))

    h0 = jnp.zeros((B, HP), jnp.float32)
    h_f, h_b = lax.fori_loop(0, T, step, (h0, h0), unroll=True)
    hnf_ref[...] = h_f
    hnb_ref[...] = h_b


def run_gru_bidir_layer(lengths2d, xpf, xpb, whh_f, whh_b, bhn_f, bhn_b):
    T, B, GP = xpf.shape
    HP = GP // 3
    vmem = pl.BlockSpec(memory_space=pltpu.MemorySpace.VMEM)
    out_shape = (
        jax.ShapeDtypeStruct((T, B, HP), jnp.float32),   # forward outputs
        jax.ShapeDtypeStruct((T, B, HP), jnp.float32),   # backward outputs
        jax.ShapeDtypeStruct((B, HP), jnp.float32),      # h_n forward
        jax.ShapeDtypeStruct((B, HP), jnp.float32),      # h_n backward
    )
    # TODO(synk): before scaling past toy sizes, add a batch grid axis ("parallel")
    # with B-tiled BlockSpecs so xproj/output tiles double-buffer and fit v7x's
    # 64 MiB VMEM; at T=8, B=2 everything trivially fits.
    return pl.pallas_call(
        gru_bidir_layer_kernel,
        out_shape=out_shape,
        in_specs=[vmem] * 7,
        out_specs=(vmem,) * 4,
    )(lengths2d, xpf, xpb, whh_f, whh_b, bhn_f, bhn_b)


def init_params(key, vocab_size, embedding_size, hidden_size, num_layers):
    """Parameters stored directly in the fused, lane-padded kernel layout."""
    H = hidden_size
    HP = _round_up(H, 128)
    GP = 3 * HP
    params = {}
    k_emb, key = jax.random.split(key)
    params["embedding"] = jax.random.normal(
        k_emb, (vocab_size, embedding_size), jnp.float32) * 0.1

    stdv = 1.0 / float(hidden_size) ** 0.5
    for layer in range(num_layers):
        in_size = embedding_size if layer == 0 else 2 * hidden_size
        layer_p = {}
        for dname in ("f", "b"):
            key, k1, k2, k3, k4 = jax.random.split(key, 5)
            wih = jax.random.uniform(k1, (in_size, 3, H), jnp.float32, -stdv, stdv)
            whh = jax.random.uniform(k2, (H, 3, H), jnp.float32, -stdv, stdv)
            bih = jax.random.uniform(k3, (3, H), jnp.float32, -stdv, stdv)
            bhh = jax.random.uniform(k4, (3, H), jnp.float32, -stdv, stdv)

            # Fused (gate order r,z,n) and padded to 128-lane gate blocks.
            wih_p = jnp.zeros((in_size, 3, HP), jnp.float32).at[:, :, :H].set(wih)
            whh_p = jnp.zeros((HP, 3, HP), jnp.float32).at[:H, :, :H].set(whh)
            # Fold every bias that combines additively with the input projection:
            #   r: b_ir + b_hr, z: b_iz + b_hz, n: b_in. (b_hn stays inside r*(...).)
            bx = jnp.zeros((3, HP), jnp.float32)
            bx = bx.at[0, :H].set(bih[0] + bhh[0])
            bx = bx.at[1, :H].set(bih[1] + bhh[1])
            bx = bx.at[2, :H].set(bih[2])
            bhn = jnp.zeros((1, HP), jnp.float32).at[0, :H].set(bhh[2])

            layer_p[f"wih_{dname}"] = wih_p.reshape(in_size, GP).astype(jnp.bfloat16)
            layer_p[f"whh_{dname}"] = whh_p.reshape(HP, GP).astype(jnp.bfloat16)
            layer_p[f"bx_{dname}"] = bx.reshape(GP)
            layer_p[f"bhn_{dname}"] = bhn
        params[f"layer{layer}"] = layer_p
    return params


@functools.partial(jax.jit, static_argnames=("num_layers", "hidden_size"))
def block_1_forward(tokens, lengths, params, num_layers=2, hidden_size=32):
    """tokens: [T, B] int32, lengths: [B] int32 (pack_padded_sequence semantics)."""
    H = hidden_size
    x = params["embedding"][tokens]            # [T, B, E] embedding gather (XLA glue)
    T, B, _ = x.shape
    lengths2d = lengths.reshape(B, 1).astype(jnp.int32)

    hiddens = []
    out_f = out_b = None
    for layer in range(num_layers):
        p = params[f"layer{layer}"]
        xb = x.astype(jnp.bfloat16)
        # Hoisted input projections: one big MXU-friendly GEMM per direction,
        # biases pre-folded, removed from the serial recurrence entirely.
        xpf = jnp.einsum("tbi,ig->tbg", xb, p["wih_f"],
                         preferred_element_type=jnp.float32) + p["bx_f"]
        xpb = jnp.einsum("tbi,ig->tbg", xb, p["wih_b"],
                         preferred_element_type=jnp.float32) + p["bx_b"]
        of, ob, hf, hb = run_gru_bidir_layer(
            lengths2d, xpf, xpb, p["whh_f"], p["whh_b"], p["bhn_f"], p["bhn_b"])
        out_f, out_b = of[:, :, :H], ob[:, :, :H]
        hiddens += [hf[:, :H], hb[:, :H]]
        x = jnp.concatenate([out_f, out_b], axis=-1)   # next layer input [T, B, 2H]

    # TODO(synk): inter-layer dropout (training-mode only) not implemented; the
    # module's default dropout=0.0 makes this a no-op for the forward pass.
    outputs = out_f + out_b                    # == outputs[:,:,:H] + outputs[:,:,H:]
    hidden = jnp.stack(hiddens, axis=0)        # [num_layers*2, B, H]
    return outputs, hidden


if __name__ == "__main__":
    T, B = 8, 2
    VOCAB = 20
    EMB = 32
    HID = 32
    NUM_LAYERS = 2

    key = jax.random.PRNGKey(0)
    k_tok, k_par = jax.random.split(key)

    tokens = jax.random.randint(k_tok, (T, B), 0, VOCAB, dtype=jnp.int32)
    # lengths sorted descending (pack_padded_sequence enforce_sorted=True semantics)
    lengths = jnp.array([8, 6], dtype=jnp.int32)

    params = init_params(k_par, VOCAB, EMB, HID, NUM_LAYERS)

    outputs, hidden = block_1_forward(tokens, lengths, params,
                                      num_layers=NUM_LAYERS, hidden_size=HID)
    outputs = jax.block_until_ready(outputs)
    hidden = jax.block_until_ready(hidden)

    assert outputs.shape == (T, B, HID)
    assert hidden.shape == (NUM_LAYERS * 2, B, HID)
    assert bool(jnp.all(jnp.isfinite(outputs))) and bool(jnp.all(jnp.isfinite(hidden)))
    # padded positions of the shorter sequence must be zero (pad_packed semantics)
    assert bool(jnp.all(outputs[6:, 1, :] == 0.0))
    print("KERNEL_OK")
</pallas_src>

<mosaic_0001>
module attributes {stable_mosaic.version = 11 : i64} {
  func.func @gru_bidir_layer_kernel(%arg0: memref<2x1xi32, #tpu.memory_space<vmem>>, %arg1: memref<8x2x384xf32, #tpu.memory_space<vmem>>, %arg2: memref<8x2x384xf32, #tpu.memory_space<vmem>>, %arg3: memref<128x384xbf16, #tpu.memory_space<vmem>>, %arg4: memref<128x384xbf16, #tpu.memory_space<vmem>>, %arg5: memref<1x128xf32, #tpu.memory_space<vmem>>, %arg6: memref<1x128xf32, #tpu.memory_space<vmem>>, %arg7: memref<8x2x128xf32, #tpu.memory_space<vmem>>, %arg8: memref<8x2x128xf32, #tpu.memory_space<vmem>>, %arg9: memref<2x128xf32, #tpu.memory_space<vmem>>, %arg10: memref<2x128xf32, #tpu.memory_space<vmem>>) attributes {dimension_semantics = [], scalar_prefetch = 0 : i64, scratch_operands = 0 : i64, tpu.core_type = #tpu.core_type<tc>} {
    %c0 = arith.constant 0 : index
    %c0_0 = arith.constant 0 : index
    %0 = vector.load %arg0[%c0, %c0_0] : memref<2x1xi32, #tpu.memory_space<vmem>>, vector<2x1xi32>
    %c0_1 = arith.constant 0 : index
    %c0_2 = arith.constant 0 : index
    %1 = vector.load %arg5[%c0_1, %c0_2] : memref<1x128xf32, #tpu.memory_space<vmem>>, vector<1x128xf32>
    %c0_3 = arith.constant 0 : index
    %c0_4 = arith.constant 0 : index
    %2 = vector.load %arg6[%c0_3, %c0_4] : memref<1x128xf32, #tpu.memory_space<vmem>>, vector<1x128xf32>
    %cst = arith.constant 0.000000e+00 : f32
    %3 = vector.broadcast %cst : f32 to vector<2x128xf32>
    %c0_i32 = arith.constant 0 : i32
    %c7_i32 = arith.constant 7 : i32
    %4 = arith.subi %c7_i32, %c0_i32 : i32
    %5 = vector.broadcast %c0_i32 : i32 to vector<2x1xi32>
    %6 = arith.cmpi slt, %5, %0 : vector<2x1xi32>
    %7 = vector.broadcast %4 : i32 to vector<2x1xi32>
    %8 = arith.cmpi slt, %7, %0 : vector<2x1xi32>
    %9 = arith.truncf %3 : vector<2x128xf32> to vector<2x128xbf16>
    %c0_5 = arith.constant 0 : index
    %c0_6 = arith.constant 0 : index
    %10 = vector.load %arg3[%c0_5, %c0_6] : memref<128x384xbf16, #tpu.memory_space<vmem>>, vector<128x384xbf16>
    %cst_7 = arith.constant dense<0.000000e+00> : vector<2x384xf32>
    %11 = tpu.matmul %9, %10, %cst_7 {dimension_numbers = #tpu.dot_dimension_numbers<[1], [0], [0], [1], [0, 0, 1, 1], [], []>} : vector<2x128xbf16>, vector<128x384xbf16>, vector<2x384xf32> -> vector<2x384xf32>
    %12 = arith.index_cast %c0_i32 : i32 to index
    %c0_8 = arith.constant 0 : index
    %c0_9 = arith.constant 0 : index
    %13 = vector.load %arg1[%12, %c0_8, %c0_9] : memref<8x2x384xf32, #tpu.memory_space<vmem>>, vector<1x2x384xf32>
    %14 = vector.shape_cast %13 : vector<1x2x384xf32> to vector<2x384xf32>
    %15 = vector.extract_strided_slice %14 {offsets = [0, 0], sizes = [2, 128], strides = [1, 1]} : vector<2x384xf32> to vector<2x128xf32>
    %16 = vector.extract_strided_slice %11 {offsets = [0, 0], sizes = [2, 128], strides = [1, 1]} : vector<2x384xf32> to vector<2x128xf32>
    %17 = arith.addf %15, %16 : vector<2x128xf32>
    %18 = arith.negf %17 : vector<2x128xf32>
    %19 = math.exp %18 : vector<2x128xf32>
    %cst_10 = arith.constant 1.000000e+00 : f32
    %20 = vector.broadcast %cst_10 : f32 to vector<2x128xf32>
    %21 = arith.addf %20, %19 : vector<2x128xf32>
    %22 = arith.divf %20, %21 : vector<2x128xf32>
    %23 = vector.extract_strided_slice %14 {offsets = [0, 128], sizes = [2, 128], strides = [1, 1]} : vector<2x384xf32> to vector<2x128xf32>
    %24 = vector.extract_strided_slice %11 {offsets = [0, 128], sizes = [2, 128], strides = [1, 1]} : vector<2x384xf32> to vector<2x128xf32>
    %25 = arith.addf %23, %24 : vector<2x128xf32>
    %26 = arith.negf %25 : vector<2x128xf32>
    %27 = math.exp %26 : vector<2x128xf32>
    %cst_11 = arith.constant 1.000000e+00 : f32
    %28 = vector.broadcast %cst_11 : f32 to vector<2x128xf32>
    %29 = arith.addf %28, %27 : vector<2x128xf32>
    %30 = arith.divf %28, %29 : vector<2x128xf32>
    %31 = vector.extract_strided_slice %14 {offsets = [0, 256], sizes = [2, 128], strides = [1, 1]} : vector<2x384xf32> to vector<2x128xf32>
    %32 = vector.extract_strided_slice %11 {offsets = [0, 256], sizes = [2, 128], strides = [1, 1]} : vector<2x384xf32> to vector<2x128xf32>
    %33 = vector.broadcast %1 : vector<1x128xf32> to vector<2x128xf32>
    %34 = arith.addf %32, %33 : vector<2x128xf32>
    %35 = arith.mulf %22, %34 : vector<2x128xf32>
    %36 = arith.addf %31, %35 : vector<2x128xf32>
    %37 = math.tanh %36 : vector<2x128xf32>
    %cst_12 = arith.constant 1.000000e+00 : f32
    %38 = vector.broadcast %cst_12 : f32 to vector<2x128xf32>
    %39 = arith.subf %38, %30 : vector<2x128xf32>
    %40 = arith.mulf %39, %37 : vector<2x128xf32>
    %41 = arith.mulf %30, %3 : vector<2x128xf32>
    %42 = arith.addf %40, %41 : vector<2x128xf32>
    %43 = arith.truncf %3 : vector<2x128xf32> to vector<2x128xbf16>
    %c0_13 = arith.constant 0 : index
    %c0_14 = arith.constant 0 : index
    %44 = vector.load %arg4[%c0_13, %c0_14] : memref<128x384xbf16, #tpu.memory_space<vmem>>, vector<128x384xbf16>
    %cst_15 = arith.constant dense<0.000000e+00> : vector<2x384xf32>
    %45 = tpu.matmul %43, %44, %cst_15 {dimension_numbers = #tpu.dot_dimension_numbers<[1], [0], [0], [1], [0, 0, 1, 1], [], []>} : vector<2x128xbf16>, vector<128x384xbf16>, vector<2x384xf32> -> vector<2x384xf32>
    %46 = arith.index_cast %4 : i32 to index
    %c0_16 = arith.constant 0 : index
    %c0_17 = arith.constant 0 : index
    %47 = vector.load %arg2[%46, %c0_16, %c0_17] : memref<8x2x384xf32, #tpu.memory_space<vmem>>, vector<1x2x384xf32>
    %48 = vector.shape_cast %47 : vector<1x2x384xf32> to vector<2x384xf32>
    %49 = vector.extract_strided_slice %48 {offsets = [0, 0], sizes = [2, 128], strides = [1, 1]} : vector<2x384xf32> to vector<2x128xf32>
    %50 = vector.extract_strided_slice %45 {offsets = [0, 0], sizes = [2, 128], strides = [1, 1]} : vector<2x384xf32> to vector<2x128xf32>
    %51 = arith.addf %49, %50 : vector<2x128xf32>
    %52 = arith.negf %51 : vector<2x128xf32>
    %53 = math.exp %52 : vector<2x128xf32>
    %cst_18 = arith.constant 1.000000e+00 : f32
    %54 = vector.broadcast %cst_18 : f32 to vector<2x128xf32>
    %55 = arith.addf %54, %53 : vector<2x128xf32>
    %56 = arith.divf %54, %55 : vector<2x128xf32>
    %57 = vector.extract_strided_slice %48 {offsets = [0, 128], sizes = [2, 128], strides = [1, 1]} : vector<2x384xf32> to vector<2x128xf32>
    %58 = vector.extract_strided_slice %45 {offsets = [0, 128], sizes = [2, 128], strides = [1, 1]} : vector<2x384xf32> to vector<2x128xf32>
    %59 = arith.addf %57, %58 : vector<2x128xf32>
    %60 = arith.negf %59 : vector<2x128xf32>
    %61 = math.exp %60 : vector<2x128xf32>
    %cst_19 = arith.constant 1.000000e+00 : f32
    %62 = vector.broadcast %cst_19 : f32 to vector<2x128xf32>
    %63 = arith.addf %62, %61 : vector<2x128xf32>
    %64 = arith.divf %62, %63 : vector<2x128xf32>
    %65 = vector.extract_strided_slice %48 {offsets = [0, 256], sizes = [2, 128], strides = [1, 1]} : vector<2x384xf32> to vector<2x128xf32>
    %66 = vector.extract_strided_slice %45 {offsets = [0, 256], sizes = [2, 128], strides = [1, 1]} : vector<2x384xf32> to vector<2x128xf32>
    %67 = vector.broadcast %2 : vector<1x128xf32> to vector<2x128xf32>
    %68 = arith.addf %66, %67 : vector<2x128xf32>
    %69 = arith.mulf %56, %68 : vector<2x128xf32>
    %70 = arith.addf %65, %69 : vector<2x128xf32>
    %71 = math.tanh %70 : vector<2x128xf32>
    %cst_20 = arith.constant 1.000000e+00 : f32
    %72 = vector.broadcast %cst_20 : f32 to vector<2x128xf32>
    %73 = arith.subf %72, %64 : vector<2x128xf32>
    %74 = arith.mulf %73, %71 : vector<2x128xf32>
    %75 = arith.mulf %64, %3 : vector<2x128xf32>
    %76 = arith.addf %74, %75 : vector<2x128xf32>
    %cst_21 = arith.constant 0.000000e+00 : f32
    %77 = vector.shape_cast %6 : vector<2x1xi1> to vector<2x1xi1>
    %78 = vector.broadcast %77 : vector<2x1xi1> to vector<2x128xi1>
    %79 = vector.broadcast %cst_21 : f32 to vector<2x128xf32>
    %80 = arith.select %78, %42, %79 : vector<2x128xi1>, vector<2x128xf32>
    %81 = arith.index_cast %c0_i32 : i32 to index
    %c0_22 = arith.constant 0 : index
    %c0_23 = arith.constant 0 : index
    %82 = vector.load %arg7[%81, %c0_22, %c0_23] : memref<8x2x128xf32, #tpu.memory_space<vmem>>, vector<1x2x128xf32>
    %83 = vector.shape_cast %82 : vector<1x2x128xf32> to vector<2x128xf32>
    %84 = vector.shape_cast %80 : vector<2x128xf32> to vector<1x2x128xf32>
    tpu.vector_store %arg7[%81, %c0_22, %c0_23], %84 {strides = array<i32>} : memref<8x2x128xf32, #tpu.memory_space<vmem>>, vector<1x2x128xf32>,
    %cst_24 = arith.constant 0.000000e+00 : f32
    %85 = vector.shape_cast %8 : vector<2x1xi1> to vector<2x1xi1>
    %86 = vector.broadcast %85 : vector<2x1xi1> to vector<2x128xi1>
    %87 = vector.broadcast %cst_24 : f32 to vector<2x128xf32>
    %88 = arith.select %86, %76, %87 : vector<2x128xi1>, vector<2x128xf32>
    %89 = arith.index_cast %4 : i32 to index
    %c0_25 = arith.constant 0 : index
    %c0_26 = arith.constant 0 : index
    %90 = vector.load %arg8[%89, %c0_25, %c0_26] : memref<8x2x128xf32, #tpu.memory_space<vmem>>, vector<1x2x128xf32>
    %91 = vector.shape_cast %90 : vector<1x2x128xf32> to vector<2x128xf32>
    %92 = vector.shape_cast %88 : vector<2x128xf32> to vector<1x2x128xf32>
    tpu.vector_store %arg8[%89, %c0_25, %c0_26], %92 {strides = array<i32>} : memref<8x2x128xf32, #tpu.memory_space<vmem>>, vector<1x2x128xf32>,
    %93 = vector.shape_cast %6 : vector<2x1xi1> to vector<2x1xi1>
    %94 = vector.broadcast %93 : vector<2x1xi1> to vector<2x128xi1>
    %95 = arith.select %94, %42, %3 : vector<2x128xi1>, vector<2x128xf32>
    %96 = vector.shape_cast %8 : vector<2x1xi1> to vector<2x1xi1>
    %97 = vector.broadcast %96 : vector<2x1xi1> to vector<2x128xi1>
    %98 = arith.select %97, %76, %3 : vector<2x128xi1>, vector<2x128xf32>
    %c1_i32 = arith.constant 1 : i32
    %c7_i32_27 = arith.constant 7 : i32
    %99 = arith.subi %c7_i32_27, %c1_i32 : i32
    %100 = vector.broadcast %c1_i32 : i32 to vector<2x1xi32>
    %101 = arith.cmpi slt, %100, %0 : vector<2x1xi32>
    %102 = vector.broadcast %99 : i32 to vector<2x1xi32>
    %103 = arith.cmpi slt, %102, %0 : vector<2x1xi32>
    %104 = arith.truncf %95 : vector<2x128xf32> to vector<2x128xbf16>
    %c0_28 = arith.constant 0 : index
    %c0_29 = arith.constant 0 : index
    %105 = vector.load %arg3[%c0_28, %c0_29] : memref<128x384xbf16, #tpu.memory_space<vmem>>, vector<128x384xbf16>
    %cst_30 = arith.constant dense<0.000000e+00> : vector<2x384xf32>
    %106 = tpu.matmul %104, %105, %cst_30 {dimension_numbers = #tpu.dot_dimension_numbers<[1], [0], [0], [1], [0, 0, 1, 1], [], []>} : vector<2x128xbf16>, vector<128x384xbf16>, vector<2x384xf32> -> vector<2x384xf32>
    %107 = arith.index_cast %c1_i32 : i32 to index
    %c0_31 = arith.constant 0 : index
    %c0_32 = arith.constant 0 : index
    %108 = vector.load %arg1[%107, %c0_31, %c0_32] : memref<8x2x384xf32, #tpu.memory_space<vmem>>, vector<1x2x384xf32>
    %109 = vector.shape_cast %108 : vector<1x2x384xf32> to vector<2x384xf32>
    %110 = vector.extract_strided_slice %109 {offsets = [0, 0], sizes = [2, 128], strides = [1, 1]} : vector<2x384xf32> to vector<2x128xf32>
    %111 = vector.extract_strided_slice %106 {offsets = [0, 0], sizes = [2, 128], strides = [1, 1]} : vector<2x384xf32> to vector<2x128xf32>
    %112 = arith.addf %110, %111 : vector<2x128xf32>
    %113 = arith.negf %112 : vector<2x128xf32>
    %114 = math.exp %113 : vector<2x128xf32>
    %cst_33 = arith.constant 1.000000e+00 : f32
    %115 = vector.broadcast %cst_33 : f32 to vector<2x128xf32>
    %116 = arith.addf %115, %114 : vector<2x128xf32>
    %117 = arith.divf %115, %116 : vector<2x128xf32>
    %118 = vector.extract_strided_slice %109 {offsets = [0, 128], sizes = [2, 128], strides = [1, 1]} : vector<2x384xf32> to vector<2x128xf32>
    %119 = vector.extract_strided_slice %106 {offsets = [0, 128], sizes = [2, 128], strides = [1, 1]} : vector<2x384xf32> to vector<2x128xf32>
    %120 = arith.addf %118, %119 : vector<2x128xf32>
    %121 = arith.negf %120 : vector<2x128xf32>
    %122 = math.exp %121 : vector<2x128xf32>
    %cst_34 = arith.constant 1.000000e+00 : f32
    %123 = vector.broadcast %cst_34 : f32 to vector<2x128xf32>
    %124 = arith.addf %123, %122 : vector<2x128xf32>
    %125 = arith.divf %123, %124 : vector<2x128xf32>
    %126 = vector.extract_strided_slice %109 {offsets = [0, 256], sizes = [2, 128], strides = [1, 1]} : vector<2x384xf32> to vector<2x128xf32>
    %127 = vector.extract_strided_slice %106 {offsets = [0, 256], sizes = [2, 128], strides = [1, 1]} : vector<2x384xf32> to vector<2x128xf32>
    %128 = vector.broadcast %1 : vector<1x128xf32> to vector<2x128xf32>
    %129 = arith.addf %127, %128 : vector<2x128xf32>
    %130 = arith.mulf %117, %129 : vector<2x128xf32>
    %131 = arith.addf %126, %130 : vector<2x128xf32>
    %132 = math.tanh %131 : vector<2x128xf32>
    %cst_35 = arith.constant 1.000000e+00 : f32
    %133 = vector.broadcast %cst_35 : f32 to vector<2x128xf32>
    %134 = arith.subf %133, %125 : vector<2x128xf32>
    %135 = arith.mulf %134, %132 : vector<2x128xf32>
    %136 = arith.mulf %125, %95 : vector<2x128xf32>
    %137 = arith.addf %135, %136 : vector<2x128xf32>
    %138 = arith.truncf %98 : vector<2x128xf32> to vector<2x128xbf16>
    %c0_36 = arith.constant 0 : index
    %c0_37 = arith.constant 0 : index
    %139 = vector.load %arg4[%c0_36, %c0_37] : memref<128x384xbf16, #tpu.memory_space<vmem>>, vector<128x384xbf16>
    %cst_38 = arith.constant dense<0.000000e+00> : vector<2x384xf32>
    %140 = tpu.matmul %138, %139, %cst_38 {dimension_numbers = #tpu.dot_dimension_numbers<[1], [0], [0], [1], [0, 0, 1, 1], [], []>} : vector<2x128xbf16>, vector<128x384xbf16>, vector<2x384xf32> -> vector<2x384xf32>
    %141 = arith.index_cast %99 : i32 to index
    %c0_39 = arith.constant 0 : index
    %c0_40 = arith.constant 0 : index
    %142 = vector.load %arg2[%141, %c0_39, %c0_40] : memref<8x2x384xf32, #tpu.memory_space<vmem>>, vector<1x2x384xf32>
    %143 = vector.shape_cast %142 : vector<1x2x384xf32> to vector<2x384xf32>
    %144 = vector.extract_strided_slice %143 {offsets = [0, 0], sizes = [2, 128], strides = [1, 1]} : vector<2x384xf32> to vector<2x128xf32>
    %145 = vector.extract_strided_slice %140 {offsets = [0, 0], sizes = [2, 128], strides = [1, 1]} : vector<2x384xf32> to vector<2x128xf32>
    %146 = arith.addf %144, %145 : vector<2x128xf32>
    %147 = arith.negf %146 : vector<2x128xf32>
    %148 = math.exp %147 : vector<2x128xf32>
    %cst_41 = arith.constant 1.000000e+00 : f32
    %149 = vector.broadcast %cst_41 : f32 to vector<2x128xf32>
    %150 = arith.addf %149, %148 : vector<2x128xf32>
    %151 = arith.divf %149, %150 : vector<2x128xf32>
    %152 = vector.extract_strided_slice %143 {offsets = [0, 128], sizes = [2, 128], strides = [1, 1]} : vector<2x384xf32> to vector<2x128xf32>
    %153 = vector.extract_strided_slice %140 {offsets = [0, 128], sizes = [2, 128], strides = [1, 1]} : vector<2x384xf32> to vector<2x128xf32>
    %154 = arith.addf %152, %153 : vector<2x128xf32>
    %155 = arith.negf %154 : vector<2x128xf32>
    %156 = math.exp %155 : vector<2x128xf32>
    %cst_42 = arith.constant 1.000000e+00 : f32
    %157 = vector.broadcast %cst_42 : f32 to vector<2x128xf32>
    %158 = arith.addf %157, %156 : vector<2x128xf32>
    %159 = arith.divf %157, %158 : vector<2x128xf32>
    %160 = vector.extract_strided_slice %143 {offsets = [0, 256], sizes = [2, 128], strides = [1, 1]} : vector<2x384xf32> to vector<2x128xf32>
    %161 = vector.extract_strided_slice %140 {offsets = [0, 256], sizes = [2, 128], strides = [1, 1]} : vector<2x384xf32> to vector<2x128xf32>
    %162 = vector.broadcast %2 : vector<1x128xf32> to vector<2x128xf32>
    %163 = arith.addf %161, %162 : vector<2x128xf32>
    %164 = arith.mulf %151, %163 : vector<2x128xf32>
    %165 = arith.addf %160, %164 : vector<2x128xf32>
    %166 = math.tanh %165 : vector<2x128xf32>
    %cst_43 = arith.constant 1.000000e+00 : f32
    %167 = vector.broadcast %cst_43 : f32 to vector<2x128xf32>
    %168 = arith.subf %167, %159 : vector<2x128xf32>
    %169 = arith.mulf %168, %166 : vector<2x128xf32>
    %170 = arith.mulf %159, %98 : vector<2x128xf32>
    %171 = arith.addf %169, %170 : vector<2x128xf32>
    %cst_44 = arith.constant 0.000000e+00 : f32
    %172 = vector.shape_cast %101 : vector<2x1xi1> to vector<2x1xi1>
    %173 = vector.broadcast %172 : vector<2x1xi1> to vector<2x128xi1>
    %174 = vector.broadcast %cst_44 : f32 to vector<2x128xf32>
    %175 = arith.select %173, %137, %174 : vector<2x128xi1>, vector<2x128xf32>
    %176 = arith.index_cast %c1_i32 : i32 to index
    %c0_45 = arith.constant 0 : index
    %c0_46 = arith.constant 0 : index
    %177 = vector.load %arg7[%176, %c0_45, %c0_46] : memref<8x2x128xf32, #tpu.memory_space<vmem>>, vector<1x2x128xf32>
    %178 = vector.shape_cast %177 : vector<1x2x128xf32> to vector<2x128xf32>
    %179 = vector.shape_cast %175 : vector<2x128xf32> to vector<1x2x128xf32>
    tpu.vector_store %arg7[%176, %c0_45, %c0_46], %179 {strides = array<i32>} : memref<8x2x128xf32, #tpu.memory_space<vmem>>, vector<1x2x128xf32>,
    %cst_47 = arith.constant 0.000000e+00 : f32
    %180 = vector.shape_cast %103 : vector<2x1xi1> to vector<2x1xi1>
    %181 = vector.broadcast %180 : vector<2x1xi1> to vector<2x128xi1>
    %182 = vector.broadcast %cst_47 : f32 to vector<2x128xf32>
    %183 = arith.select %181, %171, %182 : vector<2x128xi1>, vector<2x128xf32>
    %184 = arith.index_cast %99 : i32 to index
    %c0_48 = arith.constant 0 : index
    %c0_49 = arith.constant 0 : index
    %185 = vector.load %arg8[%184, %c0_48, %c0_49] : memref<8x2x128xf32, #tpu.memory_space<vmem>>, vector<1x2x128xf32>
    %186 = vector.shape_cast %185 : vector<1x2x128xf32> to vector<2x128xf32>
    %187 = vector.shape_cast %183 : vector<2x128xf32> to vector<1x2x128xf32>
    tpu.vector_store %arg8[%184, %c0_48, %c0_49], %187 {strides = array<i32>} : memref<8x2x128xf32, #tpu.memory_space<vmem>>, vector<1x2x128xf32>,
    %188 = vector.shape_cast %101 : vector<2x1xi1> to vector<2x1xi1>
    %189 = vector.broadcast %188 : vector<2x1xi1> to vector<2x128xi1>
    %190 = arith.select %189, %137, %95 : vector<2x128xi1>, vector<2x128xf32>
    %191 = vector.shape_cast %103 : vector<2x1xi1> to vector<2x1xi1>
    %192 = vector.broadcast %191 : vector<2x1xi1> to vector<2x128xi1>
    %193 = arith.select %192, %171, %98 : vector<2x128xi1>, vector<2x128xf32>
    %c2_i32 = arith.constant 2 : i32
    %c7_i32_50 = arith.constant 7 : i32
    %194 = arith.subi %c7_i32_50, %c2_i32 : i32
    %195 = vector.broadcast %c2_i32 : i32 to vector<2x1xi32>
    %196 = arith.cmpi slt, %195, %0 : vector<2x1xi32>
    %197 = vector.broadcast %194 : i32 to vector<2x1xi32>
    %198 = arith.cmpi slt, %197, %0 : vector<2x1xi32>
    %199 = arith.truncf %190 : vector<2x128xf32> to vector<2x128xbf16>
    %c0_51 = arith.constant 0 : index
    %c0_52 = arith.constant 0 : index
    %200 = vector.load %arg3[%c0_51, %c0_52] : memref<128x384xbf16, #tpu.memory_space<vmem>>, vector<128x384xbf16>
    %cst_53 = arith.constant dense<0.000000e+00> : vector<2x384xf32>
    %201 = tpu.matmul %199, %200, %cst_53 {dimension_numbers = #tpu.dot_dimension_numbers<[1], [0], [0], [1], [0, 0, 1, 1], [], []>} : vector<2x128xbf16>, vector<128x384xbf16>, vector<2x384xf32> -> vector<2x384xf32>
    %202 = arith.index_cast %c2_i32 : i32 to index
    %c0_54 = arith.constant 0 : index
    %c0_55 = arith.constant 0 : index
    %203 = vector.load %arg1[%202, %c0_54, %c0_55] : memref<8x2x384xf32, #tpu.memory_space<vmem>>, vector<1x2x384xf32>
    %204 = vector.shape_cast %203 : vector<1x2x384xf32> to vector<2x384xf32>
    %205 = vector.extract_strided_slice %204 {offsets = [0, 0], sizes = [2, 128], strides = [1, 1]} : vector<2x384xf32> to vector<2x128xf32>
    %206 = vector.extract_strided_slice %201 {offsets = [0, 0], sizes = [2, 128], strides = [1, 1]} : vector<2x384xf32> to vector<2x128xf32>
    %207 = arith.addf %205, %206 : vector<2x128xf32>
    %208 = arith.negf %207 : vector<2x128xf32>
    %209 = math.exp %208 : vector<2x128xf32>
    %cst_56 = arith.constant 1.000000e+00 : f32
    %210 = vector.broadcast %cst_56 : f32 to vector<2x128xf32>
    %211 = arith.addf %210, %209 : vector<2x128xf32>
    %212 = arith.divf %210, %211 : vector<2x128xf32>
    %213 = vector.extract_strided_slice %204 {offsets = [0, 128], sizes = [2, 128], strides = [1, 1]} : vector<2x384xf32> to vector<2x128xf32>
    %214 = vector.extract_strided_slice %201 {offsets = [0, 128], sizes = [2, 128], strides = [1, 1]} : vector<2x384xf32> to vector<2x128xf32>
    %215 = arith.addf %213, %214 : vector<2x128xf32>
    %216 = arith.negf %215 : vector<2x128xf32>
    %217 = math.exp %216 : vector<2x128xf32>
    %cst_57 = arith.constant 1.000000e+00 : f32
    %218 = vector.broadcast %cst_57 : f32 to vector<2x128xf32>
    %219 = arith.addf %218, %217 : vector<2x128xf32>
    %220 = arith.divf %218, %219 : vector<2x128xf32>
    %221 = vector.extract_strided_slice %204 {offsets = [0, 256], sizes = [2, 128], strides = [1, 1]} : vector<2x384xf32> to vector<2x128xf32>
    %222 = vector.extract_strided_slice %201 {offsets = [0, 256], sizes = [2, 128], strides = [1, 1]} : vector<2x384xf32> to vector<2x128xf32>
    %223 = vector.broadcast %1 : vector<1x128xf32> to vector<2x128xf32>
    %224 = arith.addf %222, %223 : vector<2x128xf32>
    %225 = arith.mulf %212, %224 : vector<2x128xf32>
    %226 = arith.addf %221, %225 : vector<2x128xf32>
    %227 = math.tanh %226 : vector<2x128xf32>
    %cst_58 = arith.constant 1.000000e+00 : f32
    %228 = vector.broadcast %cst_58 : f32 to vector<2x128xf32>
    %229 = arith.subf %228, %220 : vector<2x128xf32>
    %230 = arith.mulf %229, %227 : vector<2x128xf32>
    %231 = arith.mulf %220, %190 : vector<2x128xf32>
    %232 = arith.addf %230, %231 : vector<2x128xf32>
    %233 = arith.truncf %193 : vector<2x128xf32> to vector<2x128xbf16>
    %c0_59 = arith.constant 0 : index
    %c0_60 = arith.constant 0 : index
    %234 = vector.load %arg4[%c0_59, %c0_60] : memref<128x384xbf16, #tpu.memory_space<vmem>>, vector<128x384xbf16>
    %cst_61 = arith.constant dense<0.000000e+00> : vector<2x384xf32>
    %235 = tpu.matmul %233, %234, %cst_61 {dimension_numbers = #tpu.dot_dimension_numbers<[1], [0], [0], [1], [0, 0, 1, 1], [], []>} : vector<2x128xbf16>, vector<128x384xbf16>, vector<2x384xf32> -> vector<2x384xf32>
    %236 = arith.index_cast %194 : i32 to index
    %c0_62 = arith.constant 0 : index
    %c0_63 = arith.constant 0 : index
    %237 = vector.load %arg2[%236, %c0_62, %c0_63] : memref<8x2x384xf32, #tpu.memory_space<vmem>>, vector<1x2x384xf32>
    %238 = vector.shape_cast %237 : vector<1x2x384xf32> to vector<2x384xf32>
    %239 = vector.extract_strided_slice %238 {offsets = [0, 0], sizes = [2, 128], strides = [1, 1]} : vector<2x384xf32> to vector<2x128xf32>
    %240 = vector.extract_strided_slice %235 {offsets = [0, 0], sizes = [2, 128], strides = [1, 1]} : vector<2x384xf32> to vector<2x128xf32>
    %241 = arith.addf %239, %240 : vector<2x128xf32>
    %242 = arith.negf %241 : vector<2x128xf32>
    %243 = math.exp %242 : vector<2x128xf32>
    %cst_64 = arith.constant 1.000000e+00 : f32
    %244 = vector.broadcast %cst_64 : f32 to vector<2x128xf32>
    %245 = arith.addf %244, %243 : vector<2x128xf32>
    %246 = arith.divf %244, %245 : vector<2x128xf32>
    %247 = vector.extract_strided_slice %238 {offsets = [0, 128], sizes = [2, 128], strides = [1, 1]} : vector<2x384xf32> to vector<2x128xf32>
    %248 = vector.extract_strided_slice %235 {offsets = [0, 128], sizes = [2, 128], strides = [1, 1]} : vector<2x384xf32> to vector<2x128xf32>
    %249 = arith.addf %247, %248 : vector<2x128xf32>
    %250 = arith.negf %249 : vector<2x128xf32>
    %251 = math.exp %250 : vector<2x128xf32>
    %cst_65 = arith.constant 1.000000e+00 : f32
    %252 = vector.broadcast %cst_65 : f32 to vector<2x128xf32>
    %253 = arith.addf %252, %251 : vector<2x128xf32>
    %254 = arith.divf %252, %253 : vector<2x128xf32>
    %255 = vector.extract_strided_slice %238 {offsets = [0, 256], sizes = [2, 128], strides = [1, 1]} : vector<2x384xf32> to vector<2x128xf32>
    %256 = vector.extract_strided_slice %235 {offsets = [0, 256], sizes = [2, 128], strides = [1, 1]} : vector<2x384xf32> to vector<2x128xf32>
    %257 = vector.broadcast %2 : vector<1x128xf32> to vector<2x128xf32>
    %258 = arith.addf %256, %257 : vector<2x128xf32>
    %259 = arith.mulf %246, %258 : vector<2x128xf32>
    %260 = arith.addf %255, %259 : vector<2x128xf32>
    %261 = math.tanh %260 : vector<2x128xf32>
    %cst_66 = arith.constant 1.000000e+00 : f32
    %262 = vector.broadcast %cst_66 : f32 to vector<2x128xf32>
    %263 = arith.subf %262, %254 : vector<2x128xf32>
    %264 = arith.mulf %263, %261 : vector<2x128xf32>
    %265 = arith.mulf %254, %193 : vector<2x128xf32>
    %266 = arith.addf %264, %265 : vector<2x128xf32>
    %cst_67 = arith.constant 0.000000e+00 : f32
    %267 = vector.shape_cast %196 : vector<2x1xi1> to vector<2x1xi1>
    %268 = vector.broadcast %267 : vector<2x1xi1> to vector<2x128xi1>
    %269 = vector.broadcast %cst_67 : f32 to vector<2x128xf32>
    %270 = arith.select %268, %232, %269 : vector<2x128xi1>, vector<2x128xf32>
    %271 = arith.index_cast %c2_i32 : i32 to index
    %c0_68 = arith.constant 0 : index
    %c0_69 = arith.constant 0 : index
    %272 = vector.load %arg7[%271, %c0_68, %c0_69] : memref<8x2x128xf32, #tpu.memory_space<vmem>>, vector<1x2x128xf32>
    %273 = vector.shape_cast %272 : vector<1x2x128xf32> to vector<2x128xf32>
    %274 = vector.shape_cast %270 : vector<2x128xf32> to vector<1x2x128xf32>
    tpu.vector_store %arg7[%271, %c0_68, %c0_69], %274 {strides = array<i32>} : memref<8x2x128xf32, #tpu.memory_space<vmem>>, vector<1x2x128xf32>,
    %cst_70 = arith.constant 0.000000e+00 : f32
    %275 = vector.shape_cast %198 : vector<2x1xi1> to vector<2x1xi1>
    %276 = vector.broadcast %275 : vector<2x1xi1> to vector<2x128xi1>
    %277 = vector.broadcast %cst_70 : f32 to vector<2x128xf32>
    %278 = arith.select %276, %266, %277 : vector<2x128xi1>, vector<2x128xf32>
    %279 = arith.index_cast %194 : i32 to index
    %c0_71 = arith.constant 0 : index
    %c0_72 = arith.constant 0 : index
    %280 = vector.load %arg8[%279, %c0_71, %c0_72] : memref<8x2x128xf32, #tpu.memory_space<vmem>>, vector<1x2x128xf32>
    %281 = vector.shape_cast %280 : vector<1x2x128xf32> to vector<2x128xf32>
    %282 = vector.shape_cast %278 : vector<2x128xf32> to vector<1x2x128xf32>
    tpu.vector_store %arg8[%279, %c0_71, %c0_72], %282 {strides = array<i32>} : memref<8x2x128xf32, #tpu.memory_space<vmem>>, vector<1x2x128xf32>,
    %283 = vector.shape_cast %196 : vector<2x1xi1> to vector<2x1xi1>
    %284 = vector.broadcast %283 : vector<2x1xi1> to vector<2x128xi1>
    %285 = arith.select %284, %232, %190 : vector<2x128xi1>, vector<2x128xf32>
    %286 = vector.shape_cast %198 : vector<2x1xi1> to vector<2x1xi1>
    %287 = vector.broadcast %286 : vector<2x1xi1> to vector<2x128xi1>
    %288 = arith.select %287, %266, %193 : vector<2x128xi1>, vector<2x128xf32>
    %c3_i32 = arith.constant 3 : i32
    %c7_i32_73 = arith.constant 7 : i32
    %289 = arith.subi %c7_i32_73, %c3_i32 : i32
    %290 = vector.broadcast %c3_i32 : i32 to vector<2x1xi32>
    %291 = arith.cmpi slt, %290, %0 : vector<2x1xi32>
    %292 = vector.broadcast %289 : i32 to vector<2x1xi32>
    %293 = arith.cmpi slt, %292, %0 : vector<2x1xi32>
    %294 = arith.truncf %285 : vector<2x128xf32> to vector<2x128xbf16>
    %c0_74 = arith.constant 0 : index
    %c0_75 = arith.constant 0 : index
    %295 = vector.load %arg3[%c0_74, %c0_75] : memref<128x384xbf16, #tpu.memory_space<vmem>>, vector<128x384xbf16>
    %cst_76 = arith.constant dense<0.000000e+00> : vector<2x384xf32>
    %296 = tpu.matmul %294, %295, %cst_76 {dimension_numbers = #tpu.dot_dimension_numbers<[1], [0], [0], [1], [0, 0, 1, 1], [], []>} : vector<2x128xbf16>, vector<128x384xbf16>, vector<2x384xf32> -> vector<2x384xf32>
    %297 = arith.index_cast %c3_i32 : i32 to index
    %c0_77 = arith.constant 0 : index
    %c0_78 = arith.constant 0 : index
    %298 = vector.load %arg1[%297, %c0_77, %c0_78] : memref<8x2x384xf32, #tpu.memory_space<vmem>>, vector<1x2x384xf32>
    %299 = vector.shape_cast %298 : vector<1x2x384xf32> to vector<2x384xf32>
    %300 = vector.extract_strided_slice %299 {offsets = [0, 0], sizes = [2, 128], strides = [1, 1]} : vector<2x384xf32> to vector<2x128xf32>
    %301 = vector.extract_strided_slice %296 {offsets = [0, 0], sizes = [2, 128], strides = [1, 1]} : vector<2x384xf32> to vector<2x128xf32>
    %302 = arith.addf %300, %301 : vector<2x128xf32>
    %303 = arith.negf %302 : vector<2x128xf32>
    %304 = math.exp %303 : vector<2x128xf32>
    %cst_79 = arith.constant 1.000000e+00 : f32
    %305 = vector.broadcast %cst_79 : f32 to vector<2x128xf32>
    %306 = arith.addf %305, %304 : vector<2x128xf32>
    %307 = arith.divf %305, %306 : vector<2x128xf32>
    %308 = vector.extract_strided_slice %299 {offsets = [0, 128], sizes = [2, 128], strides = [1, 1]} : vector<2x384xf32> to vector<2x128xf32>
    %309 = vector.extract_strided_slice %296 {offsets = [0, 128], sizes = [2, 128], strides = [1, 1]} : vector<2x384xf32> to vector<2x128xf32>
    %310 = arith.addf %308, %309 : vector<2x128xf32>
    %311 = arith.negf %310 : vector<2x128xf32>
    %312 = math.exp %311 : vector<2x128xf32>
    %cst_80 = arith.constant 1.000000e+00 : f32
    %313 = vector.broadcast %cst_80 : f32 to vector<2x128xf32>
    %314 = arith.addf %313, %312 : vector<2x128xf32>
    %315 = arith.divf %313, %314 : vector<2x128xf32>
    %316 = vector.extract_strided_slice %299 {offsets = [0, 256], sizes = [2, 128], strides = [1, 1]} : vector<2x384xf32> to vector<2x128xf32>
    %317 = vector.extract_strided_slice %296 {offsets = [0, 256], sizes = [2, 128], strides = [1, 1]} : vector<2x384xf32> to vector<2x128xf32>
    %318 = vector.broadcast %1 : vector<1x128xf32> to vector<2x128xf32>
    %319 = arith.addf %317, %318 : vector<2x128xf32>
    %320 = arith.mulf %307, %319 : vector<2x128xf32>
    %321 = arith.addf %316, %320 : vector<2x128xf32>
    %322 = math.tanh %321 : vector<2x128xf32>
    %cst_81 = arith.constant 1.000000e+00 : f32
    %323 = vector.broadcast %cst_81 : f32 to vector<2x128xf32>
    %324 = arith.subf %323, %315 : vector<2x128xf32>
    %325 = arith.mulf %324, %322 : vector<2x128xf32>
    %326 = arith.mulf %315, %285 : vector<2x128xf32>
    %327 = arith.addf %325, %326 : vector<2x128xf32>
    %328 = arith.truncf %288 : vector<2x128xf32> to vector<2x128xbf16>
    %c0_82 = arith.constant 0 : index
    %c0_83 = arith.constant 0 : index
    %329 = vector.load %arg4[%c0_82, %c0_83] : memref<128x384xbf16, #tpu.memory_space<vmem>>, vector<128x384xbf16>
    %cst_84 = arith.constant dense<0.000000e+00> : vector<2x384xf32>
    %330 = tpu.matmul %328, %329, %cst_84 {dimension_numbers = #tpu.dot_dimension_numbers<[1], [0], [0], [1], [0, 0, 1, 1], [], []>} : vector<2x128xbf16>, vector<128x384xbf16>, vector<2x384xf32> -> vector<2x384xf32>
    %331 = arith.index_cast %289 : i32 to index
    %c0_85 = arith.constant 0 : index
    %c0_86 = arith.constant 0 : index
    %332 = vector.load %arg2[%331, %c0_85, %c0_86] : memref<8x2x384xf32, #tpu.memory_space<vmem>>, vector<1x2x384xf32>
    %333 = vector.shape_cast %332 : vector<1x2x384xf32> to vector<2x384xf32>
    %334 = vector.extract_strided_slice %333 {offsets = [0, 0], sizes = [2, 128], strides = [1, 1]} : vector<2x384xf32> to vector<2x128xf32>
    %335 = vector.extract_strided_slice %330 {offsets = [0, 0], sizes = [2, 128], strides = [1, 1]} : vector<2x384xf32> to vector<2x128xf32>
    %336 = arith.addf %334, %335 : vector<2x128xf32>
    %337 = arith.negf %336 : vector<2x128xf32>
    %338 = math.exp %337 : vector<2x128xf32>
    %cst_87 = arith.constant 1.000000e+00 : f32
    %339 = vector.broadcast %cst_87 : f32 to vector<2x128xf32>
    %340 = arith.addf %339, %338 : vector<2x128xf32>
    %341 = arith.divf %339, %340 : vector<2x128xf32>
    %342 = vector.extract_strided_slice %333 {offsets = [0, 128], sizes = [2, 128], strides = [1, 1]} : vector<2x384xf32> to vector<2x128xf32>
    %343 = vector.extract_strided_slice %330 {offsets = [0, 128], sizes = [2, 128], strides = [1, 1]} : vector<2x384xf32> to vector<2x128xf32>
    %344 = arith.addf %342, %343 : vector<2x128xf32>
    %345 = arith.negf %344 : vector<2x128xf32>
    %346 = math.exp %345 : vector<2x128xf32>
    %cst_88 = arith.constant 1.000000e+00 : f32
    %347 = vector.broadcast %cst_88 : f32 to vector<2x128xf32>
    %348 = arith.addf %347, %346 : vector<2x128xf32>
    %349 = arith.divf %347, %348 : vector<2x128xf32>
    %350 = vector.extract_strided_slice %333 {offsets = [0, 256], sizes = [2, 128], strides = [1, 1]} : vector<2x384xf32> to vector<2x128xf32>
    %351 = vector.extract_strided_slice %330 {offsets = [0, 256], sizes = [2, 128], strides = [1, 1]} : vector<2x384xf32> to vector<2x128xf32>
    %352 = vector.broadcast %2 : vector<1x128xf32> to vector<2x128xf32>
    %353 = arith.addf %351, %352 : vector<2x128xf32>
    %354 = arith.mulf %341, %353 : vector<2x128xf32>
    %355 = arith.addf %350, %354 : vector<2x128xf32>
    %356 = math.tanh %355 : vector<2x128xf32>
    %cst_89 = arith.constant 1.000000e+00 : f32
    %357 = vector.broadcast %cst_89 : f32 to vector<2x128xf32>
    %358 = arith.subf %357, %349 : vector<2x128xf32>
    %359 = arith.mulf %358, %356 : vector<2x128xf32>
    %360 = arith.mulf %349, %288 : vector<2x128xf32>
    %361 = arith.addf %359, %360 : vector<2x128xf32>
    %cst_90 = arith.constant 0.000000e+00 : f32
    %362 = vector.shape_cast %291 : vector<2x1xi1> to vector<2x1xi1>
    %363 = vector.broadcast %362 : vector<2x1xi1> to vector<2x128xi1>
    %364 = vector.broadcast %cst_90 : f32 to vector<2x128xf32>
    %365 = arith.select %363, %327, %364 : vector<2x128xi1>, vector<2x128xf32>
    %366 = arith.index_cast %c3_i32 : i32 to index
    %c0_91 = arith.constant 0 : index
    %c0_92 = arith.constant 0 : index
    %367 = vector.load %arg7[%366, %c0_91, %c0_92] : memref<8x2x128xf32, #tpu.memory_space<vmem>>, vector<1x2x128xf32>
    %368 = vector.shape_cast %367 : vector<1x2x128xf32> to vector<2x128xf32>
    %369 = vector.shape_cast %365 : vector<2x128xf32> to vector<1x2x128xf32>
    tpu.vector_store %arg7[%366, %c0_91, %c0_92], %369 {strides = array<i32>} : memref<8x2x128xf32, #tpu.memory_space<vmem>>, vector<1x2x128xf32>,
    %cst_93 = arith.constant 0.000000e+00 : f32
    %370 = vector.shape_cast %293 : vector<2x1xi1> to vector<2x1xi1>
    %371 = vector.broadcast %370 : vector<2x1xi1> to vector<2x128xi1>
    %372 = vector.broadcast %cst_93 : f32 to vector<2x128xf32>
    %373 = arith.select %371, %361, %372 : vector<2x128xi1>, vector<2x128xf32>
    %374 = arith.index_cast %289 : i32 to index
    %c0_94 = arith.constant 0 : index
    %c0_95 = arith.constant 0 : index
    %375 = vector.load %arg8[%374, %c0_94, %c0_95] : memref<8x2x128xf32, #tpu.memory_space<vmem>>, vector<1x2x128xf32>
    %376 = vector.shape_cast %375 : vector<1x2x128xf32> to vector<2x128xf32>
    %377 = vector.shape_cast %373 : vector<2x128xf32> to vector<1x2x128xf32>
    tpu.vector_store %arg8[%374, %c0_94, %c0_95], %377 {strides = array<i32>} : memref<8x2x128xf32, #tpu.memory_space<vmem>>, vector<1x2x128xf32>,
    %378 = vector.shape_cast %291 : vector<2x1xi1> to vector<2x1xi1>
    %379 = vector.broadcast %378 : vector<2x1xi1> to vector<2x128xi1>
    %380 = arith.select %379, %327, %285 : vector<2x128xi1>, vector<2x128xf32>
    %381 = vector.shape_cast %293 : vector<2x1xi1> to vector<2x1xi1>
    %382 = vector.broadcast %381 : vector<2x1xi1> to vector<2x128xi1>
    %383 = arith.select %382, %361, %288 : vector<2x128xi1>, vector<2x128xf32>
    %c4_i32 = arith.constant 4 : i32
    %c7_i32_96 = arith.constant 7 : i32
    %384 = arith.subi %c7_i32_96, %c4_i32 : i32
    %385 = vector.broadcast %c4_i32 : i32 to vector<2x1xi32>
    %386 = arith.cmpi slt, %385, %0 : vector<2x1xi32>
    %387 = vector.broadcast %384 : i32 to vector<2x1xi32>
    %388 = arith.cmpi slt, %387, %0 : vector<2x1xi32>
    %389 = arith.truncf %380 : vector<2x128xf32> to vector<2x128xbf16>
    %c0_97 = arith.constant 0 : index
    %c0_98 = arith.constant 0 : index
    %390 = vector.load %arg3[%c0_97, %c0_98] : memref<128x384xbf16, #tpu.memory_space<vmem>>, vector<128x384xbf16>
    %cst_99 = arith.constant dense<0.000000e+00> : vector<2x384xf32>
    %391 = tpu.matmul %389, %390, %cst_99 {dimension_numbers = #tpu.dot_dimension_numbers<[1], [0], [0], [1], [0, 0, 1, 1], [], []>} : vector<2x128xbf16>, vector<128x384xbf16>, vector<2x384xf32> -> vector<2x384xf32>
    %392 = arith.index_cast %c4_i32 : i32 to index
    %c0_100 = arith.constant 0 : index
    %c0_101 = arith.constant 0 : index
    %393 = vector.load %arg1[%392, %c0_100, %c0_101] : memref<8x2x384xf32, #tpu.memory_space<vmem>>, vector<1x2x384xf32>
    %394 = vector.shape_cast %393 : vector<1x2x384xf32> to vector<2x384xf32>
    %395 = vector.extract_strided_slice %394 {offsets = [0, 0], sizes = [2, 128], strides = [1, 1]} : vector<2x384xf32> to vector<2x128xf32>
    %396 = vector.extract_strided_slice %391 {offsets = [0, 0], sizes = [2, 128], strides = [1, 1]} : vector<2x384xf32> to vector<2x128xf32>
    %397 = arith.addf %395, %396 : vector<2x128xf32>
    %398 = arith.negf %397 : vector<2x128xf32>
    %399 = math.exp %398 : vector<2x128xf32>
    %cst_102 = arith.constant 1.000000e+00 : f32
    %400 = vector.broadcast %cst_102 : f32 to vector<2x128xf32>
    %401 = arith.addf %400, %399 : vector<2x128xf32>
    %402 = arith.divf %400, %401 : vector<2x128xf32>
    %403 = vector.extract_strided_slice %394 {offsets = [0, 128], sizes = [2, 128], strides = [1, 1]} : vector<2x384xf32> to vector<2x128xf32>
    %404 = vector.extract_strided_slice %391 {offsets = [0, 128], sizes = [2, 128], strides = [1, 1]} : vector<2x384xf32> to vector<2x128xf32>
    %405 = arith.addf %403, %404 : vector<2x128xf32>
    %406 = arith.negf %405 : vector<2x128xf32>
    %407 = math.exp %406 : vector<2x128xf32>
    %cst_103 = arith.constant 1.000000e+00 : f32
    %408 = vector.broadcast %cst_103 : f32 to vector<2x128xf32>
    %409 = arith.addf %408, %407 : vector<2x128xf32>
    %410 = arith.divf %408, %409 : vector<2x128xf32>
    %411 = vector.extract_strided_slice %394 {offsets = [0, 256], sizes = [2, 128], strides = [1, 1]} : vector<2x384xf32> to vector<2x128xf32>
    %412 = vector.extract_strided_slice %391 {offsets = [0, 256], sizes = [2, 128], strides = [1, 1]} : vector<2x384xf32> to vector<2x128xf32>
    %413 = vector.broadcast %1 : vector<1x128xf32> to vector<2x128xf32>
    %414 = arith.addf %412, %413 : vector<2x128xf32>
    %415 = arith.mulf %402, %414 : vector<2x128xf32>
    %416 = arith.addf %411, %415 : vector<2x128xf32>
    %417 = math.tanh %416 : vector<2x128xf32>
    %cst_104 = arith.constant 1.000000e+00 : f32
    %418 = vector.broadcast %cst_104 : f32 to vector<2x128xf32>
    %419 = arith.subf %418, %410 : vector<2x128xf32>
    %420 = arith.mulf %419, %417 : vector<2x128xf32>
    %421 = arith.mulf %410, %380 : vector<2x128xf32>
    %422 = arith.addf %420, %421 : vector<2x128xf32>
    %423 = arith.truncf %383 : vector<2x128xf32> to vector<2x128xbf16>
    %c0_105 = arith.constant 0 : index
    %c0_106 = arith.constant 0 : index
    %424 = vector.load %arg4[%c0_105, %c0_106] : memref<128x384xbf16, #tpu.memory_space<vmem>>, vector<128x384xbf16>
    %cst_107 = arith.constant dense<0.000000e+00> : vector<2x384xf32>
    %425 = tpu.matmul %423, %424, %cst_107 {dimension_numbers = #tpu.dot_dimension_numbers<[1], [0], [0], [1], [0, 0, 1, 1], [], []>} : vector<2x128xbf16>, vector<128x384xbf16>, vector<2x384xf32> -> vector<2x384xf32>
    %426 = arith.index_cast %384 : i32 to index
    %c0_108 = arith.constant 0 : index
    %c0_109 = arith.constant 0 : index
    %427 = vector.load %arg2[%426, %c0_108, %c0_109] : memref<8x2x384xf32, #tpu.memory_space<vmem>>, vector<1x2x384xf32>
    %428 = vector.shape_cast %427 : vector<1x2x384xf32> to vector<2x384xf32>
    %429 = vector.extract_strided_slice %428 {offsets = [0, 0], sizes = [2, 128], strides = [1, 1]} : vector<2x384xf32> to vector<2x128xf32>
    %430 = vector.extract_strided_slice %425 {offsets = [0, 0], sizes = [2, 128], strides = [1, 1]} : vector<2x384xf32> to vector<2x128xf32>
    %431 = arith.addf %429, %430 : vector<2x128xf32>
    %432 = arith.negf %431 : vector<2x128xf32>
    %433 = math.exp %432 : vector<2x128xf32>
    %cst_110 = arith.constant 1.000000e+00 : f32
    %434 = vector.broadcast %cst_110 : f32 to vector<2x128xf32>
    %435 = arith.addf %434, %433 : vector<2x128xf32>
    %436 = arith.divf %434, %435 : vector<2x128xf32>
    %437 = vector.extract_strided_slice %428 {offsets = [0, 128], sizes = [2, 128], strides = [1, 1]} : vector<2x384xf32> to vector<2x128xf32>
    %438 = vector.extract_strided_slice %425 {offsets = [0, 128], sizes = [2, 128], strides = [1, 1]} : vector<2x384xf32> to vector<2x128xf32>
    %439 = arith.addf %437, %438 : vector<2x128xf32>
    %440 = arith.negf %439 : vector<2x128xf32>
    %441 = math.exp %440 : vector<2x128xf32>
    %cst_111 = arith.constant 1.000000e+00 : f32
    %442 = vector.broadcast %cst_111 : f32 to vector<2x128xf32>
    %443 = arith.addf %442, %441 : vector<2x128xf32>
    %444 = arith.divf %442, %443 : vector<2x128xf32>
    %445 = vector.extract_strided_slice %428 {offsets = [0, 256], sizes = [2, 128], strides = [1, 1]} : vector<2x384xf32> to vector<2x128xf32>
    %446 = vector.extract_strided_slice %425 {offsets = [0, 256], sizes = [2, 128], strides = [1, 1]} : vector<2x384xf32> to vector<2x128xf32>
    %447 = vector.broadcast %2 : vector<1x128xf32> to vector<2x128xf32>
    %448 = arith.addf %446, %447 : vector<2x128xf32>
    %449 = arith.mulf %436, %448 : vector<2x128xf32>
    %450 = arith.addf %445, %449 : vector<2x128xf32>
    %451 = math.tanh %450 : vector<2x128xf32>
    %cst_112 = arith.constant 1.000000e+00 : f32
    %452 = vector.broadcast %cst_112 : f32 to vector<2x128xf32>
    %453 = arith.subf %452, %444 : vector<2x128xf32>
    %454 = arith.mulf %453, %451 : vector<2x128xf32>
    %455 = arith.mulf %444, %383 : vector<2x128xf32>
    %456 = arith.addf %454, %455 : vector<2x128xf32>
    %cst_113 = arith.constant 0.000000e+00 : f32
    %457 = vector.shape_cast %386 : vector<2x1xi1> to vector<2x1xi1>
    %458 = vector.broadcast %457 : vector<2x1xi1> to vector<2x128xi1>
    %459 = vector.broadcast %cst_113 : f32 to vector<2x128xf32>
    %460 = arith.select %458, %422, %459 : vector<2x128xi1>, vector<2x128xf32>
    %461 = arith.index_cast %c4_i32 : i32 to index
    %c0_114 = arith.constant 0 : index
    %c0_115 = arith.constant 0 : index
    %462 = vector.load %arg7[%461, %c0_114, %c0_115] : memref<8x2x128xf32, #tpu.memory_space<vmem>>, vector<1x2x128xf32>
    %463 = vector.shape_cast %462 : vector<1x2x128xf32> to vector<2x128xf32>
    %464 = vector.shape_cast %460 : vector<2x128xf32> to vector<1x2x128xf32>
    tpu.vector_store %arg7[%461, %c0_114, %c0_115], %464 {strides = array<i32>} : memref<8x2x128xf32, #tpu.memory_space<vmem>>, vector<1x2x128xf32>,
    %cst_116 = arith.constant 0.000000e+00 : f32
    %465 = vector.shape_cast %388 : vector<2x1xi1> to vector<2x1xi1>
    %466 = vector.broadcast %465 : vector<2x1xi1> to vector<2x128xi1>
    %467 = vector.broadcast %cst_116 : f32 to vector<2x128xf32>
    %468 = arith.select %466, %456, %467 : vector<2x128xi1>, vector<2x128xf32>
    %469 = arith.index_cast %384 : i32 to index
    %c0_117 = arith.constant 0 : index
    %c0_118 = arith.constant 0 : index
    %470 = vector.load %arg8[%469, %c0_117, %c0_118] : memref<8x2x128xf32, #tpu.memory_space<vmem>>, vector<1x2x128xf32>
    %471 = vector.shape_cast %470 : vector<1x2x128xf32> to vector<2x128xf32>
    %472 = vector.shape_cast %468 : vector<2x128xf32> to vector<1x2x128xf32>
    tpu.vector_store %arg8[%469, %c0_117, %c0_118], %472 {strides = array<i32>} : memref<8x2x128xf32, #tpu.memory_space<vmem>>, vector<1x2x128xf32>,
    %473 = vector.shape_cast %386 : vector<2x1xi1> to vector<2x1xi1>
    %474 = vector.broadcast %473 : vector<2x1xi1> to vector<2x128xi1>
    %475 = arith.select %474, %422, %380 : vector<2x128xi1>, vector<2x128xf32>
    %476 = vector.shape_cast %388 : vector<2x1xi1> to vector<2x1xi1>
    %477 = vector.broadcast %476 : vector<2x1xi1> to vector<2x128xi1>
    %478 = arith.select %477, %456, %383 : vector<2x128xi1>, vector<2x128xf32>
    %c5_i32 = arith.constant 5 : i32
    %c7_i32_119 = arith.constant 7 : i32
    %479 = arith.subi %c7_i32_119, %c5_i32 : i32
    %480 = vector.broadcast %c5_i32 : i32 to vector<2x1xi32>
    %481 = arith.cmpi slt, %480, %0 : vector<2x1xi32>
    %482 = vector.broadcast %479 : i32 to vector<2x1xi32>
    %483 = arith.cmpi slt, %482, %0 : vector<2x1xi32>
    %484 = arith.truncf %475 : vector<2x128xf32> to vector<2x128xbf16>
    %c0_120 = arith.constant 0 : index
    %c0_121 = arith.constant 0 : index
    %485 = vector.load %arg3[%c0_120, %c0_121] : memref<128x384xbf16, #tpu.memory_space<vmem>>, vector<128x384xbf16>
    %cst_122 = arith.constant dense<0.000000e+00> : vector<2x384xf32>
    %486 = tpu.matmul %484, %485, %cst_122 {dimension_numbers = #tpu.dot_dimension_numbers<[1], [0], [0], [1], [0, 0, 1, 1], [], []>} : vector<2x128xbf16>, vector<128x384xbf16>, vector<2x384xf32> -> vector<2x384xf32>
    %487 = arith.index_cast %c5_i32 : i32 to index
    %c0_123 = arith.constant 0 : index
    %c0_124 = arith.constant 0 : index
    %488 = vector.load %arg1[%487, %c0_123, %c0_124] : memref<8x2x384xf32, #tpu.memory_space<vmem>>, vector<1x2x384xf32>
    %489 = vector.shape_cast %488 : vector<1x2x384xf32> to vector<2x384xf32>
    %490 = vector.extract_strided_slice %489 {offsets = [0, 0], sizes = [2, 128], strides = [1, 1]} : vector<2x384xf32> to vector<2x128xf32>
    %491 = vector.extract_strided_slice %486 {offsets = [0, 0], sizes = [2, 128], strides = [1, 1]} : vector<2x384xf32> to vector<2x128xf32>
    %492 = arith.addf %490, %491 : vector<2x128xf32>
    %493 = arith.negf %492 : vector<2x128xf32>
    %494 = math.exp %493 : vector<2x128xf32>
    %cst_125 = arith.constant 1.000000e+00 : f32
    %495 = vector.broadcast %cst_125 : f32 to vector<2x128xf32>
    %496 = arith.addf %495, %494 : vector<2x128xf32>
    %497 = arith.divf %495, %496 : vector<2x128xf32>
    %498 = vector.extract_strided_slice %489 {offsets = [0, 128], sizes = [2, 128], strides = [1, 1]} : vector<2x384xf32> to vector<2x128xf32>
    %499 = vector.extract_strided_slice %486 {offsets = [0, 128], sizes = [2, 128], strides = [1, 1]} : vector<2x384xf32> to vector<2x128xf32>
    %500 = arith.addf %498, %499 : vector<2x128xf32>
    %501 = arith.negf %500 : vector<2x128xf32>
    %502 = math.exp %501 : vector<2x128xf32>
    %cst_126 = arith.constant 1.000000e+00 : f32
    %503 = vector.broadcast %cst_126 : f32 to vector<2x128xf32>
    %504 = arith.addf %503, %502 : vector<2x128xf32>
    %505 = arith.divf %503, %504 : vector<2x128xf32>
    %506 = vector.extract_strided_slice %489 {offsets = [0, 256], sizes = [2, 128], strides = [1, 1]} : vector<2x384xf32> to vector<2x128xf32>
    %507 = vector.extract_strided_slice %486 {offsets = [0, 256], sizes = [2, 128], strides = [1, 1]} : vector<2x384xf32> to vector<2x128xf32>
    %508 = vector.broadcast %1 : vector<1x128xf32> to vector<2x128xf32>
    %509 = arith.addf %507, %508 : vector<2x128xf32>
    %510 = arith.mulf %497, %509 : vector<2x128xf32>
    %511 = arith.addf %506, %510 : vector<2x128xf32>
    %512 = math.tanh %511 : vector<2x128xf32>
    %cst_127 = arith.constant 1.000000e+00 : f32
    %513 = vector.broadcast %cst_127 : f32 to vector<2x128xf32>
    %514 = arith.subf %513, %505 : vector<2x128xf32>
    %515 = arith.mulf %514, %512 : vector<2x128xf32>
    %516 = arith.mulf %505, %475 : vector<2x128xf32>
    %517 = arith.addf %515, %516 : vector<2x128xf32>
    %518 = arith.truncf %478 : vector<2x128xf32> to vector<2x128xbf16>
    %c0_128 = arith.constant 0 : index
    %c0_129 = arith.constant 0 : index
    %519 = vector.load %arg4[%c0_128, %c0_129] : memref<128x384xbf16, #tpu.memory_space<vmem>>, vector<128x384xbf16>
    %cst_130 = arith.constant dense<0.000000e+00> : vector<2x384xf32>
    %520 = tpu.matmul %518, %519, %cst_130 {dimension_numbers = #tpu.dot_dimension_numbers<[1], [0], [0], [1], [0, 0, 1, 1], [], []>} : vector<2x128xbf16>, vector<128x384xbf16>, vector<2x384xf32> -> vector<2x384xf32>
    %521 = arith.index_cast %479 : i32 to index
    %c0_131 = arith.constant 0 : index
    %c0_132 = arith.constant 0 : index
    %522 = vector.load %arg2[%521, %c0_131, %c0_132] : memref<8x2x384xf32, #tpu.memory_space<vmem>>, vector<1x2x384xf32>
    %523 = vector.shape_cast %522 : vector<1x2x384xf32> to vector<2x384xf32>
    %524 = vector.extract_strided_slice %523 {offsets = [0, 0], sizes = [2, 128], strides = [1, 1]} : vector<2x384xf32> to vector<2x128xf32>
    %525 = vector.extract_strided_slice %520 {offsets = [0, 0], sizes = [2, 128], strides = [1, 1]} : vector<2x384xf32> to vector<2x128xf32>
    %526 = arith.addf %524, %525 : vector<2x128xf32>
    %527 = arith.negf %526 : vector<2x128xf32>
    %528 = math.exp %527 : vector<2x128xf32>
    %cst_133 = arith.constant 1.000000e+00 : f32
    %529 = vector.broadcast %cst_133 : f32 to vector<2x128xf32>
    %530 = arith.addf %529, %528 : vector<2x128xf32>
    %531 = arith.divf %529, %530 : vector<2x128xf32>
    %532 = vector.extract_strided_slice %523 {offsets = [0, 128], sizes = [2, 128], strides = [1, 1]} : vector<2x384xf32> to vector<2x128xf32>
    %533 = vector.extract_strided_slice %520 {offsets = [0, 128], sizes = [2, 128], strides = [1, 1]} : vector<2x384xf32> to vector<2x128xf32>
    %534 = arith.addf %532, %533 : vector<2x128xf32>
    %535 = arith.negf %534 : vector<2x128xf32>
    %536 = math.exp %535 : vector<2x128xf32>
    %cst_134 = arith.constant 1.000000e+00 : f32
    %537 = vector.broadcast %cst_134 : f32 to vector<2x128xf32>
    %538 = arith.addf %537, %536 : vector<2x128xf32>
    %539 = arith.divf %537, %538 : vector<2x128xf32>
    %540 = vector.extract_strided_slice %523 {offsets = [0, 256], sizes = [2, 128], strides = [1, 1]} : vector<2x384xf32> to vector<2x128xf32>
    %541 = vector.extract_strided_slice %520 {offsets = [0, 256], sizes = [2, 128], strides = [1, 1]} : vector<2x384xf32> to vector<2x128xf32>
    %542 = vector.broadcast %2 : vector<1x128xf32> to vector<2x128xf32>
    %543 = arith.addf %541, %542 : vector<2x128xf32>
    %544 = arith.mulf %531, %543 : vector<2x128xf32>
    %545 = arith.addf %540, %544 : vector<2x128xf32>
    %546 = math.tanh %545 : vector<2x128xf32>
    %cst_135 = arith.constant 1.000000e+00 : f32
    %547 = vector.broadcast %cst_135 : f32 to vector<2x128xf32>
    %548 = arith.subf %547, %539 : vector<2x128xf32>
    %549 = arith.mulf %548, %546 : vector<2x128xf32>
    %550 = arith.mulf %539, %478 : vector<2x128xf32>
    %551 = arith.addf %549, %550 : vector<2x128xf32>
    %cst_136 = arith.constant 0.000000e+00 : f32
    %552 = vector.shape_cast %481 : vector<2x1xi1> to vector<2x1xi1>
    %553 = vector.broadcast %552 : vector<2x1xi1> to vector<2x128xi1>
    %554 = vector.broadcast %cst_136 : f32 to vector<2x128xf32>
    %555 = arith.select %553, %517, %554 : vector<2x128xi1>, vector<2x128xf32>
    %556 = arith.index_cast %c5_i32 : i32 to index
    %c0_137 = arith.constant 0 : index
    %c0_138 = arith.constant 0 : index
    %557 = vector.load %arg7[%556, %c0_137, %c0_138] : memref<8x2x128xf32, #tpu.memory_space<vmem>>, vector<1x2x128xf32>
    %558 = vector.shape_cast %557 : vector<1x2x128xf32> to vector<2x128xf32>
    %559 = vector.shape_cast %555 : vector<2x128xf32> to vector<1x2x128xf32>
    tpu.vector_store %arg7[%556, %c0_137, %c0_138], %559 {strides = array<i32>} : memref<8x2x128xf32, #tpu.memory_space<vmem>>, vector<1x2x128xf32>,
    %cst_139 = arith.constant 0.000000e+00 : f32
    %560 = vector.shape_cast %483 : vector<2x1xi1> to vector<2x1xi1>
    %561 = vector.broadcast %560 : vector<2x1xi1> to vector<2x128xi1>
    %562 = vector.broadcast %cst_139 : f32 to vector<2x128xf32>
    %563 = arith.select %561, %551, %562 : vector<2x128xi1>, vector<2x128xf32>
    %564 = arith.index_cast %479 : i32 to index
    %c0_140 = arith.constant 0 : index
    %c0_141 = arith.constant 0 : index
    %565 = vector.load %arg8[%564, %c0_140, %c0_141] : memref<8x2x128xf32, #tpu.memory_space<vmem>>, vector<1x2x128xf32>
    %566 = vector.shape_cast %565 : vector<1x2x128xf32> to vector<2x128xf32>
    %567 = vector.shape_cast %563 : vector<2x128xf32> to vector<1x2x128xf32>
    tpu.vector_store %arg8[%564, %c0_140, %c0_141], %567 {strides = array<i32>} : memref<8x2x128xf32, #tpu.memory_space<vmem>>, vector<1x2x128xf32>,
    %568 = vector.shape_cast %481 : vector<2x1xi1> to vector<2x1xi1>
    %569 = vector.broadcast %568 : vector<2x1xi1> to vector<2x128xi1>
    %570 = arith.select %569, %517, %475 : vector<2x128xi1>, vector<2x128xf32>
    %571 = vector.shape_cast %483 : vector<2x1xi1> to vector<2x1xi1>
    %572 = vector.broadcast %571 : vector<2x1xi1> to vector<2x128xi1>
    %573 = arith.select %572, %551, %478 : vector<2x128xi1>, vector<2x128xf32>
    %c6_i32 = arith.constant 6 : i32
    %c7_i32_142 = arith.constant 7 : i32
    %574 = arith.subi %c7_i32_142, %c6_i32 : i32
    %575 = vector.broadcast %c6_i32 : i32 to vector<2x1xi32>
    %576 = arith.cmpi slt, %575, %0 : vector<2x1xi32>
    %577 = vector.broadcast %574 : i32 to vector<2x1xi32>
    %578 = arith.cmpi slt, %577, %0 : vector<2x1xi32>
    %579 = arith.truncf %570 : vector<2x128xf32> to vector<2x128xbf16>
    %c0_143 = arith.constant 0 : index
    %c0_144 = arith.constant 0 : index
    %580 = vector.load %arg3[%c0_143, %c0_144] : memref<128x384xbf16, #tpu.memory_space<vmem>>, vector<128x384xbf16>
    %cst_145 = arith.constant dense<0.000000e+00> : vector<2x384xf32>
    %581 = tpu.matmul %579, %580, %cst_145 {dimension_numbers = #tpu.dot_dimension_numbers<[1], [0], [0], [1], [0, 0, 1, 1], [], []>} : vector<2x128xbf16>, vector<128x384xbf16>, vector<2x384xf32> -> vector<2x384xf32>
    %582 = arith.index_cast %c6_i32 : i32 to index
    %c0_146 = arith.constant 0 : index
    %c0_147 = arith.constant 0 : index
    %583 = vector.load %arg1[%582, %c0_146, %c0_147] : memref<8x2x384xf32, #tpu.memory_space<vmem>>, vector<1x2x384xf32>
    %584 = vector.shape_cast %583 : vector<1x2x384xf32> to vector<2x384xf32>
    %585 = vector.extract_strided_slice %584 {offsets = [0, 0], sizes = [2, 128], strides = [1, 1]} : vector<2x384xf32> to vector<2x128xf32>
    %586 = vector.extract_strided_slice %581 {offsets = [0, 0], sizes = [2, 128], strides = [1, 1]} : vector<2x384xf32> to vector<2x128xf32>
    %587 = arith.addf %585, %586 : vector<2x128xf32>
    %588 = arith.negf %587 : vector<2x128xf32>
    %589 = math.exp %588 : vector<2x128xf32>
    %cst_148 = arith.constant 1.000000e+00 : f32
    %590 = vector.broadcast %cst_148 : f32 to vector<2x128xf32>
    %591 = arith.addf %590, %589 : vector<2x128xf32>
    %592 = arith.divf %590, %591 : vector<2x128xf32>
    %593 = vector.extract_strided_slice %584 {offsets = [0, 128], sizes = [2, 128], strides = [1, 1]} : vector<2x384xf32> to vector<2x128xf32>
    %594 = vector.extract_strided_slice %581 {offsets = [0, 128], sizes = [2, 128], strides = [1, 1]} : vector<2x384xf32> to vector<2x128xf32>
    %595 = arith.addf %593, %594 : vector<2x128xf32>
    %596 = arith.negf %595 : vector<2x128xf32>
    %597 = math.exp %596 : vector<2x128xf32>
    %cst_149 = arith.constant 1.000000e+00 : f32
    %598 = vector.broadcast %cst_149 : f32 to vector<2x128xf32>
    %599 = arith.addf %598, %597 : vector<2x128xf32>
    %600 = arith.divf %598, %599 : vector<2x128xf32>
    %601 = vector.extract_strided_slice %584 {offsets = [0, 256], sizes = [2, 128], strides = [1, 1]} : vector<2x384xf32> to vector<2x128xf32>
    %602 = vector.extract_strided_slice %581 {offsets = [0, 256], sizes = [2, 128], strides = [1, 1]} : vector<2x384xf32> to vector<2x128xf32>
    %603 = vector.broadcast %1 : vector<1x128xf32> to vector<2x128xf32>
    %604 = arith.addf %602, %603 : vector<2x128xf32>
    %605 = arith.mulf %592, %604 : vector<2x128xf32>
    %606 = arith.addf %601, %605 : vector<2x128xf32>
    %607 = math.tanh %606 : vector<2x128xf32>
    %cst_150 = arith.constant 1.000000e+00 : f32
    %608 = vector.broadcast %cst_150 : f32 to vector<2x128xf32>
    %609 = arith.subf %608, %600 : vector<2x128xf32>
    %610 = arith.mulf %609, %607 : vector<2x128xf32>
    %611 = arith.mulf %600, %570 : vector<2x128xf32>
    %612 = arith.addf %610, %611 : vector<2x128xf32>
    %613 = arith.truncf %573 : vector<2x128xf32> to vector<2x128xbf16>
    %c0_151 = arith.constant 0 : index
    %c0_152 = arith.constant 0 : index
    %614 = vector.load %arg4[%c0_151, %c0_152] : memref<128x384xbf16, #tpu.memory_space<vmem>>, vector<128x384xbf16>
    %cst_153 = arith.constant dense<0.000000e+00> : vector<2x384xf32>
    %615 = tpu.matmul %613, %614, %cst_153 {dimension_numbers = #tpu.dot_dimension_numbers<[1], [0], [0], [1], [0, 0, 1, 1], [], []>} : vector<2x128xbf16>, vector<128x384xbf16>, vector<2x384xf32> -> vector<2x384xf32>
    %616 = arith.index_cast %574 : i32 to index
    %c0_154 = arith.constant 0 : index
    %c0_155 = arith.constant 0 : index
    %617 = vector.load %arg2[%616, %c0_154, %c0_155] : memref<8x2x384xf32, #tpu.memory_space<vmem>>, vector<1x2x384xf32>
    %618 = vector.shape_cast %617 : vector<1x2x384xf32> to vector<2x384xf32>
    %619 = vector.extract_strided_slice %618 {offsets = [0, 0], sizes = [2, 128], strides = [1, 1]} : vector<2x384xf32> to vector<2x128xf32>
    %620 = vector.extract_strided_slice %615 {offsets = [0, 0], sizes = [2, 128], strides = [1, 1]} : vector<2x384xf32> to vector<2x128xf32>
    %621 = arith.addf %619, %620 : vector<2x128xf32>
    %622 = arith.negf %621 : vector<2x128xf32>
    %623 = math.exp %622 : vector<2x128xf32>
    %cst_156 = arith.constant 1.000000e+00 : f32
    %624 = vector.broadcast %cst_156 : f32 to vector<2x128xf32>
    %625 = arith.addf %624, %623 : vector<2x128xf32>
    %626 = arith.divf %624, %625 : vector<2x128xf32>
    %627 = vector.extract_strided_slice %618 {offsets = [0, 128], sizes = [2, 128], strides = [1, 1]} : vector<2x384xf32> to vector<2x128xf32>
    %628 = vector.extract_strided_slice %615 {offsets = [0, 128], sizes = [2, 128], strides = [1, 1]} : vector<2x384xf32> to vector<2x128xf32>
    %629 = arith.addf %627, %628 : vector<2x128xf32>
    %630 = arith.negf %629 : vector<2x128xf32>
    %631 = math.exp %630 : vector<2x128xf32>
    %cst_157 = arith.constant 1.000000e+00 : f32
    %632 = vector.broadcast %cst_157 : f32 to vector<2x128xf32>
    %633 = arith.addf %632, %631 : vector<2x128xf32>
    %634 = arith.divf %632, %633 : vector<2x128xf32>
    %635 = vector.extract_strided_slice %618 {offsets = [0, 256], sizes = [2, 128], strides = [1, 1]} : vector<2x384xf32> to vector<2x128xf32>
    %636 = vector.extract_strided_slice %615 {offsets = [0, 256], sizes = [2, 128], strides = [1, 1]} : vector<2x384xf32> to vector<2x128xf32>
    %637 = vector.broadcast %2 : vector<1x128xf32> to vector<2x128xf32>
    %638 = arith.addf %636, %637 : vector<2x128xf32>
    %639 = arith.mulf %626, %638 : vector<2x128xf32>
    %640 = arith.addf %635, %639 : vector<2x128xf32>
    %641 = math.tanh %640 : vector<2x128xf32>
    %cst_158 = arith.constant 1.000000e+00 : f32
    %642 = vector.broadcast %cst_158 : f32 to vector<2x128xf32>
    %643 = arith.subf %642, %634 : vector<2x128xf32>
    %644 = arith.mulf %643, %641 : vector<2x128xf32>
    %645 = arith.mulf %634, %573 : vector<2x128xf32>
    %646 = arith.addf %644, %645 : vector<2x128xf32>
    %cst_159 = arith.constant 0.000000e+00 : f32
    %647 = vector.shape_cast %576 : vector<2x1xi1> to vector<2x1xi1>
    %648 = vector.broadcast %647 : vector<2x1xi1> to vector<2x128xi1>
    %649 = vector.broadcast %cst_159 : f32 to vector<2x128xf32>
    %650 = arith.select %648, %612, %649 : vector<2x128xi1>, vector<2x128xf32>
    %651 = arith.index_cast %c6_i32 : i32 to index
    %c0_160 = arith.constant 0 : index
    %c0_161 = arith.constant 0 : index
    %652 = vector.load %arg7[%651, %c0_160, %c0_161] : memref<8x2x128xf32, #tpu.memory_space<vmem>>, vector<1x2x128xf32>
    %653 = vector.shape_cast %652 : vector<1x2x128xf32> to vector<2x128xf32>
    %654 = vector.shape_cast %650 : vector<2x128xf32> to vector<1x2x128xf32>
    tpu.vector_store %arg7[%651, %c0_160, %c0_161], %654 {strides = array<i32>} : memref<8x2x128xf32, #tpu.memory_space<vmem>>, vector<1x2x128xf32>,
    %cst_162 = arith.constant 0.000000e+00 : f32
    %655 = vector.shape_cast %578 : vector<2x1xi1> to vector<2x1xi1>
    %656 = vector.broadcast %655 : vector<2x1xi1> to vector<2x128xi1>
    %657 = vector.broadcast %cst_162 : f32 to vector<2x128xf32>
    %658 = arith.select %656, %646, %657 : vector<2x128xi1>, vector<2x128xf32>
    %659 = arith.index_cast %574 : i32 to index
    %c0_163 = arith.constant 0 : index
    %c0_164 = arith.constant 0 : index
    %660 = vector.load %arg8[%659, %c0_163, %c0_164] : memref<8x2x128xf32, #tpu.memory_space<vmem>>, vector<1x2x128xf32>
    %661 = vector.shape_cast %660 : vector<1x2x128xf32> to vector<2x128xf32>
    %662 = vector.shape_cast %658 : vector<2x128xf32> to vector<1x2x128xf32>
    tpu.vector_store %arg8[%659, %c0_163, %c0_164], %662 {strides = array<i32>} : memref<8x2x128xf32, #tpu.memory_space<vmem>>, vector<1x2x128xf32>,
    %663 = vector.shape_cast %576 : vector<2x1xi1> to vector<2x1xi1>
    %664 = vector.broadcast %663 : vector<2x1xi1> to vector<2x128xi1>
    %665 = arith.select %664, %612, %570 : vector<2x128xi1>, vector<2x128xf32>
    %666 = vector.shape_cast %578 : vector<2x1xi1> to vector<2x1xi1>
    %667 = vector.broadcast %666 : vector<2x1xi1> to vector<2x128xi1>
    %668 = arith.select %667, %646, %573 : vector<2x128xi1>, vector<2x128xf32>
    %c7_i32_165 = arith.constant 7 : i32
    %c7_i32_166 = arith.constant 7 : i32
    %669 = arith.subi %c7_i32_166, %c7_i32_165 : i32
    %670 = vector.broadcast %c7_i32_165 : i32 to vector<2x1xi32>
    %671 = arith.cmpi slt, %670, %0 : vector<2x1xi32>
    %672 = vector.broadcast %669 : i32 to vector<2x1xi32>
    %673 = arith.cmpi slt, %672, %0 : vector<2x1xi32>
    %674 = arith.truncf %665 : vector<2x128xf32> to vector<2x128xbf16>
    %c0_167 = arith.constant 0 : index
    %c0_168 = arith.constant 0 : index
    %675 = vector.load %arg3[%c0_167, %c0_168] : memref<128x384xbf16, #tpu.memory_space<vmem>>, vector<128x384xbf16>
    %cst_169 = arith.constant dense<0.000000e+00> : vector<2x384xf32>
    %676 = tpu.matmul %674, %675, %cst_169 {dimension_numbers = #tpu.dot_dimension_numbers<[1], [0], [0], [1], [0, 0, 1, 1], [], []>} : vector<2x128xbf16>, vector<128x384xbf16>, vector<2x384xf32> -> vector<2x384xf32>
    %677 = arith.index_cast %c7_i32_165 : i32 to index
    %c0_170 = arith.constant 0 : index
    %c0_171 = arith.constant 0 : index
    %678 = vector.load %arg1[%677, %c0_170, %c0_171] : memref<8x2x384xf32, #tpu.memory_space<vmem>>, vector<1x2x384xf32>
    %679 = vector.shape_cast %678 : vector<1x2x384xf32> to vector<2x384xf32>
    %680 = vector.extract_strided_slice %679 {offsets = [0, 0], sizes = [2, 128], strides = [1, 1]} : vector<2x384xf32> to vector<2x128xf32>
    %681 = vector.extract_strided_slice %676 {offsets = [0, 0], sizes = [2, 128], strides = [1, 1]} : vector<2x384xf32> to vector<2x128xf32>
    %682 = arith.addf %680, %681 : vector<2x128xf32>
    %683 = arith.negf %682 : vector<2x128xf32>
    %684 = math.exp %683 : vector<2x128xf32>
    %cst_172 = arith.constant 1.000000e+00 : f32
    %685 = vector.broadcast %cst_172 : f32 to vector<2x128xf32>
    %686 = arith.addf %685, %684 : vector<2x128xf32>
    %687 = arith.divf %685, %686 : vector<2x128xf32>
    %688 = vector.extract_strided_slice %679 {offsets = [0, 128], sizes = [2, 128], strides = [1, 1]} : vector<2x384xf32> to vector<2x128xf32>
    %689 = vector.extract_strided_slice %676 {offsets = [0, 128], sizes = [2, 128], strides = [1, 1]} : vector<2x384xf32> to vector<2x128xf32>
    %690 = arith.addf %688, %689 : vector<2x128xf32>
    %691 = arith.negf %690 : vector<2x128xf32>
    %692 = math.exp %691 : vector<2x128xf32>
    %cst_173 = arith.constant 1.000000e+00 : f32
    %693 = vector.broadcast %cst_173 : f32 to vector<2x128xf32>
    %694 = arith.addf %693, %692 : vector<2x128xf32>
    %695 = arith.divf %693, %694 : vector<2x128xf32>
    %696 = vector.extract_strided_slice %679 {offsets = [0, 256], sizes = [2, 128], strides = [1, 1]} : vector<2x384xf32> to vector<2x128xf32>
    %697 = vector.extract_strided_slice %676 {offsets = [0, 256], sizes = [2, 128], strides = [1, 1]} : vector<2x384xf32> to vector<2x128xf32>
    %698 = vector.broadcast %1 : vector<1x128xf32> to vector<2x128xf32>
    %699 = arith.addf %697, %698 : vector<2x128xf32>
    %700 = arith.mulf %687, %699 : vector<2x128xf32>
    %701 = arith.addf %696, %700 : vector<2x128xf32>
    %702 = math.tanh %701 : vector<2x128xf32>
    %cst_174 = arith.constant 1.000000e+00 : f32
    %703 = vector.broadcast %cst_174 : f32 to vector<2x128xf32>
    %704 = arith.subf %703, %695 : vector<2x128xf32>
    %705 = arith.mulf %704, %702 : vector<2x128xf32>
    %706 = arith.mulf %695, %665 : vector<2x128xf32>
    %707 = arith.addf %705, %706 : vector<2x128xf32>
    %708 = arith.truncf %668 : vector<2x128xf32> to vector<2x128xbf16>
    %c0_175 = arith.constant 0 : index
    %c0_176 = arith.constant 0 : index
    %709 = vector.load %arg4[%c0_175, %c0_176] : memref<128x384xbf16, #tpu.memory_space<vmem>>, vector<128x384xbf16>
    %cst_177 = arith.constant dense<0.000000e+00> : vector<2x384xf32>
    %710 = tpu.matmul %708, %709, %cst_177 {dimension_numbers = #tpu.dot_dimension_numbers<[1], [0], [0], [1], [0, 0, 1, 1], [], []>} : vector<2x128xbf16>, vector<128x384xbf16>, vector<2x384xf32> -> vector<2x384xf32>
    %711 = arith.index_cast %669 : i32 to index
    %c0_178 = arith.constant 0 : index
    %c0_179 = arith.constant 0 : index
    %712 = vector.load %arg2[%711, %c0_178, %c0_179] : memref<8x2x384xf32, #tpu.memory_space<vmem>>, vector<1x2x384xf32>
    %713 = vector.shape_cast %712 : vector<1x2x384xf32> to vector<2x384xf32>
    %714 = vector.extract_strided_slice %713 {offsets = [0, 0], sizes = [2, 128], strides = [1, 1]} : vector<2x384xf32> to vector<2x128xf32>
    %715 = vector.extract_strided_slice %710 {offsets = [0, 0], sizes = [2, 128], strides = [1, 1]} : vector<2x384xf32> to vector<2x128xf32>
    %716 = arith.addf %714, %715 : vector<2x128xf32>
    %717 = arith.negf %716 : vector<2x128xf32>
    %718 = math.exp %717 : vector<2x128xf32>
    %cst_180 = arith.constant 1.000000e+00 : f32
    %719 = vector.broadcast %cst_180 : f32 to vector<2x128xf32>
    %720 = arith.addf %719, %718 : vector<2x128xf32>
    %721 = arith.divf %719, %720 : vector<2x128xf32>
    %722 = vector.extract_strided_slice %713 {offsets = [0, 128], sizes = [2, 128], strides = [1, 1]} : vector<2x384xf32> to vector<2x128xf32>
    %723 = vector.extract_strided_slice %710 {offsets = [0, 128], sizes = [2, 128], strides = [1, 1]} : vector<2x384xf32> to vector<2x128xf32>
    %724 = arith.addf %722, %723 : vector<2x128xf32>
    %725 = arith.negf %724 : vector<2x128xf32>
    %726 = math.exp %725 : vector<2x128xf32>
    %cst_181 = arith.constant 1.000000e+00 : f32
    %727 = vector.broadcast %cst_181 : f32 to vector<2x128xf32>
    %728 = arith.addf %727, %726 : vector<2x128xf32>
    %729 = arith.divf %727, %728 : vector<2x128xf32>
    %730 = vector.extract_strided_slice %713 {offsets = [0, 256], sizes = [2, 128], strides = [1, 1]} : vector<2x384xf32> to vector<2x128xf32>
    %731 = vector.extract_strided_slice %710 {offsets = [0, 256], sizes = [2, 128], strides = [1, 1]} : vector<2x384xf32> to vector<2x128xf32>
    %732 = vector.broadcast %2 : vector<1x128xf32> to vector<2x128xf32>
    %733 = arith.addf %731, %732 : vector<2x128xf32>
    %734 = arith.mulf %721, %733 : vector<2x128xf32>
    %735 = arith.addf %730, %734 : vector<2x128xf32>
    %736 = math.tanh %735 : vector<2x128xf32>
    %cst_182 = arith.constant 1.000000e+00 : f32
    %737 = vector.broadcast %cst_182 : f32 to vector<2x128xf32>
    %738 = arith.subf %737, %729 : vector<2x128xf32>
    %739 = arith.mulf %738, %736 : vector<2x128xf32>
    %740 = arith.mulf %729, %668 : vector<2x128xf32>
    %741 = arith.addf %739, %740 : vector<2x128xf32>
    %cst_183 = arith.constant 0.000000e+00 : f32
    %742 = vector.shape_cast %671 : vector<2x1xi1> to vector<2x1xi1>
    %743 = vector.broadcast %742 : vector<2x1xi1> to vector<2x128xi1>
    %744 = vector.broadcast %cst_183 : f32 to vector<2x128xf32>
    %745 = arith.select %743, %707, %744 : vector<2x128xi1>, vector<2x128xf32>
    %746 = arith.index_cast %c7_i32_165 : i32 to index
    %c0_184 = arith.constant 0 : index
    %c0_185 = arith.constant 0 : index
    %747 = vector.load %arg7[%746, %c0_184, %c0_185] : memref<8x2x128xf32, #tpu.memory_space<vmem>>, vector<1x2x128xf32>
    %748 = vector.shape_cast %747 : vector<1x2x128xf32> to vector<2x128xf32>
    %749 = vector.shape_cast %745 : vector<2x128xf32> to vector<1x2x128xf32>
    tpu.vector_store %arg7[%746, %c0_184, %c0_185], %749 {strides = array<i32>} : memref<8x2x128xf32, #tpu.memory_space<vmem>>, vector<1x2x128xf32>,
    %cst_186 = arith.constant 0.000000e+00 : f32
    %750 = vector.shape_cast %673 : vector<2x1xi1> to vector<2x1xi1>
    %751 = vector.broadcast %750 : vector<2x1xi1> to vector<2x128xi1>
    %752 = vector.broadcast %cst_186 : f32 to vector<2x128xf32>
    %753 = arith.select %751, %741, %752 : vector<2x128xi1>, vector<2x128xf32>
    %754 = arith.index_cast %669 : i32 to index
    %c0_187 = arith.constant 0 : index
    %c0_188 = arith.constant 0 : index
    %755 = vector.load %arg8[%754, %c0_187, %c0_188] : memref<8x2x128xf32, #tpu.memory_space<vmem>>, vector<1x2x128xf32>
    %756 = vector.shape_cast %755 : vector<1x2x128xf32> to vector<2x128xf32>
    %757 = vector.shape_cast %753 : vector<2x128xf32> to vector<1x2x128xf32>
    tpu.vector_store %arg8[%754, %c0_187, %c0_188], %757 {strides = array<i32>} : memref<8x2x128xf32, #tpu.memory_space<vmem>>, vector<1x2x128xf32>,
    %758 = vector.shape_cast %671 : vector<2x1xi1> to vector<2x1xi1>
    %759 = vector.broadcast %758 : vector<2x1xi1> to vector<2x128xi1>
    %760 = arith.select %759, %707, %665 : vector<2x128xi1>, vector<2x128xf32>
    %761 = vector.shape_cast %673 : vector<2x1xi1> to vector<2x1xi1>
    %762 = vector.broadcast %761 : vector<2x1xi1> to vector<2x128xi1>
    %763 = arith.select %762, %741, %668 : vector<2x128xi1>, vector<2x128xf32>
    %c8_i32 = arith.constant 8 : i32
    %c0_189 = arith.constant 0 : index
    %c0_190 = arith.constant 0 : index
    %764 = vector.load %arg9[%c0_189, %c0_190] : memref<2x128xf32, #tpu.memory_space<vmem>>, vector<2x128xf32>
    tpu.vector_store %arg9[%c0_189, %c0_190], %760 {strides = array<i32>} : memref<2x128xf32, #tpu.memory_space<vmem>>, vector<2x128xf32>,
    %c0_191 = arith.constant 0 : index
    %c0_192 = arith.constant 0 : index
    %765 = vector.load %arg10[%c0_191, %c0_192] : memref<2x128xf32, #tpu.memory_space<vmem>>, vector<2x128xf32>
    tpu.vector_store %arg10[%c0_191, %c0_192], %763 {strides = array<i32>} : memref<2x128xf32, #tpu.memory_space<vmem>>, vector<2x128xf32>,
    return
  }
}

</mosaic_0001>

<llo_original>
// kernel: block_1_forward.2
$region0: #{block_1_forward.2}
  #allocation0 [shape = 'u32[]', space=smem, size = 0x4, offset = 0x4, fixed_abs, tag = 'smem constant byte address 0x4 - core index']
  #allocation1 [shape = 'u32[144,128]{1,0:T(1,128)}', space=vmem, size = 0x12000, scoped, tag = 'internal scratch']
  %s0 = inlined_call_operand.vmem [shape: s32[2,1], index: 0, kind: input, shape index: {}]
  %s1 = inlined_call_operand.vmem [shape: f32[8,2,384], index: 1, kind: input, shape index: {}]
  %s2 = inlined_call_operand.vmem [shape: f32[8,2,384], index: 2, kind: input, shape index: {}]
  %s3 = inlined_call_operand.vmem [shape: bf16[128,384], index: 3, kind: input, shape index: {}]
  %s4 = inlined_call_operand.vmem [shape: bf16[128,384], index: 4, kind: input, shape index: {}]
  %s5 = inlined_call_operand.vmem [shape: f32[1,128], index: 5, kind: input, shape index: {}]
  %s6 = inlined_call_operand.vmem [shape: f32[1,128], index: 6, kind: input, shape index: {}]
  %s7 = inlined_call_operand.vmem [shape: f32[8,2,128], index: 7, kind: output, shape index: {0}]
  %s8 = inlined_call_operand.vmem [shape: f32[8,2,128], index: 8, kind: output, shape index: {1}]
  %s9 = inlined_call_operand.vmem [shape: f32[2,128], index: 9, kind: output, shape index: {2}]
  %s10 = inlined_call_operand.vmem [shape: f32[2,128], index: 10, kind: output, shape index: {3}]
  %11 = xla_tuple %s7, %s8, %s9, %s10
  %s12 = sld [smem:[#allocation0]]
  $region62: #{block_1_forward.2} parent=0
    _
  %s14 = ssub.s32 1, %s12
  %s15 = scalar_select 0, %s14, %s12
  // Predicated region
  $region2: #{block_1_forward.2} parent=0 // pred_check
    _
  $region3: #{block_1_forward.2} parent=0 // pred_check_branch
    %17 = sbr.rel (0) target = $region5
  $region4: #{block_1_forward.2} parent=0 // pred_region
    _
  $region5: #{block_1_forward.2} parent=0 // pred_fallthru
    _
  // Predicated region
  $region6: #{block_1_forward.2} parent=0 // pred_check
    _
  $region7: #{block_1_forward.2} parent=0 // pred_check_branch
    %19 = sbr.rel (0) target = $region9
  $region8: #{block_1_forward.2} parent=0 // pred_region
    _
  $region9: #{block_1_forward.2} parent=0 // pred_fallthru
    _
  // Predicated region
  $region10: #{block_1_forward.2} parent=0 // pred_check
    _
  $region11: #{block_1_forward.2} parent=0 // pred_check_branch
    %21 = sbr.rel (0) target = $region13
  $region12: #{block_1_forward.2} parent=0 // pred_region
    _
  $region13: #{block_1_forward.2} parent=0 // pred_fallthru
    _
  // Predicated region
  $region14: #{block_1_forward.2} parent=0 // pred_check
    _
  $region15: #{block_1_forward.2} parent=0 // pred_check_branch
    %23 = sbr.rel (0) target = $region17
  $region16: #{block_1_forward.2} parent=0 // pred_region
    _
  $region17: #{block_1_forward.2} parent=0 // pred_fallthru
    _
  // Predicated region
  $region18: #{block_1_forward.2} parent=0 // pred_check
    _
  $region19: #{block_1_forward.2} parent=0 // pred_check_branch
    %25 = sbr.rel (0) target = $region21
  $region20: #{block_1_forward.2} parent=0 // pred_region
    _
  $region21: #{block_1_forward.2} parent=0 // pred_fallthru
    _
  // Predicated region
  $region22: #{block_1_forward.2} parent=0 // pred_check
    _
  $region23: #{block_1_forward.2} parent=0 // pred_check_branch
    %27 = sbr.rel (0) target = $region25
  $region24: #{block_1_forward.2} parent=0 // pred_region
    _
  $region25: #{block_1_forward.2} parent=0 // pred_fallthru
    _
  // Predicated region
  $region26: #{block_1_forward.2} parent=0 // pred_check
    _
  $region27: #{block_1_forward.2} parent=0 // pred_check_branch
    %29 = sbr.rel (0) target = $region29
  $region28: #{block_1_forward.2} parent=0 // pred_region
    _
  $region29: #{block_1_forward.2} parent=0 // pred_fallthru
    _
  %v31 = vld [vmem:[%s0] sm:$0x3]
  %v32 = vld [vmem:[%s5] sm:$0x1]
  %v33 = vld [vmem:[%s6] sm:$0x1]
  %vm34 = vcmp.gt.s32.totalorder %v31, 0
  %vm35 = vcmp.gt.s32.totalorder %v31, 7
  %v36 = vld [vmem:[%s3] sm:$0xff]
  %v37 = vld [vmem:[%s3 + $0x8] sm:$0xf]
  %v38 = vld [vmem:[%s3 + $0xc] sm:$0xff]
  %v39 = vld [vmem:[%s3 + $0x14] sm:$0xf]
  %v40 = vld [vmem:[%s3 + $0x18] sm:$0xff]
  %v41 = vld [vmem:[%s3 + $0x20] sm:$0xf]
  %v42 = vld [vmem:[%s3 + $0x24] sm:$0xff]
  %v43 = vld [vmem:[%s3 + $0x2c] sm:$0xf]
  %v44 = vld [vmem:[%s3 + $0x30] sm:$0xff]
  %v45 = vld [vmem:[%s3 + $0x38] sm:$0xf]
  %v46 = vld [vmem:[%s3 + $0x3c] sm:$0xff]
  %v47 = vld [vmem:[%s3 + $0x44] sm:$0xf]
  %v48 = vld [vmem:[%s3 + $0x48] sm:$0xff]
  %v49 = vld [vmem:[%s3 + $0x50] sm:$0xf]
  %v50 = vld [vmem:[%s3 + $0x54] sm:$0xff]
  %v51 = vld [vmem:[%s3 + $0x5c] sm:$0xf]
  %v52 = vld [vmem:[%s3 + $0x60] sm:$0xff]
  %v53 = vld [vmem:[%s3 + $0x68] sm:$0xf]
  %v54 = vld [vmem:[%s3 + $0x6c] sm:$0xff]
  %v55 = vld [vmem:[%s3 + $0x74] sm:$0xf]
  %v56 = vld [vmem:[%s3 + $0x78] sm:$0xff]
  %v57 = vld [vmem:[%s3 + $0x80] sm:$0xf]
  %v58 = vld [vmem:[%s3 + $0x84] sm:$0xff]
  %v59 = vld [vmem:[%s3 + $0x8c] sm:$0xf]
  %v60 = vld [vmem:[%s3 + $0x90] sm:$0xff]
  %v61 = vld [vmem:[%s3 + $0x98] sm:$0xf]
  %v62 = vld [vmem:[%s3 + $0x9c] sm:$0xff]
  %v63 = vld [vmem:[%s3 + $0xa4] sm:$0xf]
  %v64 = vld [vmem:[%s3 + $0xa8] sm:$0xff]
  %v65 = vld [vmem:[%s3 + $0xb0] sm:$0xf]
  %v66 = vld [vmem:[%s3 + $0xb4] sm:$0xff]
  %v67 = vld [vmem:[%s3 + $0xbc] sm:$0xf]
  %v100 = vunpack.c.l.b16 %v36
  %v101 = vunpack.c.h.b16 %v36
  %v102 = vunpack.c.l.b16 %v37
  %v103 = vunpack.c.l.b16 %v38
  %v104 = vunpack.c.h.b16 %v38
  %v105 = vunpack.c.l.b16 %v39
  %v106 = vunpack.c.l.b16 %v40
  %v107 = vunpack.c.h.b16 %v40
  %v108 = vunpack.c.l.b16 %v41
  %v109 = vunpack.c.l.b16 %v42
  %v110 = vunpack.c.h.b16 %v42
  %v111 = vunpack.c.l.b16 %v43
  %v112 = vunpack.c.l.b16 %v44
  %v113 = vunpack.c.h.b16 %v44
  %v114 = vunpack.c.l.b16 %v45
  %v115 = vunpack.c.l.b16 %v46
  %v116 = vunpack.c.h.b16 %v46
  %v117 = vunpack.c.l.b16 %v47
  %v118 = vunpack.c.l.b16 %v48
  %v119 = vunpack.c.h.b16 %v48
  %v120 = vunpack.c.l.b16 %v49
  %v121 = vunpack.c.l.b16 %v50
  %v122 = vunpack.c.h.b16 %v50
  %v123 = vunpack.c.l.b16 %v51
  %v124 = vunpack.c.l.b16 %v52
  %v125 = vunpack.c.h.b16 %v52
  %v126 = vunpack.c.l.b16 %v53
  %v127 = vunpack.c.l.b16 %v54
  %v128 = vunpack.c.h.b16 %v54
  %v129 = vunpack.c.l.b16 %v55
  %v130 = vunpack.c.l.b16 %v56
  %v131 = vunpack.c.h.b16 %v56
  %v132 = vunpack.c.l.b16 %v57
  %v133 = vunpack.c.l.b16 %v58
  %v134 = vunpack.c.h.b16 %v58
  %v135 = vunpack.c.l.b16 %v59
  %v136 = vunpack.c.l.b16 %v60
  %v137 = vunpack.c.h.b16 %v60
  %v138 = vunpack.c.l.b16 %v61
  %v139 = vunpack.c.l.b16 %v62
  %v140 = vunpack.c.h.b16 %v62
  %v141 = vunpack.c.l.b16 %v63
  %v142 = vunpack.c.l.b16 %v64
  %v143 = vunpack.c.h.b16 %v64
  %v144 = vunpack.c.l.b16 %v65
  %v145 = vunpack.c.l.b16 %v66
  %v146 = vunpack.c.h.b16 %v66
  %v147 = vunpack.c.l.b16 %v67
  %v148 = vpack.c.b16 %v103, %v100
  %v149 = vpack.c.b16 %v104, %v101
  %v150 = vpack.c.b16 %v105, %v102
  %v151 = vpack.c.b16 %v109, %v106
  %v152 = vpack.c.b16 %v110, %v107
  %v153 = vpack.c.b16 %v111, %v108
  %v154 = vpack.c.b16 %v115, %v112
  %v155 = vpack.c.b16 %v116, %v113
  %v156 = vpack.c.b16 %v117, %v114
  %v157 = vpack.c.b16 %v121, %v118
  %v158 = vpack.c.b16 %v122, %v119
  %v159 = vpack.c.b16 %v123, %v120
  %v160 = vpack.c.b16 %v127, %v124
  %v161 = vpack.c.b16 %v128, %v125
  %v162 = vpack.c.b16 %v129, %v126
  %v163 = vpack.c.b16 %v133, %v130
  %v164 = vpack.c.b16 %v134, %v131
  %v165 = vpack.c.b16 %v135, %v132
  %v166 = vpack.c.b16 %v139, %v136
  %v167 = vpack.c.b16 %v140, %v137
  %v168 = vpack.c.b16 %v141, %v138
  %v169 = vpack.c.b16 %v145, %v142
  %v170 = vpack.c.b16 %v146, %v143
  %v171 = vpack.c.b16 %v147, %v144
  %196 = vmatprep.subr.bf16.mxu0 %v149
  %197 = vmatpush1.bf16.msra.mxu0 %v148
  %198 = vmatprep.subr.bf16.mxu0 %v152
  %199 = vmatpush1.bf16.msra.mxu0 %v151
  %200 = vmatprep.subr.bf16.mxu0 %v155
  %201 = vmatpush1.bf16.msra.mxu0 %v154
  %202 = vmatprep.subr.bf16.mxu0 %v158
  %203 = vmatpush1.bf16.msra.mxu0 %v157
  %204 = vmatprep.subr.bf16.mxu0 %v161
  %205 = vmatpush1.bf16.msra.mxu0 %v160
  %206 = vmatprep.subr.bf16.mxu0 %v164
  %207 = vmatpush1.bf16.msra.mxu0 %v163
  %208 = vmatprep.subr.bf16.mxu0 %v167
  %209 = vmatpush1.bf16.msra.mxu0 %v166
  %210 = vmatprep.subr.bf16.mxu0 %v170
  %211 = vmatpush1.bf16.msra.mxu0 %v169
  %212 = vmatprep.subr.bf16.mxu0 0
  %213 = vmatpush1.bf16.msra.mxu0 0
  %214 = vmatprep.subr.bf16.mxu0 0
  %215 = vmatpush1.bf16.msra.mxu0 0
  %216 = vmatprep.subr.bf16.mxu0 0
  %217 = vmatpush1.bf16.msra.mxu0 0
  %218 = vmatprep.subr.bf16.mxu0 0
  %219 = vmatpush1.bf16.msra.mxu0 0
  %220 = vmatprep.subr.bf16.mxu0 0
  %221 = vmatpush1.bf16.msra.mxu0 0
  %222 = vmatprep.subr.bf16.mxu0 0
  %223 = vmatpush1.bf16.msra.mxu0 0
  %224 = vmatprep.subr.bf16.mxu0 0
  %225 = vmatpush1.bf16.msra.mxu0 0
  %226 = vmatprep.subr.bf16.mxu0 0
  %227 = vmatpush1.bf16.msra.mxu0 0
  %228 = vmatprep.mubr.bf16.mxu0 0
  %229 = vmatmul.mubr.bf16.gmra.mrb[0].mxu0 0
  %v230 = vpop.f32.mrb[0].mxu0
  %v231 = vadd.f32 0.0, %v230
  %v232 = vpop.f32.mrb[0].mxu0
  %v233 = vadd.f32 0.0, %v232
  %v234 = vpop.f32.mrb[0].mxu0
  %v235 = vpop.f32.mrb[0].mxu0
  %236 = vdwg.mxu0
  %237 = vmatprep.subr.bf16.mxu0 0
  %238 = vmatpush1.bf16.msra.mxu0 %v150
  %239 = vmatprep.subr.bf16.mxu0 0
  %240 = vmatpush1.bf16.msra.mxu0 %v153
  %241 = vmatprep.subr.bf16.mxu0 0
  %242 = vmatpush1.bf16.msra.mxu0 %v156
  %243 = vmatprep.subr.bf16.mxu0 0
  %244 = vmatpush1.bf16.msra.mxu0 %v159
  %245 = vmatprep.subr.bf16.mxu0 0
  %246 = vmatpush1.bf16.msra.mxu0 %v162
  %247 = vmatprep.subr.bf16.mxu0 0
  %248 = vmatpush1.bf16.msra.mxu0 %v165
  %249 = vmatprep.subr.bf16.mxu0 0
  %250 = vmatpush1.bf16.msra.mxu0 %v168
  %251 = vmatprep.subr.bf16.mxu0 0
  %252 = vmatpush1.bf16.msra.mxu0 %v171
  %253 = vmatprep.subr.bf16.mxu0 0
  %254 = vmatpush1.bf16.msra.mxu0 0
  %255 = vmatprep.subr.bf16.mxu0 0
  %256 = vmatpush1.bf16.msra.mxu0 0
  %257 = vmatprep.subr.bf16.mxu0 0
  %258 = vmatpush1.bf16.msra.mxu0 0
  %259 = vmatprep.subr.bf16.mxu0 0
  %260 = vmatpush1.bf16.msra.mxu0 0
  %261 = vmatprep.subr.bf16.mxu0 0
  %262 = vmatpush1.bf16.msra.mxu0 0
  %263 = vmatprep.subr.bf16.mxu0 0
  %264 = vmatpush1.bf16.msra.mxu0 0
  %265 = vmatprep.subr.bf16.mxu0 0
  %266 = vmatpush1.bf16.msra.mxu0 0
  %267 = vmatprep.subr.bf16.mxu0 0
  %268 = vmatpush1.bf16.msra.mxu0 0
  %269 = vmatprep.mubr.bf16.mxu0 0
  %270 = vmatmul.mubr.bf16.gmra.mrb[0].mxu0 0
  %v271 = vpop.f32.mrb[0].mxu0
  %v272 = vadd.f32 0.0, %v271
  %v273 = vpop.f32.mrb[0].mxu0
  %v274 = vpop.f32.mrb[0].mxu0
  %v275 = vpop.f32.mrb[0].mxu0
  %276 = vdwg.mxu0
  %v277 = vld [vmem:[%s1] sm:$0x3f]
  %v278 = vadd.f32 %v277, %v231
  %v279 = vxor.u32 %v278, 2147483648
  %v280 = vmul.f32 %v279, 1.442695
  %v281 = vpow.pop %v280
  %v282 = vadd.f32 %v281, 1.0
  %v283 = vrcp.pop %v282
  %v284 = vmul.f32 1.0, %v283
  %v286 = vrot.slane %v277, 2
  %v288 = vadd.f32 %v286, %v233
  %v289 = vxor.u32 %v288, 2147483648
  %v290 = vmul.f32 %v289, 1.442695
  %v291 = vpow.pop %v290
  %v292 = vadd.f32 %v291, 1.0
  %v293 = vrcp.pop %v292
  %v294 = vmul.f32 1.0, %v293
  %v296 = vlaneseq
  %v297 = vshrl.u32 %v296, 7
  %v298 = vsub.s32 0, %v297
  %v299 = vrot.slane %v32, %v298
  %v301 = vadd.f32 %v272, %v299
  %v302 = vmul.f32 %v284, %v301
  %v303 = vrot.slane %v277, 4
  %v305 = vadd.f32 %v303, %v302
  %v306 = vtanh.pop %v305
  %v307 = vsub.f32 1.0, %v294
  %v308 = vmul.f32 %v307, %v306
  %v309 = vmul.f32 %v294, 0.0
  %v310 = vadd.f32 %v308, %v309
  %v311 = vld [vmem:[%s4] sm:$0xff]
  %v312 = vld [vmem:[%s4 + $0x8] sm:$0xf]
  %v313 = vld [vmem:[%s4 + $0xc] sm:$0xff]
  %v314 = vld [vmem:[%s4 + $0x14] sm:$0xf]
  %v315 = vld [vmem:[%s4 + $0x18] sm:$0xff]
  %v316 = vld [vmem:[%s4 + $0x20] sm:$0xf]
  %v317 = vld [vmem:[%s4 + $0x24] sm:$0xff]
  %v318 = vld [vmem:[%s4 + $0x2c] sm:$0xf]
  %v319 = vld [vmem:[%s4 + $0x30] sm:$0xff]
  %v320 = vld [vmem:[%s4 + $0x38] sm:$0xf]
  %v321 = vld [vmem:[%s4 + $0x3c] sm:$0xff]
  %v322 = vld [vmem:[%s4 + $0x44] sm:$0xf]
  %v323 = vld [vmem:[%s4 + $0x48] sm:$0xff]
  %v324 = vld [vmem:[%s4 + $0x50] sm:$0xf]
  %v325 = vld [vmem:[%s4 + $0x54] sm:$0xff]
  %v326 = vld [vmem:[%s4 + $0x5c] sm:$0xf]
  %v327 = vld [vmem:[%s4 + $0x60] sm:$0xff]
  %v328 = vld [vmem:[%s4 + $0x68] sm:$0xf]
  %v329 = vld [vmem:[%s4 + $0x6c] sm:$0xff]
  %v330 = vld [vmem:[%s4 + $0x74] sm:$0xf]
  %v331 = vld [vmem:[%s4 + $0x78] sm:$0xff]
  %v332 = vld [vmem:[%s4 + $0x80] sm:$0xf]
  %v333 = vld [vmem:[%s4 + $0x84] sm:$0xff]
  %v334 = vld [vmem:[%s4 + $0x8c] sm:$0xf]
  %v335 = vld [vmem:[%s4 + $0x90] sm:$0xff]
  %v336 = vld [vmem:[%s4 + $0x98] sm:$0xf]
  %v337 = vld [vmem:[%s4 + $0x9c] sm:$0xff]
  %v338 = vld [vmem:[%s4 + $0xa4] sm:$0xf]
  %v339 = vld [vmem:[%s4 + $0xa8] sm:$0xff]
  %v340 = vld [vmem:[%s4 + $0xb0] sm:$0xf]
  %v341 = vld [vmem:[%s4 + $0xb4] sm:$0xff]
  %v342 = vld [vmem:[%s4 + $0xbc] sm:$0xf]
  %v375 = vunpack.c.l.b16 %v311
  %v376 = vunpack.c.h.b16 %v311
  %v377 = vunpack.c.l.b16 %v312
  %v378 = vunpack.c.l.b16 %v313
  %v379 = vunpack.c.h.b16 %v313
  %v380 = vunpack.c.l.b16 %v314
  %v381 = vunpack.c.l.b16 %v315
  %v382 = vunpack.c.h.b16 %v315
  %v383 = vunpack.c.l.b16 %v316
  %v384 = vunpack.c.l.b16 %v317
  %v385 = vunpack.c.h.b16 %v317
  %v386 = vunpack.c.l.b16 %v318
  %v387 = vunpack.c.l.b16 %v319
  %v388 = vunpack.c.h.b16 %v319
  %v389 = vunpack.c.l.b16 %v320
  %v390 = vunpack.c.l.b16 %v321
  %v391 = vunpack.c.h.b16 %v321
  %v392 = vunpack.c.l.b16 %v322
  %v393 = vunpack.c.l.b16 %v323
  %v394 = vunpack.c.h.b16 %v323
  %v395 = vunpack.c.l.b16 %v324
  %v396 = vunpack.c.l.b16 %v325
  %v397 = vunpack.c.h.b16 %v325
  %v398 = vunpack.c.l.b16 %v326
  %v399 = vunpack.c.l.b16 %v327
  %v400 = vunpack.c.h.b16 %v327
  %v401 = vunpack.c.l.b16 %v328
  %v402 = vunpack.c.l.b16 %v329
  %v403 = vunpack.c.h.b16 %v329
  %v404 = vunpack.c.l.b16 %v330
  %v405 = vunpack.c.l.b16 %v331
  %v406 = vunpack.c.h.b16 %v331
  %v407 = vunpack.c.l.b16 %v332
  %v408 = vunpack.c.l.b16 %v333
  %v409 = vunpack.c.h.b16 %v333
  %v410 = vunpack.c.l.b16 %v334
  %v411 = vunpack.c.l.b16 %v335
  %v412 = vunpack.c.h.b16 %v335
  %v413 = vunpack.c.l.b16 %v336
  %v414 = vunpack.c.l.b16 %v337
  %v415 = vunpack.c.h.b16 %v337
  %v416 = vunpack.c.l.b16 %v338
  %v417 = vunpack.c.l.b16 %v339
  %v418 = vunpack.c.h.b16 %v339
  %v419 = vunpack.c.l.b16 %v340
  %v420 = vunpack.c.l.b16 %v341
  %v421 = vunpack.c.h.b16 %v341
  %v422 = vunpack.c.l.b16 %v342
  %v423 = vpack.c.b16 %v378, %v375
  %v424 = vpack.c.b16 %v379, %v376
  %v425 = vpack.c.b16 %v380, %v377
  %v426 = vpack.c.b16 %v384, %v381
  %v427 = vpack.c.b16 %v385, %v382
  %v428 = vpack.c.b16 %v386, %v383
  %v429 = vpack.c.b16 %v390, %v387
  %v430 = vpack.c.b16 %v391, %v388
  %v431 = vpack.c.b16 %v392, %v389
  %v432 = vpack.c.b16 %v396, %v393
  %v433 = vpack.c.b16 %v397, %v394
  %v434 = vpack.c.b16 %v398, %v395
  %v435 = vpack.c.b16 %v402, %v399
  %v436 = vpack.c.b16 %v403, %v400
  %v437 = vpack.c.b16 %v404, %v401
  %v438 = vpack.c.b16 %v408, %v405
  %v439 = vpack.c.b16 %v409, %v406
  %v440 = vpack.c.b16 %v410, %v407
  %v441 = vpack.c.b16 %v414, %v411
  %v442 = vpack.c.b16 %v415, %v412
  %v443 = vpack.c.b16 %v416, %v413
  %v444 = vpack.c.b16 %v420, %v417
  %v445 = vpack.c.b16 %v421, %v418
  %v446 = vpack.c.b16 %v422, %v419
  %471 = vmatprep.subr.bf16.mxu0 %v424
  %472 = vmatpush1.bf16.msra.mxu0 %v423
  %473 = vmatprep.subr.bf16.mxu0 %v427
  %474 = vmatpush1.bf16.msra.mxu0 %v426
  %475 = vmatprep.subr.bf16.mxu0 %v430
  %476 = vmatpush1.bf16.msra.mxu0 %v429
  %477 = vmatprep.subr.bf16.mxu0 %v433
  %478 = vmatpush1.bf16.msra.mxu0 %v432
  %479 = vmatprep.subr.bf16.mxu0 %v436
  %480 = vmatpush1.bf16.msra.mxu0 %v435
  %481 = vmatprep.subr.bf16.mxu0 %v439
  %482 = vmatpush1.bf16.msra.mxu0 %v438
  %483 = vmatprep.subr.bf16.mxu0 %v442
  %484 = vmatpush1.bf16.msra.mxu0 %v441
  %485 = vmatprep.subr.bf16.mxu0 %v445
  %486 = vmatpush1.bf16.msra.mxu0 %v444
  %487 = vmatprep.subr.bf16.mxu0 0
  %488 = vmatpush1.bf16.msra.mxu0 0
  %489 = vmatprep.subr.bf16.mxu0 0
  %490 = vmatpush1.bf16.msra.mxu0 0
  %491 = vmatprep.subr.bf16.mxu0 0
  %492 = vmatpush1.bf16.msra.mxu0 0
  %493 = vmatprep.subr.bf16.mxu0 0
  %494 = vmatpush1.bf16.msra.mxu0 0
  %495 = vmatprep.subr.bf16.mxu0 0
  %496 = vmatpush1.bf16.msra.mxu0 0
  %497 = vmatprep.subr.bf16.mxu0 0
  %498 = vmatpush1.bf16.msra.mxu0 0
  %499 = vmatprep.subr.bf16.mxu0 0
  %500 = vmatpush1.bf16.msra.mxu0 0
  %501 = vmatprep.subr.bf16.mxu0 0
  %502 = vmatpush1.bf16.msra.mxu0 0
  %503 = vmatprep.mubr.bf16.mxu0 0
  %504 = vmatmul.mubr.bf16.gmra.mrb[0].mxu0 0
  %v505 = vpop.f32.mrb[0].mxu0
  %v506 = vadd.f32 0.0, %v505
  %v507 = vpop.f32.mrb[0].mxu0
  %v508 = vadd.f32 0.0, %v507
  %v509 = vpop.f32.mrb[0].mxu0
  %v510 = vpop.f32.mrb[0].mxu0
  %511 = vdwg.mxu0
  %512 = vmatprep.subr.bf16.mxu0 0
  %513 = vmatpush1.bf16.msra.mxu0 %v425
  %514 = vmatprep.subr.bf16.mxu0 0
  %515 = vmatpush1.bf16.msra.mxu0 %v428
  %516 = vmatprep.subr.bf16.mxu0 0
  %517 = vmatpush1.bf16.msra.mxu0 %v431
  %518 = vmatprep.subr.bf16.mxu0 0
  %519 = vmatpush1.bf16.msra.mxu0 %v434
  %520 = vmatprep.subr.bf16.mxu0 0
  %521 = vmatpush1.bf16.msra.mxu0 %v437
  %522 = vmatprep.subr.bf16.mxu0 0
  %523 = vmatpush1.bf16.msra.mxu0 %v440
  %524 = vmatprep.subr.bf16.mxu0 0
  %525 = vmatpush1.bf16.msra.mxu0 %v443
  %526 = vmatprep.subr.bf16.mxu0 0
  %527 = vmatpush1.bf16.msra.mxu0 %v446
  %528 = vmatprep.subr.bf16.mxu0 0
  %529 = vmatpush1.bf16.msra.mxu0 0
  %530 = vmatprep.subr.bf16.mxu0 0
  %531 = vmatpush1.bf16.msra.mxu0 0
  %532 = vmatprep.subr.bf16.mxu0 0
  %533 = vmatpush1.bf16.msra.mxu0 0
  %534 = vmatprep.subr.bf16.mxu0 0
  %535 = vmatpush1.bf16.msra.mxu0 0
  %536 = vmatprep.subr.bf16.mxu0 0
  %537 = vmatpush1.bf16.msra.mxu0 0
  %538 = vmatprep.subr.bf16.mxu0 0
  %539 = vmatpush1.bf16.msra.mxu0 0
  %540 = vmatprep.subr.bf16.mxu0 0
  %541 = vmatpush1.bf16.msra.mxu0 0
  %542 = vmatprep.subr.bf16.mxu0 0
  %543 = vmatpush1.bf16.msra.mxu0 0
  %544 = vmatprep.mubr.bf16.mxu0 0
  %545 = vmatmul.mubr.bf16.gmra.mrb[0].mxu0 0
  %v546 = vpop.f32.mrb[0].mxu0
  %v547 = vadd.f32 0.0, %v546
  %v548 = vpop.f32.mrb[0].mxu0
  %v549 = vpop.f32.mrb[0].mxu0
  %v550 = vpop.f32.mrb[0].mxu0
  %551 = vdwg.mxu0
  %s552 = scalar_lea.vmem %s2, 42
  %v553 = vld [vmem:[%s552] sm:$0x3f]
  %v554 = vadd.f32 %v553, %v506
  %v555 = vxor.u32 %v554, 2147483648
  %v556 = vmul.f32 %v555, 1.442695
  %v557 = vpow.pop %v556
  %v558 = vadd.f32 %v557, 1.0
  %v559 = vrcp.pop %v558
  %v560 = vmul.f32 1.0, %v559
  %v562 = vrot.slane %v553, 2
  %v564 = vadd.f32 %v562, %v508
  %v565 = vxor.u32 %v564, 2147483648
  %v566 = vmul.f32 %v565, 1.442695
  %v567 = vpow.pop %v566
  %v568 = vadd.f32 %v567, 1.0
  %v569 = vrcp.pop %v568
  %v570 = vmul.f32 1.0, %v569
  %v572 = vlaneseq
  %v573 = vshrl.u32 %v572, 7
  %v574 = vsub.s32 0, %v573
  %v575 = vrot.slane %v33, %v574
  %v577 = vadd.f32 %v547, %v575
  %v578 = vmul.f32 %v560, %v577
  %v579 = vrot.slane %v553, 4
  %v581 = vadd.f32 %v579, %v578
  %v582 = vtanh.pop %v581
  %v583 = vsub.f32 1.0, %v570
  %v584 = vmul.f32 %v583, %v582
  %v585 = vmul.f32 %v570, 0.0
  %v586 = vadd.f32 %v584, %v585
  %v587 = vsel %vm34, 1, 0
  %588 = vset.pattern.permute.xlu0 0
  %589 = vperm.xlu0 %588, %v587
  %v590 = vpop.permute.xlu0 %589
  %vm591 = vcmp.eq.s32.totalorder %v590, 1
  %v592 = vsel %vm591, %v310, 0.0
  %593 = vst [vmem:[%s7] sm:$0x3] %v592
  %v594 = vsel %vm35, 1, 0
  %595 = vset.pattern.permute.xlu0 0
  %596 = vperm.xlu0 %595, %v594
  %v597 = vpop.permute.xlu0 %596
  %vm598 = vcmp.eq.s32.totalorder %v597, 1
  %v599 = vsel %vm598, %v586, 0.0
  %s600 = scalar_lea.vmem %s8, 14
  %601 = vst [vmem:[%s600] sm:$0x3] %v599
  %vm602 = vcmp.gt.s32.totalorder %v31, 1
  %vm603 = vcmp.gt.s32.totalorder %v31, 6
  %v604 = vpack.c.bf16 %v592, %v592
  %v605 = vld [vmem:[%s3] sm:$0xff]
  %v606 = vld [vmem:[%s3 + $0x8] sm:$0xf]
  %v607 = vld [vmem:[%s3 + $0xc] sm:$0xff]
  %v608 = vld [vmem:[%s3 + $0x14] sm:$0xf]
  %v609 = vld [vmem:[%s3 + $0x18] sm:$0xff]
  %v610 = vld [vmem:[%s3 + $0x20] sm:$0xf]
  %v611 = vld [vmem:[%s3 + $0x24] sm:$0xff]
  %v612 = vld [vmem:[%s3 + $0x2c] sm:$0xf]
  %v613 = vld [vmem:[%s3 + $0x30] sm:$0xff]
  %v614 = vld [vmem:[%s3 + $0x38] sm:$0xf]
  %v615 = vld [vmem:[%s3 + $0x3c] sm:$0xff]
  %v616 = vld [vmem:[%s3 + $0x44] sm:$0xf]
  %v617 = vld [vmem:[%s3 + $0x48] sm:$0xff]
  %v618 = vld [vmem:[%s3 + $0x50] sm:$0xf]
  %v619 = vld [vmem:[%s3 + $0x54] sm:$0xff]
  %v620 = vld [vmem:[%s3 + $0x5c] sm:$0xf]
  %v621 = vld [vmem:[%s3 + $0x60] sm:$0xff]
  %v622 = vld [vmem:[%s3 + $0x68] sm:$0xf]
  %v623 = vld [vmem:[%s3 + $0x6c] sm:$0xff]
  %v624 = vld [vmem:[%s3 + $0x74] sm:$0xf]
  %v625 = vld [vmem:[%s3 + $0x78] sm:$0xff]
  %v626 = vld [vmem:[%s3 + $0x80] sm:$0xf]
  %v627 = vld [vmem:[%s3 + $0x84] sm:$0xff]
  %v628 = vld [vmem:[%s3 + $0x8c] sm:$0xf]
  %v629 = vld [vmem:[%s3 + $0x90] sm:$0xff]
  %v630 = vld [vmem:[%s3 + $0x98] sm:$0xf]
  %v631 = vld [vmem:[%s3 + $0x9c] sm:$0xff]
  %v632 = vld [vmem:[%s3 + $0xa4] sm:$0xf]
  %v633 = vld [vmem:[%s3 + $0xa8] sm:$0xff]
  %v634 = vld [vmem:[%s3 + $0xb0] sm:$0xf]
  %v635 = vld [vmem:[%s3 + $0xb4] sm:$0xff]
  %v636 = vld [vmem:[%s3 + $0xbc] sm:$0xf]
  %v669 = vunpack.c.l.b16 %v605
  %v670 = vunpack.c.h.b16 %v605
  %v671 = vunpack.c.l.b16 %v606
  %v672 = vunpack.c.l.b16 %v607
  %v673 = vunpack.c.h.b16 %v607
  %v674 = vunpack.c.l.b16 %v608
  %v675 = vunpack.c.l.b16 %v609
  %v676 = vunpack.c.h.b16 %v609
  %v677 = vunpack.c.l.b16 %v610
  %v678 = vunpack.c.l.b16 %v611
  %v679 = vunpack.c.h.b16 %v611
  %v680 = vunpack.c.l.b16 %v612
  %v681 = vunpack.c.l.b16 %v613
  %v682 = vunpack.c.h.b16 %v613
  %v683 = vunpack.c.l.b16 %v614
  %v684 = vunpack.c.l.b16 %v615
  %v685 = vunpack.c.h.b16 %v615
  %v686 = vunpack.c.l.b16 %v616
  %v687 = vunpack.c.l.b16 %v617
  %v688 = vunpack.c.h.b16 %v617
  %v689 = vunpack.c.l.b16 %v618
  %v690 = vunpack.c.l.b16 %v619
  %v691 = vunpack.c.h.b16 %v619
  %v692 = vunpack.c.l.b16 %v620
  %v693 = vunpack.c.l.b16 %v621
  %v694 = vunpack.c.h.b16 %v621
  %v695 = vunpack.c.l.b16 %v622
  %v696 = vunpack.c.l.b16 %v623
  %v697 = vunpack.c.h.b16 %v623
  %v698 = vunpack.c.l.b16 %v624
  %v699 = vunpack.c.l.b16 %v625
  %v700 = vunpack.c.h.b16 %v625
  %v701 = vunpack.c.l.b16 %v626
  %v702 = vunpack.c.l.b16 %v627
  %v703 = vunpack.c.h.b16 %v627
  %v704 = vunpack.c.l.b16 %v628
  %v705 = vunpack.c.l.b16 %v629
  %v706 = vunpack.c.h.b16 %v629
  %v707 = vunpack.c.l.b16 %v630
  %v708 = vunpack.c.l.b16 %v631
  %v709 = vunpack.c.h.b16 %v631
  %v710 = vunpack.c.l.b16 %v632
  %v711 = vunpack.c.l.b16 %v633
  %v712 = vunpack.c.h.b16 %v633
  %v713 = vunpack.c.l.b16 %v634
  %v714 = vunpack.c.l.b16 %v635
  %v715 = vunpack.c.h.b16 %v635
  %v716 = vunpack.c.l.b16 %v636
  %v717 = vpack.c.b16 %v672, %v669
  %v718 = vpack.c.b16 %v673, %v670
  %v719 = vpack.c.b16 %v674, %v671
  %v720 = vpack.c.b16 %v678, %v675
  %v721 = vpack.c.b16 %v679, %v676
  %v722 = vpack.c.b16 %v680, %v677
  %v723 = vpack.c.b16 %v684, %v681
  %v724 = vpack.c.b16 %v685, %v682
  %v725 = vpack.c.b16 %v686, %v683
  %v726 = vpack.c.b16 %v690, %v687
  %v727 = vpack.c.b16 %v691, %v688
  %v728 = vpack.c.b16 %v692, %v689
  %v729 = vpack.c.b16 %v696, %v693
  %v730 = vpack.c.b16 %v697, %v694
  %v731 = vpack.c.b16 %v698, %v695
  %v732 = vpack.c.b16 %v702, %v699
  %v733 = vpack.c.b16 %v703, %v700
  %v734 = vpack.c.b16 %v704, %v701
  %v735 = vpack.c.b16 %v708, %v705
  %v736 = vpack.c.b16 %v709, %v706
  %v737 = vpack.c.b16 %v710, %v707
  %v738 = vpack.c.b16 %v714, %v711
  %v739 = vpack.c.b16 %v715, %v712
  %v740 = vpack.c.b16 %v716, %v713
  %765 = vmatprep.subr.bf16.mxu0 %v718
  %766 = vmatpush1.bf16.msra.mxu0 %v717
  %767 = vmatprep.subr.bf16.mxu0 %v721
  %768 = vmatpush1.bf16.msra.mxu0 %v720
  %769 = vmatprep.subr.bf16.mxu0 %v724
  %770 = vmatpush1.bf16.msra.mxu0 %v723
  %771 = vmatprep.subr.bf16.mxu0 %v727
  %772 = vmatpush1.bf16.msra.mxu0 %v726
  %773 = vmatprep.subr.bf16.mxu0 %v730
  %774 = vmatpush1.bf16.msra.mxu0 %v729
  %775 = vmatprep.subr.bf16.mxu0 %v733
  %776 = vmatpush1.bf16.msra.mxu0 %v732
  %777 = vmatprep.subr.bf16.mxu0 %v736
  %778 = vmatpush1.bf16.msra.mxu0 %v735
  %779 = vmatprep.subr.bf16.mxu0 %v739
  %780 = vmatpush1.bf16.msra.mxu0 %v738
  %781 = vmatprep.subr.bf16.mxu0 0
  %782 = vmatpush1.bf16.msra.mxu0 0
  %783 = vmatprep.subr.bf16.mxu0 0
  %784 = vmatpush1.bf16.msra.mxu0 0
  %785 = vmatprep.subr.bf16.mxu0 0
  %786 = vmatpush1.bf16.msra.mxu0 0
  %787 = vmatprep.subr.bf16.mxu0 0
  %788 = vmatpush1.bf16.msra.mxu0 0
  %789 = vmatprep.subr.bf16.mxu0 0
  %790 = vmatpush1.bf16.msra.mxu0 0
  %791 = vmatprep.subr.bf16.mxu0 0
  %792 = vmatpush1.bf16.msra.mxu0 0
  %793 = vmatprep.subr.bf16.mxu0 0
  %794 = vmatpush1.bf16.msra.mxu0 0
  %795 = vmatprep.subr.bf16.mxu0 0
  %796 = vmatpush1.bf16.msra.mxu0 0
  %797 = vmatprep.mubr.bf16.mxu0 0
  %798 = vmatmul.mubr.bf16.gmra.mrb[0].mxu0 %v604
  %v799 = vpop.f32.mrb[0].mxu0
  %v800 = vadd.f32 0.0, %v799
  %v801 = vpop.f32.mrb[0].mxu0
  %v802 = vadd.f32 0.0, %v801
  %v803 = vpop.f32.mrb[0].mxu0
  %v804 = vpop.f32.mrb[0].mxu0
  %805 = vdwg.mxu0
  %806 = vmatprep.subr.bf16.mxu0 0
  %807 = vmatpush1.bf16.msra.mxu0 %v719
  %808 = vmatprep.subr.bf16.mxu0 0
  %809 = vmatpush1.bf16.msra.mxu0 %v722
  %810 = vmatprep.subr.bf16.mxu0 0
  %811 = vmatpush1.bf16.msra.mxu0 %v725
  %812 = vmatprep.subr.bf16.mxu0 0
  %813 = vmatpush1.bf16.msra.mxu0 %v728
  %814 = vmatprep.subr.bf16.mxu0 0
  %815 = vmatpush1.bf16.msra.mxu0 %v731
  %816 = vmatprep.subr.bf16.mxu0 0
  %817 = vmatpush1.bf16.msra.mxu0 %v734
  %818 = vmatprep.subr.bf16.mxu0 0
  %819 = vmatpush1.bf16.msra.mxu0 %v737
  %820 = vmatprep.subr.bf16.mxu0 0
  %821 = vmatpush1.bf16.msra.mxu0 %v740
  %822 = vmatprep.subr.bf16.mxu0 0
  %823 = vmatpush1.bf16.msra.mxu0 0
  %824 = vmatprep.subr.bf16.mxu0 0
  %825 = vmatpush1.bf16.msra.mxu0 0
  %826 = vmatprep.subr.bf16.mxu0 0
  %827 = vmatpush1.bf16.msra.mxu0 0
  %828 = vmatprep.subr.bf16.mxu0 0
  %829 = vmatpush1.bf16.msra.mxu0 0
  %830 = vmatprep.subr.bf16.mxu0 0
  %831 = vmatpush1.bf16.msra.mxu0 0
  %832 = vmatprep.subr.bf16.mxu0 0
  %833 = vmatpush1.bf16.msra.mxu0 0
  %834 = vmatprep.subr.bf16.mxu0 0
  %835 = vmatpush1.bf16.msra.mxu0 0
  %836 = vmatprep.subr.bf16.mxu0 0
  %837 = vmatpush1.bf16.msra.mxu0 0
  %838 = vmatprep.mubr.bf16.mxu0 0
  %839 = vmatmul.mubr.bf16.gmra.mrb[0].mxu0 %v604
  %v840 = vpop.f32.mrb[0].mxu0
  %v841 = vadd.f32 0.0, %v840
  %v842 = vpop.f32.mrb[0].mxu0
  %v843 = vpop.f32.mrb[0].mxu0
  %v844 = vpop.f32.mrb[0].mxu0
  %845 = vdwg.mxu0
  %s846 = scalar_lea.vmem %s1, 6
  %v847 = vld [vmem:[%s846] sm:$0x3f]
  %v848 = vadd.f32 %v847, %v800
  %v849 = vxor.u32 %v848, 2147483648
  %v850 = vmul.f32 %v849, 1.442695
  %v851 = vpow.pop %v850
  %v852 = vadd.f32 %v851, 1.0
  %v853 = vrcp.pop %v852
  %v854 = vmul.f32 1.0, %v853
  %v856 = vrot.slane %v847, 2
  %v858 = vadd.f32 %v856, %v802
  %v859 = vxor.u32 %v858, 2147483648
  %v860 = vmul.f32 %v859, 1.442695
  %v861 = vpow.pop %v860
  %v862 = vadd.f32 %v861, 1.0
  %v863 = vrcp.pop %v862
  %v864 = vmul.f32 1.0, %v863
  %v865 = vadd.f32 %v841, %v299
  %v866 = vmul.f32 %v854, %v865
  %v867 = vrot.slane %v847, 4
  %v869 = vadd.f32 %v867, %v866
  %v870 = vtanh.pop %v869
  %v871 = vsub.f32 1.0, %v864
  %v872 = vmul.f32 %v871, %v870
  %v873 = vmul.f32 %v864, %v592
  %v874 = vadd.f32 %v872, %v873
  %v875 = vpack.c.bf16 %v599, %v599
  %v876 = vld [vmem:[%s4] sm:$0xff]
  %v877 = vld [vmem:[%s4 + $0x8] sm:$0xf]
  %v878 = vld [vmem:[%s4 + $0xc] sm:$0xff]
  %v879 = vld [vmem:[%s4 + $0x14] sm:$0xf]
  %v880 = vld [vmem:[%s4 + $0x18] sm:$0xff]
  %v881 = vld [vmem:[%s4 + $0x20] sm:$0xf]
  %v882 = vld [vmem:[%s4 + $0x24] sm:$0xff]
  %v883 = vld [vmem:[%s4 + $0x2c] sm:$0xf]
  %v884 = vld [vmem:[%s4 + $0x30] sm:$0xff]
  %v885 = vld [vmem:[%s4 + $0x38] sm:$0xf]
  %v886 = vld [vmem:[%s4 + $0x3c] sm:$0xff]
  %v887 = vld [vmem:[%s4 + $0x44] sm:$0xf]
  %v888 = vld [vmem:[%s4 + $0x48] sm:$0xff]
  %v889 = vld [vmem:[%s4 + $0x50] sm:$0xf]
  %v890 = vld [vmem:[%s4 + $0x54] sm:$0xff]
  %v891 = vld [vmem:[%s4 + $0x5c] sm:$0xf]
  %v892 = vld [vmem:[%s4 + $0x60] sm:$0xff]
  %v893 = vld [vmem:[%s4 + $0x68] sm:$0xf]
  %v894 = vld [vmem:[%s4 + $0x6c] sm:$0xff]
  %v895 = vld [vmem:[%s4 + $0x74] sm:$0xf]
  %v896 = vld [vmem:[%s4 + $0x78] sm:$0xff]
  %v897 = vld [vmem:[%s4 + $0x80] sm:$0xf]
  %v898 = vld [vmem:[%s4 + $0x84] sm:$0xff]
  %v899 = vld [vmem:[%s4 + $0x8c] sm:$0xf]
  %v900 = vld [vmem:[%s4 + $0x90] sm:$0xff]
  %v901 = vld [vmem:[%s4 + $0x98] sm:$0xf]
  %v902 = vld [vmem:[%s4 + $0x9c] sm:$0xff]
  %v903 = vld [vmem:[%s4 + $0xa4] sm:$0xf]
  %v904 = vld [vmem:[%s4 + $0xa8] sm:$0xff]
  %v905 = vld [vmem:[%s4 + $0xb0] sm:$0xf]
  %v906 = vld [vmem:[%s4 + $0xb4] sm:$0xff]
  %v907 = vld [vmem:[%s4 + $0xbc] sm:$0xf]
  %v940 = vunpack.c.l.b16 %v876
  %v941 = vunpack.c.h.b16 %v876
  %v942 = vunpack.c.l.b16 %v877
  %v943 = vunpack.c.l.b16 %v878
  %v944 = vunpack.c.h.b16 %v878
  %v945 = vunpack.c.l.b16 %v879
  %v946 = vunpack.c.l.b16 %v880
  %v947 = vunpack.c.h.b16 %v880
  %v948 = vunpack.c.l.b16 %v881
  %v949 = vunpack.c.l.b16 %v882
  %v950 = vunpack.c.h.b16 %v882
  %v951 = vunpack.c.l.b16 %v883
  %v952 = vunpack.c.l.b16 %v884
  %v953 = vunpack.c.h.b16 %v884
  %v954 = vunpack.c.l.b16 %v885
  %v955 = vunpack.c.l.b16 %v886
  %v956 = vunpack.c.h.b16 %v886
  %v957 = vunpack.c.l.b16 %v887
  %v958 = vunpack.c.l.b16 %v888
  %v959 = vunpack.c.h.b16 %v888
  %v960 = vunpack.c.l.b16 %v889
  %v961 = vunpack.c.l.b16 %v890
  %v962 = vunpack.c.h.b16 %v890
  %v963 = vunpack.c.l.b16 %v891
  %v964 = vunpack.c.l.b16 %v892
  %v965 = vunpack.c.h.b16 %v892
  %v966 = vunpack.c.l.b16 %v893
  %v967 = vunpack.c.l.b16 %v894
  %v968 = vunpack.c.h.b16 %v894
  %v969 = vunpack.c.l.b16 %v895
  %v970 = vunpack.c.l.b16 %v896
  %v971 = vunpack.c.h.b16 %v896
  %v972 = vunpack.c.l.b16 %v897
  %v973 = vunpack.c.l.b16 %v898
  %v974 = vunpack.c.h.b16 %v898
  %v975 = vunpack.c.l.b16 %v899
  %v976 = vunpack.c.l.b16 %v900
  %v977 = vunpack.c.h.b16 %v900
  %v978 = vunpack.c.l.b16 %v901
  %v979 = vunpack.c.l.b16 %v902
  %v980 = vunpack.c.h.b16 %v902
  %v981 = vunpack.c.l.b16 %v903
  %v982 = vunpack.c.l.b16 %v904
  %v983 = vunpack.c.h.b16 %v904
  %v984 = vunpack.c.l.b16 %v905
  %v985 = vunpack.c.l.b16 %v906
  %v986 = vunpack.c.h.b16 %v906
  %v987 = vunpack.c.l.b16 %v907
  %v988 = vpack.c.b16 %v943, %v940
  %v989 = vpack.c.b16 %v944, %v941
  %v990 = vpack.c.b16 %v945, %v942
  %v991 = vpack.c.b16 %v949, %v946
  %v992 = vpack.c.b16 %v950, %v947
  %v993 = vpack.c.b16 %v951, %v948
  %v994 = vpack.c.b16 %v955, %v952
  %v995 = vpack.c.b16 %v956, %v953
  %v996 = vpack.c.b16 %v957, %v954
  %v997 = vpack.c.b16 %v961, %v958
  %v998 = vpack.c.b16 %v962, %v959
  %v999 = vpack.c.b16 %v963, %v960
  %v1000 = vpack.c.b16 %v967, %v964
  %v1001 = vpack.c.b16 %v968, %v965
  %v1002 = vpack.c.b16 %v969, %v966
  %v1003 = vpack.c.b16 %v973, %v970
  %v1004 = vpack.c.b16 %v974, %v971
  %v1005 = vpack.c.b16 %v975, %v972
  %v1006 = vpack.c.b16 %v979, %v976
  %v1007 = vpack.c.b16 %v980, %v977
  %v1008 = vpack.c.b16 %v981, %v978
  %v1009 = vpack.c.b16 %v985, %v982
  %v1010 = vpack.c.b16 %v986, %v983
  %v1011 = vpack.c.b16 %v987, %v984
  %1036 = vmatprep.subr.bf16.mxu0 %v989
  %1037 = vmatpush1.bf16.msra.mxu0 %v988
  %1038 = vmatprep.subr.bf16.mxu0 %v992
  %1039 = vmatpush1.bf16.msra.mxu0 %v991
  %1040 = vmatprep.subr.bf16.mxu0 %v995
  %1041 = vmatpush1.bf16.msra.mxu0 %v994
  %1042 = vmatprep.subr.bf16.mxu0 %v998
  %1043 = vmatpush1.bf16.msra.mxu0 %v997
  %1044 = vmatprep.subr.bf16.mxu0 %v1001
  %1045 = vmatpush1.bf16.msra.mxu0 %v1000
  %1046 = vmatprep.subr.bf16.mxu0 %v1004
  %1047 = vmatpush1.bf16.msra.mxu0 %v1003
  %1048 = vmatprep.subr.bf16.mxu0 %v1007
  %1049 = vmatpush1.bf16.msra.mxu0 %v1006
  %1050 = vmatprep.subr.bf16.mxu0 %v1010
  %1051 = vmatpush1.bf16.msra.mxu0 %v1009
  %1052 = vmatprep.subr.bf16.mxu0 0
  %1053 = vmatpush1.bf16.msra.mxu0 0
  %1054 = vmatprep.subr.bf16.mxu0 0
  %1055 = vmatpush1.bf16.msra.mxu0 0
  %1056 = vmatprep.subr.bf16.mxu0 0
  %1057 = vmatpush1.bf16.msra.mxu0 0
  %1058 = vmatprep.subr.bf16.mxu0 0
  %1059 = vmatpush1.bf16.msra.mxu0 0
  %1060 = vmatprep.subr.bf16.mxu0 0
  %1061 = vmatpush1.bf16.msra.mxu0 0
  %1062 = vmatprep.subr.bf16.mxu0 0
  %1063 = vmatpush1.bf16.msra.mxu0 0
  %1064 = vmatprep.subr.bf16.mxu0 0
  %1065 = vmatpush1.bf16.msra.mxu0 0
  %1066 = vmatprep.subr.bf16.mxu0 0
  %1067 = vmatpush1.bf16.msra.mxu0 0
  %1068 = vmatprep.mubr.bf16.mxu0 0
  %1069 = vmatmul.mubr.bf16.gmra.mrb[0].mxu0 %v875
  %v1070 = vpop.f32.mrb[0].mxu0
  %v1071 = vadd.f32 0.0, %v1070
  %v1072 = vpop.f32.mrb[0].mxu0
  %v1073 = vadd.f32 0.0, %v1072
  %v1074 = vpop.f32.mrb[0].mxu0
  %v1075 = vpop.f32.mrb[0].mxu0
  %1076 = vdwg.mxu0
  %1077 = vmatprep.subr.bf16.mxu0 0
  %1078 = vmatpush1.bf16.msra.mxu0 %v990
  %1079 = vmatprep.subr.bf16.mxu0 0
  %1080 = vmatpush1.bf16.msra.mxu0 %v993
  %1081 = vmatprep.subr.bf16.mxu0 0
  %1082 = vmatpush1.bf16.msra.mxu0 %v996
  %1083 = vmatprep.subr.bf16.mxu0 0
  %1084 = vmatpush1.bf16.msra.mxu0 %v999
  %1085 = vmatprep.subr.bf16.mxu0 0
  %1086 = vmatpush1.bf16.msra.mxu0 %v1002
  %1087 = vmatprep.subr.bf16.mxu0 0
  %1088 = vmatpush1.bf16.msra.mxu0 %v1005
  %1089 = vmatprep.subr.bf16.mxu0 0
  %1090 = vmatpush1.bf16.msra.mxu0 %v1008
  %1091 = vmatprep.subr.bf16.mxu0 0
  %1092 = vmatpush1.bf16.msra.mxu0 %v1011
  %1093 = vmatprep.subr.bf16.mxu0 0
  %1094 = vmatpush1.bf16.msra.mxu0 0
  %1095 = vmatprep.subr.bf16.mxu0 0
  %1096 = vmatpush1.bf16.msra.mxu0 0
  %1097 = vmatprep.subr.bf16.mxu0 0
  %1098 = vmatpush1.bf16.msra.mxu0 0
  %1099 = vmatprep.subr.bf16.mxu0 0
  %1100 = vmatpush1.bf16.msra.mxu0 0
  %1101 = vmatprep.subr.bf16.mxu0 0
  %1102 = vmatpush1.bf16.msra.mxu0 0
  %1103 = vmatprep.subr.bf16.mxu0 0
  %1104 = vmatpush1.bf16.msra.mxu0 0
  %1105 = vmatprep.subr.bf16.mxu0 0
  %1106 = vmatpush1.bf16.msra.mxu0 0
  %1107 = vmatprep.subr.bf16.mxu0 0
  %1108 = vmatpush1.bf16.msra.mxu0 0
  %1109 = vmatprep.mubr.bf16.mxu0 0
  %1110 = vmatmul.mubr.bf16.gmra.mrb[0].mxu0 %v875
  %v1111 = vpop.f32.mrb[0].mxu0
  %v1112 = vadd.f32 0.0, %v1111
  %v1113 = vpop.f32.mrb[0].mxu0
  %v1114 = vpop.f32.mrb[0].mxu0
  %v1115 = vpop.f32.mrb[0].mxu0
  %1116 = vdwg.mxu0
  %s1117 = scalar_lea.vmem %s2, 36
  %v1118 = vld [vmem:[%s1117] sm:$0x3f]
  %v1119 = vadd.f32 %v1118, %v1071
  %v1120 = vxor.u32 %v1119, 2147483648
  %v1121 = vmul.f32 %v1120, 1.442695
  %v1122 = vpow.pop %v1121
  %v1123 = vadd.f32 %v1122, 1.0
  %v1124 = vrcp.pop %v1123
  %v1125 = vmul.f32 1.0, %v1124
  %v1127 = vrot.slane %v1118, 2
  %v1129 = vadd.f32 %v1127, %v1073
  %v1130 = vxor.u32 %v1129, 2147483648
  %v1131 = vmul.f32 %v1130, 1.442695
  %v1132 = vpow.pop %v1131
  %v1133 = vadd.f32 %v1132, 1.0
  %v1134 = vrcp.pop %v1133
  %v1135 = vmul.f32 1.0, %v1134
  %v1136 = vadd.f32 %v1112, %v575
  %v1137 = vmul.f32 %v1125, %v1136
  %v1138 = vrot.slane %v1118, 4
  %v1140 = vadd.f32 %v1138, %v1137
  %v1141 = vtanh.pop %v1140
  %v1142 = vsub.f32 1.0, %v1135
  %v1143 = vmul.f32 %v1142, %v1141
  %v1144 = vmul.f32 %v1135, %v599
  %v1145 = vadd.f32 %v1143, %v1144
  %v1146 = vsel %vm602, 1, 0
  %1147 = vset.pattern.permute.xlu0 0
  %1148 = vperm.xlu0 %1147, %v1146
  %v1149 = vpop.permute.xlu0 %1148
  %vm1150 = vcmp.eq.s32.totalorder %v1149, 1
  %v1151 = vsel %vm1150, %v874, 0.0
  %s1152 = scalar_lea.vmem %s7, 2
  %1153 = vst [vmem:[%s1152] sm:$0x3] %v1151
  %v1154 = vsel %vm603, 1, 0
  %1155 = vset.pattern.permute.xlu0 0
  %1156 = vperm.xlu0 %1155, %v1154
  %v1157 = vpop.permute.xlu0 %1156
  %vm1158 = vcmp.eq.s32.totalorder %v1157, 1
  %v1159 = vsel %vm1158, %v1145, 0.0
  %s1160 = scalar_lea.vmem %s8, 12
  %1161 = vst [vmem:[%s1160] sm:$0x3] %v1159
  %v1162 = vsel %vm1150, %v874, %v592
  %v1163 = vsel %vm1158, %v1145, %v599
  %vm1164 = vcmp.gt.s32.totalorder %v31, 2
  %vm1165 = vcmp.gt.s32.totalorder %v31, 5
  %v1166 = vpack.c.bf16 %v1162, %v1162
  %v1167 = vld [vmem:[%s3] sm:$0xff]
  %v1168 = vld [vmem:[%s3 + $0x8] sm:$0xf]
  %v1169 = vld [vmem:[%s3 + $0xc] sm:$0xff]
  %v1170 = vld [vmem:[%s3 + $0x14] sm:$0xf]
  %v1171 = vld [vmem:[%s3 + $0x18] sm:$0xff]
  %v1172 = vld [vmem:[%s3 + $0x20] sm:$0xf]
  %v1173 = vld [vmem:[%s3 + $0x24] sm:$0xff]
  %v1174 = vld [vmem:[%s3 + $0x2c] sm:$0xf]
  %v1175 = vld [vmem:[%s3 + $0x30] sm:$0xff]
  %v1176 = vld [vmem:[%s3 + $0x38] sm:$0xf]
  %v1177 = vld [vmem:[%s3 + $0x3c] sm:$0xff]
  %v1178 = vld [vmem:[%s3 + $0x44] sm:$0xf]
  %v1179 = vld [vmem:[%s3 + $0x48] sm:$0xff]
  %v1180 = vld [vmem:[%s3 + $0x50] sm:$0xf]
  %v1181 = vld [vmem:[%s3 + $0x54] sm:$0xff]
  %v1182 = vld [vmem:[%s3 + $0x5c] sm:$0xf]
  %v1183 = vld [vmem:[%s3 + $0x60] sm:$0xff]
  %v1184 = vld [vmem:[%s3 + $0x68] sm:$0xf]
  %v1185 = vld [vmem:[%s3 + $0x6c] sm:$0xff]
  %v1186 = vld [vmem:[%s3 + $0x74] sm:$0xf]
  %v1187 = vld [vmem:[%s3 + $0x78] sm:$0xff]
  %v1188 = vld [vmem:[%s3 + $0x80] sm:$0xf]
  %v1189 = vld [vmem:[%s3 + $0x84] sm:$0xff]
  %v1190 = vld [vmem:[%s3 + $0x8c] sm:$0xf]
  %v1191 = vld [vmem:[%s3 + $0x90] sm:$0xff]
  %v1192 = vld [vmem:[%s3 + $0x98] sm:$0xf]
  %v1193 = vld [vmem:[%s3 + $0x9c] sm:$0xff]
  %v1194 = vld [vmem:[%s3 + $0xa4] sm:$0xf]
  %v1195 = vld [vmem:[%s3 + $0xa8] sm:$0xff]
  %v1196 = vld [vmem:[%s3 + $0xb0] sm:$0xf]
  %v1197 = vld [vmem:[%s3 + $0xb4] sm:$0xff]
  %v1198 = vld [vmem:[%s3 + $0xbc] sm:$0xf]
  %v1231 = vunpack.c.l.b16 %v1167
  %v1232 = vunpack.c.h.b16 %v1167
  %v1233 = vunpack.c.l.b16 %v1168
  %v1234 = vunpack.c.l.b16 %v1169
  %v1235 = vunpack.c.h.b16 %v1169
  %v1236 = vunpack.c.l.b16 %v1170
  %v1237 = vunpack.c.l.b16 %v1171
  %v1238 = vunpack.c.h.b16 %v1171
  %v1239 = vunpack.c.l.b16 %v1172
  %v1240 = vunpack.c.l.b16 %v1173
  %v1241 = vunpack.c.h.b16 %v1173
  %v1242 = vunpack.c.l.b16 %v1174
  %v1243 = vunpack.c.l.b16 %v1175
  %v1244 = vunpack.c.h.b16 %v1175
  %v1245 = vunpack.c.l.b16 %v1176
  %v1246 = vunpack.c.l.b16 %v1177
  %v1247 = vunpack.c.h.b16 %v1177
  %v1248 = vunpack.c.l.b16 %v1178
  %v1249 = vunpack.c.l.b16 %v1179
  %v1250 = vunpack.c.h.b16 %v1179
  %v1251 = vunpack.c.l.b16 %v1180
  %v1252 = vunpack.c.l.b16 %v1181
  %v1253 = vunpack.c.h.b16 %v1181
  %v1254 = vunpack.c.l.b16 %v1182
  %v1255 = vunpack.c.l.b16 %v1183
  %v1256 = vunpack.c.h.b16 %v1183
  %v1257 = vunpack.c.l.b16 %v1184
  %v1258 = vunpack.c.l.b16 %v1185
  %v1259 = vunpack.c.h.b16 %v1185
  %v1260 = vunpack.c.l.b16 %v1186
  %v1261 = vunpack.c.l.b16 %v1187
  %v1262 = vunpack.c.h.b16 %v1187
  %v1263 = vunpack.c.l.b16 %v1188
  %v1264 = vunpack.c.l.b16 %v1189
  %v1265 = vunpack.c.h.b16 %v1189
  %v1266 = vunpack.c.l.b16 %v1190
  %v1267 = vunpack.c.l.b16 %v1191
  %v1268 = vunpack.c.h.b16 %v1191
  %v1269 = vunpack.c.l.b16 %v1192
  %v1270 = vunpack.c.l.b16 %v1193
  %v1271 = vunpack.c.h.b16 %v1193
  %v1272 = vunpack.c.l.b16 %v1194
  %v1273 = vunpack.c.l.b16 %v1195
  %v1274 = vunpack.c.h.b16 %v1195
  %v1275 = vunpack.c.l.b16 %v1196
  %v1276 = vunpack.c.l.b16 %v1197
  %v1277 = vunpack.c.h.b16 %v1197
  %v1278 = vunpack.c.l.b16 %v1198
  %v1279 = vpack.c.b16 %v1234, %v1231
  %v1280 = vpack.c.b16 %v1235, %v1232
  %v1281 = vpack.c.b16 %v1236, %v1233
  %v1282 = vpack.c.b16 %v1240, %v1237
  %v1283 = vpack.c.b16 %v1241, %v1238
  %v1284 = vpack.c.b16 %v1242, %v1239
  %v1285 = vpack.c.b16 %v1246, %v1243
  %v1286 = vpack.c.b16 %v1247, %v1244
  %v1287 = vpack.c.b16 %v1248, %v1245
  %v1288 = vpack.c.b16 %v1252, %v1249
  %v1289 = vpack.c.b16 %v1253, %v1250
  %v1290 = vpack.c.b16 %v1254, %v1251
  %v1291 = vpack.c.b16 %v1258, %v1255
  %v1292 = vpack.c.b16 %v1259, %v1256
  %v1293 = vpack.c.b16 %v1260, %v1257
  %v1294 = vpack.c.b16 %v1264, %v1261
  %v1295 = vpack.c.b16 %v1265, %v1262
  %v1296 = vpack.c.b16 %v1266, %v1263
  %v1297 = vpack.c.b16 %v1270, %v1267
  %v1298 = vpack.c.b16 %v1271, %v1268
  %v1299 = vpack.c.b16 %v1272, %v1269
  %v1300 = vpack.c.b16 %v1276, %v1273
  %v1301 = vpack.c.b16 %v1277, %v1274
  %v1302 = vpack.c.b16 %v1278, %v1275
  %1327 = vmatprep.subr.bf16.mxu0 %v1280
  %1328 = vmatpush1.bf16.msra.mxu0 %v1279
  %1329 = vmatprep.subr.bf16.mxu0 %v1283
  %1330 = vmatpush1.bf16.msra.mxu0 %v1282
  %1331 = vmatprep.subr.bf16.mxu0 %v1286
  %1332 = vmatpush1.bf16.msra.mxu0 %v1285
  %1333 = vmatprep.subr.bf16.mxu0 %v1289
  %1334 = vmatpush1.bf16.msra.mxu0 %v1288
  %1335 = vmatprep.subr.bf16.mxu0 %v1292
  %1336 = vmatpush1.bf16.msra.mxu0 %v1291
  %1337 = vmatprep.subr.bf16.mxu0 %v1295
  %1338 = vmatpush1.bf16.msra.mxu0 %v1294
  %1339 = vmatprep.subr.bf16.mxu0 %v1298
  %1340 = vmatpush1.bf16.msra.mxu0 %v1297
  %1341 = vmatprep.subr.bf16.mxu0 %v1301
  %1342 = vmatpush1.bf16.msra.mxu0 %v1300
  %1343 = vmatprep.subr.bf16.mxu0 0
  %1344 = vmatpush1.bf16.msra.mxu0 0
  %1345 = vmatprep.subr.bf16.mxu0 0
  %1346 = vmatpush1.bf16.msra.mxu0 0
  %1347 = vmatprep.subr.bf16.mxu0 0
  %1348 = vmatpush1.bf16.msra.mxu0 0
  %1349 = vmatprep.subr.bf16.mxu0 0
  %1350 = vmatpush1.bf16.msra.mxu0 0
  %1351 = vmatprep.subr.bf16.mxu0 0
  %1352 = vmatpush1.bf16.msra.mxu0 0
  %1353 = vmatprep.subr.bf16.mxu0 0
  %1354 = vmatpush1.bf16.msra.mxu0 0
  %1355 = vmatprep.subr.bf16.mxu0 0
  %1356 = vmatpush1.bf16.msra.mxu0 0
  %1357 = vmatprep.subr.bf16.mxu0 0
  %1358 = vmatpush1.bf16.msra.mxu0 0
  %1359 = vmatprep.mubr.bf16.mxu0 0
  %1360 = vmatmul.mubr.bf16.gmra.mrb[0].mxu0 %v1166
  %v1361 = vpop.f32.mrb[0].mxu0
  %v1362 = vadd.f32 0.0, %v1361
  %v1363 = vpop.f32.mrb[0].mxu0
  %v1364 = vadd.f32 0.0, %v1363
  %v1365 = vpop.f32.mrb[0].mxu0
  %v1366 = vpop.f32.mrb[0].mxu0
  %1367 = vdwg.mxu0
  %1368 = vmatprep.subr.bf16.mxu0 0
  %1369 = vmatpush1.bf16.msra.mxu0 %v1281
  %1370 = vmatprep.subr.bf16.mxu0 0
  %1371 = vmatpush1.bf16.msra.mxu0 %v1284
  %1372 = vmatprep.subr.bf16.mxu0 0
  %1373 = vmatpush1.bf16.msra.mxu0 %v1287
  %1374 = vmatprep.subr.bf16.mxu0 0
  %1375 = vmatpush1.bf16.msra.mxu0 %v1290
  %1376 = vmatprep.subr.bf16.mxu0 0
  %1377 = vmatpush1.bf16.msra.mxu0 %v1293
  %1378 = vmatprep.subr.bf16.mxu0 0
  %1379 = vmatpush1.bf16.msra.mxu0 %v1296
  %1380 = vmatprep.subr.bf16.mxu0 0
  %1381 = vmatpush1.bf16.msra.mxu0 %v1299
  %1382 = vmatprep.subr.bf16.mxu0 0
  %1383 = vmatpush1.bf16.msra.mxu0 %v1302
  %1384 = vmatprep.subr.bf16.mxu0 0
  %1385 = vmatpush1.bf16.msra.mxu0 0
  %1386 = vmatprep.subr.bf16.mxu0 0
  %1387 = vmatpush1.bf16.msra.mxu0 0
  %1388 = vmatprep.subr.bf16.mxu0 0
  %1389 = vmatpush1.bf16.msra.mxu0 0
  %1390 = vmatprep.subr.bf16.mxu0 0
  %1391 = vmatpush1.bf16.msra.mxu0 0
  %1392 = vmatprep.subr.bf16.mxu0 0
  %1393 = vmatpush1.bf16.msra.mxu0 0
  %1394 = vmatprep.subr.bf16.mxu0 0
  %1395 = vmatpush1.bf16.msra.mxu0 0
  %1396 = vmatprep.subr.bf16.mxu0 0
  %1397 = vmatpush1.bf16.msra.mxu0 0
  %1398 = vmatprep.subr.bf16.mxu0 0
  %1399 = vmatpush1.bf16.msra.mxu0 0
  %1400 = vmatprep.mubr.bf16.mxu0 0
  %1401 = vmatmul.mubr.bf16.gmra.mrb[0].mxu0 %v1166
  %v1402 = vpop.f32.mrb[0].mxu0
  %v1403 = vadd.f32 0.0, %v1402
  %v1404 = vpop.f32.mrb[0].mxu0
  %v1405 = vpop.f32.mrb[0].mxu0
  %v1406 = vpop.f32.mrb[0].mxu0
  %1407 = vdwg.mxu0
  %s1408 = scalar_lea.vmem %s1, 12
  %v1409 = vld [vmem:[%s1408] sm:$0x3f]
  %v1410 = vadd.f32 %v1409, %v1362
  %v1411 = vxor.u32 %v1410, 2147483648
  %v1412 = vmul.f32 %v1411, 1.442695
  %v1413 = vpow.pop %v1412
  %v1414 = vadd.f32 %v1413, 1.0
  %v1415 = vrcp.pop %v1414
  %v1416 = vmul.f32 1.0, %v1415
  %v1418 = vrot.slane %v1409, 2
  %v1420 = vadd.f32 %v1418, %v1364
  %v1421 = vxor.u32 %v1420, 2147483648
  %v1422 = vmul.f32 %v1421, 1.442695
  %v1423 = vpow.pop %v1422
  %v1424 = vadd.f32 %v1423, 1.0
  %v1425 = vrcp.pop %v1424
  %v1426 = vmul.f32 1.0, %v1425
  %v1427 = vadd.f32 %v1403, %v299
  %v1428 = vmul.f32 %v1416, %v1427
  %v1429 = vrot.slane %v1409, 4
  %v1431 = vadd.f32 %v1429, %v1428
  %v1432 = vtanh.pop %v1431
  %v1433 = vsub.f32 1.0, %v1426
  %v1434 = vmul.f32 %v1433, %v1432
  %v1435 = vmul.f32 %v1426, %v1162
  %v1436 = vadd.f32 %v1434, %v1435
  %v1437 = vpack.c.bf16 %v1163, %v1163
  %v1438 = vld [vmem:[%s4] sm:$0xff]
  %v1439 = vld [vmem:[%s4 + $0x8] sm:$0xf]
  %v1440 = vld [vmem:[%s4 + $0xc] sm:$0xff]
  %v1441 = vld [vmem:[%s4 + $0x14] sm:$0xf]
  %v1442 = vld [vmem:[%s4 + $0x18] sm:$0xff]
  %v1443 = vld [vmem:[%s4 + $0x20] sm:$0xf]
  %v1444 = vld [vmem:[%s4 + $0x24] sm:$0xff]
  %v1445 = vld [vmem:[%s4 + $0x2c] sm:$0xf]
  %v1446 = vld [vmem:[%s4 + $0x30] sm:$0xff]
  %v1447 = vld [vmem:[%s4 + $0x38] sm:$0xf]
  %v1448 = vld [vmem:[%s4 + $0x3c] sm:$0xff]
  %v1449 = vld [vmem:[%s4 + $0x44] sm:$0xf]
  %v1450 = vld [vmem:[%s4 + $0x48] sm:$0xff]
  %v1451 = vld [vmem:[%s4 + $0x50] sm:$0xf]
  %v1452 = vld [vmem:[%s4 + $0x54] sm:$0xff]
  %v1453 = vld [vmem:[%s4 + $0x5c] sm:$0xf]
  %v1454 = vld [vmem:[%s4 + $0x60] sm:$0xff]
  %v1455 = vld [vmem:[%s4 + $0x68] sm:$0xf]
  %v1456 = vld [vmem:[%s4 + $0x6c] sm:$0xff]
  %v1457 = vld [vmem:[%s4 + $0x74] sm:$0xf]
  %v1458 = vld [vmem:[%s4 + $0x78] sm:$0xff]
  %v1459 = vld [vmem:[%s4 + $0x80] sm:$0xf]
  %v1460 = vld [vmem:[%s4 + $0x84] sm:$0xff]
  %v1461 = vld [vmem:[%s4 + $0x8c] sm:$0xf]
  %v1462 = vld [vmem:[%s4 + $0x90] sm:$0xff]
  %v1463 = vld [vmem:[%s4 + $0x98] sm:$0xf]
  %v1464 = vld [vmem:[%s4 + $0x9c] sm:$0xff]
  %v1465 = vld [vmem:[%s4 + $0xa4] sm:$0xf]
  %v1466 = vld [vmem:[%s4 + $0xa8] sm:$0xff]
  %v1467 = vld [vmem:[%s4 + $0xb0] sm:$0xf]
  %v1468 = vld [vmem:[%s4 + $0xb4] sm:$0xff]
  %v1469 = vld [vmem:[%s4 + $0xbc] sm:$0xf]
  %v1502 = vunpack.c.l.b16 %v1438
  %v1503 = vunpack.c.h.b16 %v1438
  %v1504 = vunpack.c.l.b16 %v1439
  %v1505 = vunpack.c.l.b16 %v1440
  %v1506 = vunpack.c.h.b16 %v1440
  %v1507 = vunpack.c.l.b16 %v1441
  %v1508 = vunpack.c.l.b16 %v1442
  %v1509 = vunpack.c.h.b16 %v1442
  %v1510 = vunpack.c.l.b16 %v1443
  %v1511 = vunpack.c.l.b16 %v1444
  %v1512 = vunpack.c.h.b16 %v1444
  %v1513 = vunpack.c.l.b16 %v1445
  %v1514 = vunpack.c.l.b16 %v1446
  %v1515 = vunpack.c.h.b16 %v1446
  %v1516 = vunpack.c.l.b16 %v1447
  %v1517 = vunpack.c.l.b16 %v1448
  %v1518 = vunpack.c.h.b16 %v1448
  %v1519 = vunpack.c.l.b16 %v1449
  %v1520 = vunpack.c.l.b16 %v1450
  %v1521 = vunpack.c.h.b16 %v1450
  %v1522 = vunpack.c.l.b16 %v1451
  %v1523 = vunpack.c.l.b16 %v1452
  %v1524 = vunpack.c.h.b16 %v1452
  %v1525 = vunpack.c.l.b16 %v1453
  %v1526 = vunpack.c.l.b16 %v1454
  %v1527 = vunpack.c.h.b16 %v1454
  %v1528 = vunpack.c.l.b16 %v1455
  %v1529 = vunpack.c.l.b16 %v1456
  %v1530 = vunpack.c.h.b16 %v1456
  %v1531 = vunpack.c.l.b16 %v1457
  %v1532 = vunpack.c.l.b16 %v1458
  %v1533 = vunpack.c.h.b16 %v1458
  %v1534 = vunpack.c.l.b16 %v1459
  %v1535 = vunpack.c.l.b16 %v1460
  %v1536 = vunpack.c.h.b16 %v1460
  %v1537 = vunpack.c.l.b16 %v1461
  %v1538 = vunpack.c.l.b16 %v1462
  %v1539 = vunpack.c.h.b16 %v1462
  %v1540 = vunpack.c.l.b16 %v1463
  %v1541 = vunpack.c.l.b16 %v1464
  %v1542 = vunpack.c.h.b16 %v1464
  %v1543 = vunpack.c.l.b16 %v1465
  %v1544 = vunpack.c.l.b16 %v1466
  %v1545 = vunpack.c.h.b16 %v1466
  %v1546 = vunpack.c.l.b16 %v1467
  %v1547 = vunpack.c.l.b16 %v1468
  %v1548 = vunpack.c.h.b16 %v1468
  %v1549 = vunpack.c.l.b16 %v1469
  %v1550 = vpack.c.b16 %v1505, %v1502
  %v1551 = vpack.c.b16 %v1506, %v1503
  %v1552 = vpack.c.b16 %v1507, %v1504
  %v1553 = vpack.c.b16 %v1511, %v1508
  %v1554 = vpack.c.b16 %v1512, %v1509
  %v1555 = vpack.c.b16 %v1513, %v1510
  %v1556 = vpack.c.b16 %v1517, %v1514
  %v1557 = vpack.c.b16 %v1518, %v1515
  %v1558 = vpack.c.b16 %v1519, %v1516
  %v1559 = vpack.c.b16 %v1523, %v1520
  %v1560 = vpack.c.b16 %v1524, %v1521
  %v1561 = vpack.c.b16 %v1525, %v1522
  %v1562 = vpack.c.b16 %v1529, %v1526
  %v1563 = vpack.c.b16 %v1530, %v1527
  %v1564 = vpack.c.b16 %v1531, %v1528
  %v1565 = vpack.c.b16 %v1535, %v1532
  %v1566 = vpack.c.b16 %v1536, %v1533
  %v1567 = vpack.c.b16 %v1537, %v1534
  %v1568 = vpack.c.b16 %v1541, %v1538
  %v1569 = vpack.c.b16 %v1542, %v1539
  %v1570 = vpack.c.b16 %v1543, %v1540
  %v1571 = vpack.c.b16 %v1547, %v1544
  %v1572 = vpack.c.b16 %v1548, %v1545
  %v1573 = vpack.c.b16 %v1549, %v1546
  %1598 = vmatprep.subr.bf16.mxu0 %v1551
  %1599 = vmatpush1.bf16.msra.mxu0 %v1550
  %1600 = vmatprep.subr.bf16.mxu0 %v1554
  %1601 = vmatpush1.bf16.msra.mxu0 %v1553
  %1602 = vmatprep.subr.bf16.mxu0 %v1557
  %1603 = vmatpush1.bf16.msra.mxu0 %v1556
  %1604 = vmatprep.subr.bf16.mxu0 %v1560
  %1605 = vmatpush1.bf16.msra.mxu0 %v1559
  %1606 = vmatprep.subr.bf16.mxu0 %v1563
  %1607 = vmatpush1.bf16.msra.mxu0 %v1562
  %1608 = vmatprep.subr.bf16.mxu0 %v1566
  %1609 = vmatpush1.bf16.msra.mxu0 %v1565
  %1610 = vmatprep.subr.bf16.mxu0 %v1569
  %1611 = vmatpush1.bf16.msra.mxu0 %v1568
  %1612 = vmatprep.subr.bf16.mxu0 %v1572
  %1613 = vmatpush1.bf16.msra.mxu0 %v1571
  %1614 = vmatprep.subr.bf16.mxu0 0
  %1615 = vmatpush1.bf16.msra.mxu0 0
  %1616 = vmatprep.subr.bf16.mxu0 0
  %1617 = vmatpush1.bf16.msra.mxu0 0
  %1618 = vmatprep.subr.bf16.mxu0 0
  %1619 = vmatpush1.bf16.msra.mxu0 0
  %1620 = vmatprep.subr.bf16.mxu0 0
  %1621 = vmatpush1.bf16.msra.mxu0 0
  %1622 = vmatprep.subr.bf16.mxu0 0
  %1623 = vmatpush1.bf16.msra.mxu0 0
  %1624 = vmatprep.subr.bf16.mxu0 0
  %1625 = vmatpush1.bf16.msra.mxu0 0
  %1626 = vmatprep.subr.bf16.mxu0 0
  %1627 = vmatpush1.bf16.msra.mxu0 0
  %1628 = vmatprep.subr.bf16.mxu0 0
  %1629 = vmatpush1.bf16.msra.mxu0 0
  %1630 = vmatprep.mubr.bf16.mxu0 0
  %1631 = vmatmul.mubr.bf16.gmra.mrb[0].mxu0 %v1437
  %v1632 = vpop.f32.mrb[0].mxu0
  %v1633 = vadd.f32 0.0, %v1632
  %v1634 = vpop.f32.mrb[0].mxu0
  %v1635 = vadd.f32 0.0, %v1634
  %v1636 = vpop.f32.mrb[0].mxu0
  %v1637 = vpop.f32.mrb[0].mxu0
  %1638 = vdwg.mxu0
  %1639 = vmatprep.subr.bf16.mxu0 0
  %1640 = vmatpush1.bf16.msra.mxu0 %v1552
  %1641 = vmatprep.subr.bf16.mxu0 0
  %1642 = vmatpush1.bf16.msra.mxu0 %v1555
  %1643 = vmatprep.subr.bf16.mxu0 0
  %1644 = vmatpush1.bf16.msra.mxu0 %v1558
  %1645 = vmatprep.subr.bf16.mxu0 0
  %1646 = vmatpush1.bf16.msra.mxu0 %v1561
  %1647 = vmatprep.subr.bf16.mxu0 0
  %1648 = vmatpush1.bf16.msra.mxu0 %v1564
  %1649 = vmatprep.subr.bf16.mxu0 0
  %1650 = vmatpush1.bf16.msra.mxu0 %v1567
  %1651 = vmatprep.subr.bf16.mxu0 0
  %1652 = vmatpush1.bf16.msra.mxu0 %v1570
  %1653 = vmatprep.subr.bf16.mxu0 0
  %1654 = vmatpush1.bf16.msra.mxu0 %v1573
  %1655 = vmatprep.subr.bf16.mxu0 0
  %1656 = vmatpush1.bf16.msra.mxu0 0
  %1657 = vmatprep.subr.bf16.mxu0 0
  %1658 = vmatpush1.bf16.msra.mxu0 0
  %1659 = vmatprep.subr.bf16.mxu0 0
  %1660 = vmatpush1.bf16.msra.mxu0 0
  %1661 = vmatprep.subr.bf16.mxu0 0
  %1662 = vmatpush1.bf16.msra.mxu0 0
  %1663 = vmatprep.subr.bf16.mxu0 0
  %1664 = vmatpush1.bf16.msra.mxu0 0
  %1665 = vmatprep.subr.bf16.mxu0 0
  %1666 = vmatpush1.bf16.msra.mxu0 0
  %1667 = vmatprep.subr.bf16.mxu0 0
  %1668 = vmatpush1.bf16.msra.mxu0 0
  %1669 = vmatprep.subr.bf16.mxu0 0
  %1670 = vmatpush1.bf16.msra.mxu0 0
  %1671 = vmatprep.mubr.bf16.mxu0 0
  %1672 = vmatmul.mubr.bf16.gmra.mrb[0].mxu0 %v1437
  %v1673 = vpop.f32.mrb[0].mxu0
  %v1674 = vadd.f32 0.0, %v1673
  %v1675 = vpop.f32.mrb[0].mxu0
  %v1676 = vpop.f32.mrb[0].mxu0
  %v1677 = vpop.f32.mrb[0].mxu0
  %1678 = vdwg.mxu0
  %s1679 = scalar_lea.vmem %s2, 30
  %v1680 = vld [vmem:[%s1679] sm:$0x3f]
  %v1681 = vadd.f32 %v1680, %v1633
  %v1682 = vxor.u32 %v1681, 2147483648
  %v1683 = vmul.f32 %v1682, 1.442695
  %v1684 = vpow.pop %v1683
  %v1685 = vadd.f32 %v1684, 1.0
  %v1686 = vrcp.pop %v1685
  %v1687 = vmul.f32 1.0, %v1686
  %v1689 = vrot.slane %v1680, 2
  %v1691 = vadd.f32 %v1689, %v1635
  %v1692 = vxor.u32 %v1691, 2147483648
  %v1693 = vmul.f32 %v1692, 1.442695
  %v1694 = vpow.pop %v1693
  %v1695 = vadd.f32 %v1694, 1.0
  %v1696 = vrcp.pop %v1695
  %v1697 = vmul.f32 1.0, %v1696
  %v1698 = vadd.f32 %v1674, %v575
  %v1699 = vmul.f32 %v1687, %v1698
  %v1700 = vrot.slane %v1680, 4
  %v1702 = vadd.f32 %v1700, %v1699
  %v1703 = vtanh.pop %v1702
  %v1704 = vsub.f32 1.0, %v1697
  %v1705 = vmul.f32 %v1704, %v1703
  %v1706 = vmul.f32 %v1697, %v1163
  %v1707 = vadd.f32 %v1705, %v1706
  %v1708 = vsel %vm1164, 1, 0
  %1709 = vset.pattern.permute.xlu0 0
  %1710 = vperm.xlu0 %1709, %v1708
  %v1711 = vpop.permute.xlu0 %1710
  %vm1712 = vcmp.eq.s32.totalorder %v1711, 1
  %v1713 = vsel %vm1712, %v1436, 0.0
  %s1714 = scalar_lea.vmem %s7, 4
  %1715 = vst [vmem:[%s1714] sm:$0x3] %v1713
  %v1716 = vsel %vm1165, 1, 0
  %1717 = vset.pattern.permute.xlu0 0
  %1718 = vperm.xlu0 %1717, %v1716
  %v1719 = vpop.permute.xlu0 %1718
  %vm1720 = vcmp.eq.s32.totalorder %v1719, 1
  %v1721 = vsel %vm1720, %v1707, 0.0
  %s1722 = scalar_lea.vmem %s8, 10
  %1723 = vst [vmem:[%s1722] sm:$0x3] %v1721
  %v1724 = vsel %vm1712, %v1436, %v1162
  %v1725 = vsel %vm1720, %v1707, %v1163
  %vm1726 = vcmp.gt.s32.totalorder %v31, 3
  %vm1727 = vcmp.gt.s32.totalorder %v31, 4
  %v1728 = vpack.c.bf16 %v1724, %v1724
  %v1729 = vld [vmem:[%s3] sm:$0xff]
  %v1730 = vld [vmem:[%s3 + $0x8] sm:$0xf]
  %v1731 = vld [vmem:[%s3 + $0xc] sm:$0xff]
  %v1732 = vld [vmem:[%s3 + $0x14] sm:$0xf]
  %v1733 = vld [vmem:[%s3 + $0x18] sm:$0xff]
  %v1734 = vld [vmem:[%s3 + $0x20] sm:$0xf]
  %v1735 = vld [vmem:[%s3 + $0x24] sm:$0xff]
  %v1736 = vld [vmem:[%s3 + $0x2c] sm:$0xf]
  %v1737 = vld [vmem:[%s3 + $0x30] sm:$0xff]
  %v1738 = vld [vmem:[%s3 + $0x38] sm:$0xf]
  %v1739 = vld [vmem:[%s3 + $0x3c] sm:$0xff]
  %v1740 = vld [vmem:[%s3 + $0x44] sm:$0xf]
  %v1741 = vld [vmem:[%s3 + $0x48] sm:$0xff]
  %v1742 = vld [vmem:[%s3 + $0x50] sm:$0xf]
  %v1743 = vld [vmem:[%s3 + $0x54] sm:$0xff]
  %v1744 = vld [vmem:[%s3 + $0x5c] sm:$0xf]
  %v1745 = vld [vmem:[%s3 + $0x60] sm:$0xff]
  %v1746 = vld [vmem:[%s3 + $0x68] sm:$0xf]
  %v1747 = vld [vmem:[%s3 + $0x6c] sm:$0xff]
  %v1748 = vld [vmem:[%s3 + $0x74] sm:$0xf]
  %v1749 = vld [vmem:[%s3 + $0x78] sm:$0xff]
  %v1750 = vld [vmem:[%s3 + $0x80] sm:$0xf]
  %v1751 = vld [vmem:[%s3 + $0x84] sm:$0xff]
  %v1752 = vld [vmem:[%s3 + $0x8c] sm:$0xf]
  %v1753 = vld [vmem:[%s3 + $0x90] sm:$0xff]
  %v1754 = vld [vmem:[%s3 + $0x98] sm:$0xf]
  %v1755 = vld [vmem:[%s3 + $0x9c] sm:$0xff]
  %v1756 = vld [vmem:[%s3 + $0xa4] sm:$0xf]
  %v1757 = vld [vmem:[%s3 + $0xa8] sm:$0xff]
  %v1758 = vld [vmem:[%s3 + $0xb0] sm:$0xf]
  %v1759 = vld [vmem:[%s3 + $0xb4] sm:$0xff]
  %v1760 = vld [vmem:[%s3 + $0xbc] sm:$0xf]
  %v1793 = vunpack.c.l.b16 %v1729
  %v1794 = vunpack.c.h.b16 %v1729
  %v1795 = vunpack.c.l.b16 %v1730
  %v1796 = vunpack.c.l.b16 %v1731
  %v1797 = vunpack.c.h.b16 %v1731
  %v1798 = vunpack.c.l.b16 %v1732
  %v1799 = vunpack.c.l.b16 %v1733
  %v1800 = vunpack.c.h.b16 %v1733
  %v1801 = vunpack.c.l.b16 %v1734
  %v1802 = vunpack.c.l.b16 %v1735
  %v1803 = vunpack.c.h.b16 %v1735
  %v1804 = vunpack.c.l.b16 %v1736
  %v1805 = vunpack.c.l.b16 %v1737
  %v1806 = vunpack.c.h.b16 %v1737
  %v1807 = vunpack.c.l.b16 %v1738
  %v1808 = vunpack.c.l.b16 %v1739
  %v1809 = vunpack.c.h.b16 %v1739
  %v1810 = vunpack.c.l.b16 %v1740
  %v1811 = vunpack.c.l.b16 %v1741
  %v1812 = vunpack.c.h.b16 %v1741
  %v1813 = vunpack.c.l.b16 %v1742
  %v1814 = vunpack.c.l.b16 %v1743
  %v1815 = vunpack.c.h.b16 %v1743
  %v1816 = vunpack.c.l.b16 %v1744
  %v1817 = vunpack.c.l.b16 %v1745
  %v1818 = vunpack.c.h.b16 %v1745
  %v1819 = vunpack.c.l.b16 %v1746
  %v1820 = vunpack.c.l.b16 %v1747
  %v1821 = vunpack.c.h.b16 %v1747
  %v1822 = vunpack.c.l.b16 %v1748
  %v1823 = vunpack.c.l.b16 %v1749
  %v1824 = vunpack.c.h.b16 %v1749
  %v1825 = vunpack.c.l.b16 %v1750
  %v1826 = vunpack.c.l.b16 %v1751
  %v1827 = vunpack.c.h.b16 %v1751
  %v1828 = vunpack.c.l.b16 %v1752
  %v1829 = vunpack.c.l.b16 %v1753
  %v1830 = vunpack.c.h.b16 %v1753
  %v1831 = vunpack.c.l.b16 %v1754
  %v1832 = vunpack.c.l.b16 %v1755
  %v1833 = vunpack.c.h.b16 %v1755
  %v1834 = vunpack.c.l.b16 %v1756
  %v1835 = vunpack.c.l.b16 %v1757
  %v1836 = vunpack.c.h.b16 %v1757
  %v1837 = vunpack.c.l.b16 %v1758
  %v1838 = vunpack.c.l.b16 %v1759
  %v1839 = vunpack.c.h.b16 %v1759
  %v1840 = vunpack.c.l.b16 %v1760
  %v1841 = vpack.c.b16 %v1796, %v1793
  %v1842 = vpack.c.b16 %v1797, %v1794
  %v1843 = vpack.c.b16 %v1798, %v1795
  %v1844 = vpack.c.b16 %v1802, %v1799
  %v1845 = vpack.c.b16 %v1803, %v1800
  %v1846 = vpack.c.b16 %v1804, %v1801
  %v1847 = vpack.c.b16 %v1808, %v1805
  %v1848 = vpack.c.b16 %v1809, %v1806
  %v1849 = vpack.c.b16 %v1810, %v1807
  %v1850 = vpack.c.b16 %v1814, %v1811
  %v1851 = vpack.c.b16 %v1815, %v1812
  %v1852 = vpack.c.b16 %v1816, %v1813
  %v1853 = vpack.c.b16 %v1820, %v1817
  %v1854 = vpack.c.b16 %v1821, %v1818
  %v1855 = vpack.c.b16 %v1822, %v1819
  %v1856 = vpack.c.b16 %v1826, %v1823
  %v1857 = vpack.c.b16 %v1827, %v1824
  %v1858 = vpack.c.b16 %v1828, %v1825
  %v1859 = vpack.c.b16 %v1832, %v1829
  %v1860 = vpack.c.b16 %v1833, %v1830
  %v1861 = vpack.c.b16 %v1834, %v1831
  %v1862 = vpack.c.b16 %v1838, %v1835
  %v1863 = vpack.c.b16 %v1839, %v1836
  %v1864 = vpack.c.b16 %v1840, %v1837
  %1889 = vmatprep.subr.bf16.mxu0 %v1842
  %1890 = vmatpush1.bf16.msra.mxu0 %v1841
  %1891 = vmatprep.subr.bf16.mxu0 %v1845
  %1892 = vmatpush1.bf16.msra.mxu0 %v1844
  %1893 = vmatprep.subr.bf16.mxu0 %v1848
  %1894 = vmatpush1.bf16.msra.mxu0 %v1847
  %1895 = vmatprep.subr.bf16.mxu0 %v1851
  %1896 = vmatpush1.bf16.msra.mxu0 %v1850
  %1897 = vmatprep.subr.bf16.mxu0 %v1854
  %1898 = vmatpush1.bf16.msra.mxu0 %v1853
  %1899 = vmatprep.subr.bf16.mxu0 %v1857
  %1900 = vmatpush1.bf16.msra.mxu0 %v1856
  %1901 = vmatprep.subr.bf16.mxu0 %v1860
  %1902 = vmatpush1.bf16.msra.mxu0 %v1859
  %1903 = vmatprep.subr.bf16.mxu0 %v1863
  %1904 = vmatpush1.bf16.msra.mxu0 %v1862
  %1905 = vmatprep.subr.bf16.mxu0 0
  %1906 = vmatpush1.bf16.msra.mxu0 0
  %1907 = vmatprep.subr.bf16.mxu0 0
  %1908 = vmatpush1.bf16.msra.mxu0 0
  %1909 = vmatprep.subr.bf16.mxu0 0
  %1910 = vmatpush1.bf16.msra.mxu0 0
  %1911 = vmatprep.subr.bf16.mxu0 0
  %1912 = vmatpush1.bf16.msra.mxu0 0
  %1913 = vmatprep.subr.bf16.mxu0 0
  %1914 = vmatpush1.bf16.msra.mxu0 0
  %1915 = vmatprep.subr.bf16.mxu0 0
  %1916 = vmatpush1.bf16.msra.mxu0 0
  %1917 = vmatprep.subr.bf16.mxu0 0
  %1918 = vmatpush1.bf16.msra.mxu0 0
  %1919 = vmatprep.subr.bf16.mxu0 0
  %1920 = vmatpush1.bf16.msra.mxu0 0
  %1921 = vmatprep.mubr.bf16.mxu0 0
  %1922 = vmatmul.mubr.bf16.gmra.mrb[0].mxu0 %v1728
  %v1923 = vpop.f32.mrb[0].mxu0
  %v1924 = vadd.f32 0.0, %v1923
  %v1925 = vpop.f32.mrb[0].mxu0
  %v1926 = vadd.f32 0.0, %v1925
  %v1927 = vpop.f32.mrb[0].mxu0
  %v1928 = vpop.f32.mrb[0].mxu0
  %1929 = vdwg.mxu0
  %1930 = vmatprep.subr.bf16.mxu0 0
  %1931 = vmatpush1.bf16.msra.mxu0 %v1843
  %1932 = vmatprep.subr.bf16.mxu0 0
  %1933 = vmatpush1.bf16.msra.mxu0 %v1846
  %1934 = vmatprep.subr.bf16.mxu0 0
  %1935 = vmatpush1.bf16.msra.mxu0 %v1849
  %1936 = vmatprep.subr.bf16.mxu0 0
  %1937 = vmatpush1.bf16.msra.mxu0 %v1852
  %1938 = vmatprep.subr.bf16.mxu0 0
  %1939 = vmatpush1.bf16.msra.mxu0 %v1855
  %1940 = vmatprep.subr.bf16.mxu0 0
  %1941 = vmatpush1.bf16.msra.mxu0 %v1858
  %1942 = vmatprep.subr.bf16.mxu0 0
  %1943 = vmatpush1.bf16.msra.mxu0 %v1861
  %1944 = vmatprep.subr.bf16.mxu0 0
  %1945 = vmatpush1.bf16.msra.mxu0 %v1864
  %1946 = vmatprep.subr.bf16.mxu0 0
  %1947 = vmatpush1.bf16.msra.mxu0 0
  %1948 = vmatprep.subr.bf16.mxu0 0
  %1949 = vmatpush1.bf16.msra.mxu0 0
  %1950 = vmatprep.subr.bf16.mxu0 0
  %1951 = vmatpush1.bf16.msra.mxu0 0
  %1952 = vmatprep.subr.bf16.mxu0 0
  %1953 = vmatpush1.bf16.msra.mxu0 0
  %1954 = vmatprep.subr.bf16.mxu0 0
  %1955 = vmatpush1.bf16.msra.mxu0 0
  %1956 = vmatprep.subr.bf16.mxu0 0
  %1957 = vmatpush1.bf16.msra.mxu0 0
  %1958 = vmatprep.subr.bf16.mxu0 0
  %1959 = vmatpush1.bf16.msra.mxu0 0
  %1960 = vmatprep.subr.bf16.mxu0 0
  %1961 = vmatpush1.bf16.msra.mxu0 0
  %1962 = vmatprep.mubr.bf16.mxu0 0
  %1963 = vmatmul.mubr.bf16.gmra.mrb[0].mxu0 %v1728
  %v1964 = vpop.f32.mrb[0].mxu0
  %v1965 = vadd.f32 0.0, %v1964
  %v1966 = vpop.f32.mrb[0].mxu0
  %v1967 = vpop.f32.mrb[0].mxu0
  %v1968 = vpop.f32.mrb[0].mxu0
  %1969 = vdwg.mxu0
  %s1970 = scalar_lea.vmem %s1, 18
  %v1971 = vld [vmem:[%s1970] sm:$0x3f]
  %v1972 = vadd.f32 %v1971, %v1924
  %v1973 = vxor.u32 %v1972, 2147483648
  %v1974 = vmul.f32 %v1973, 1.442695
  %v1975 = vpow.pop %v1974
  %v1976 = vadd.f32 %v1975, 1.0
  %v1977 = vrcp.pop %v1976
  %v1978 = vmul.f32 1.0, %v1977
  %v1980 = vrot.slane %v1971, 2
  %v1982 = vadd.f32 %v1980, %v1926
  %v1983 = vxor.u32 %v1982, 2147483648
  %v1984 = vmul.f32 %v1983, 1.442695
  %v1985 = vpow.pop %v1984
  %v1986 = vadd.f32 %v1985, 1.0
  %v1987 = vrcp.pop %v1986
  %v1988 = vmul.f32 1.0, %v1987
  %v1989 = vadd.f32 %v1965, %v299
  %v1990 = vmul.f32 %v1978, %v1989
  %v1991 = vrot.slane %v1971, 4
  %v1993 = vadd.f32 %v1991, %v1990
  %v1994 = vtanh.pop %v1993
  %v1995 = vsub.f32 1.0, %v1988
  %v1996 = vmul.f32 %v1995, %v1994
  %v1997 = vmul.f32 %v1988, %v1724
  %v1998 = vadd.f32 %v1996, %v1997
  %v1999 = vpack.c.bf16 %v1725, %v1725
  %v2000 = vld [vmem:[%s4] sm:$0xff]
  %v2001 = vld [vmem:[%s4 + $0x8] sm:$0xf]
  %v2002 = vld [vmem:[%s4 + $0xc] sm:$0xff]
  %v2003 = vld [vmem:[%s4 + $0x14] sm:$0xf]
  %v2004 = vld [vmem:[%s4 + $0x18] sm:$0xff]
  %v2005 = vld [vmem:[%s4 + $0x20] sm:$0xf]
  %v2006 = vld [vmem:[%s4 + $0x24] sm:$0xff]
  %v2007 = vld [vmem:[%s4 + $0x2c] sm:$0xf]
  %v2008 = vld [vmem:[%s4 + $0x30] sm:$0xff]
  %v2009 = vld [vmem:[%s4 + $0x38] sm:$0xf]
  %v2010 = vld [vmem:[%s4 + $0x3c] sm:$0xff]
  %v2011 = vld [vmem:[%s4 + $0x44] sm:$0xf]
  %v2012 = vld [vmem:[%s4 + $0x48] sm:$0xff]
  %v2013 = vld [vmem:[%s4 + $0x50] sm:$0xf]
  %v2014 = vld [vmem:[%s4 + $0x54] sm:$0xff]
  %v2015 = vld [vmem:[%s4 + $0x5c] sm:$0xf]
  %v2016 = vld [vmem:[%s4 + $0x60] sm:$0xff]
  %v2017 = vld [vmem:[%s4 + $0x68] sm:$0xf]
  %v2018 = vld [vmem:[%s4 + $0x6c] sm:$0xff]
  %v2019 = vld [vmem:[%s4 + $0x74] sm:$0xf]
  %v2020 = vld [vmem:[%s4 + $0x78] sm:$0xff]
  %v2021 = vld [vmem:[%s4 + $0x80] sm:$0xf]
  %v2022 = vld [vmem:[%s4 + $0x84] sm:$0xff]
  %v2023 = vld [vmem:[%s4 + $0x8c] sm:$0xf]
  %v2024 = vld [vmem:[%s4 + $0x90] sm:$0xff]
  %v2025 = vld [vmem:[%s4 + $0x98] sm:$0xf]
  %v2026 = vld [vmem:[%s4 + $0x9c] sm:$0xff]
  %v2027 = vld [vmem:[%s4 + $0xa4] sm:$0xf]
  %v2028 = vld [vmem:[%s4 + $0xa8] sm:$0xff]
  %v2029 = vld [vmem:[%s4 + $0xb0] sm:$0xf]
  %v2030 = vld [vmem:[%s4 + $0xb4] sm:$0xff]
  %v2031 = vld [vmem:[%s4 + $0xbc] sm:$0xf]
  %v2064 = vunpack.c.l.b16 %v2000
  %v2065 = vunpack.c.h.b16 %v2000
  %v2066 = vunpack.c.l.b16 %v2001
  %v2067 = vunpack.c.l.b16 %v2002
  %v2068 = vunpack.c.h.b16 %v2002
  %v2069 = vunpack.c.l.b16 %v2003
  %v2070 = vunpack.c.l.b16 %v2004
  %v2071 = vunpack.c.h.b16 %v2004
  %v2072 = vunpack.c.l.b16 %v2005
  %v2073 = vunpack.c.l.b16 %v2006
  %v2074 = vunpack.c.h.b16 %v2006
  %v2075 = vunpack.c.l.b16 %v2007
  %v2076 = vunpack.c.l.b16 %v2008
  %v2077 = vunpack.c.h.b16 %v2008
  %v2078 = vunpack.c.l.b16 %v2009
  %v2079 = vunpack.c.l.b16 %v2010
  %v2080 = vunpack.c.h.b16 %v2010
  %v2081 = vunpack.c.l.b16 %v2011
  %v2082 = vunpack.c.l.b16 %v2012
  %v2083 = vunpack.c.h.b16 %v2012
  %v2084 = vunpack.c.l.b16 %v2013
  %v2085 = vunpack.c.l.b16 %v2014
  %v2086 = vunpack.c.h.b16 %v2014
  %v2087 = vunpack.c.l.b16 %v2015
  %v2088 = vunpack.c.l.b16 %v2016
  %v2089 = vunpack.c.h.b16 %v2016
  %v2090 = vunpack.c.l.b16 %v2017
  %v2091 = vunpack.c.l.b16 %v2018
  %v2092 = vunpack.c.h.b16 %v2018
  %v2093 = vunpack.c.l.b16 %v2019
  %v2094 = vunpack.c.l.b16 %v2020
  %v2095 = vunpack.c.h.b16 %v2020
  %v2096 = vunpack.c.l.b16 %v2021
  %v2097 = vunpack.c.l.b16 %v2022
  %v2098 = vunpack.c.h.b16 %v2022
  %v2099 = vunpack.c.l.b16 %v2023
  %v2100 = vunpack.c.l.b16 %v2024
  %v2101 = vunpack.c.h.b16 %v2024
  %v2102 = vunpack.c.l.b16 %v2025
  %v2103 = vunpack.c.l.b16 %v2026
  %v2104 = vunpack.c.h.b16 %v2026
  %v2105 = vunpack.c.l.b16 %v2027
  %v2106 = vunpack.c.l.b16 %v2028
  %v2107 = vunpack.c.h.b16 %v2028
  %v2108 = vunpack.c.l.b16 %v2029
  %v2109 = vunpack.c.l.b16 %v2030
  %v2110 = vunpack.c.h.b16 %v2030
  %v2111 = vunpack.c.l.b16 %v2031
  %v2112 = vpack.c.b16 %v2067, %v2064
  %v2113 = vpack.c.b16 %v2068, %v2065
  %v2114 = vpack.c.b16 %v2069, %v2066
  %v2115 = vpack.c.b16 %v2073, %v2070
  %v2116 = vpack.c.b16 %v2074, %v2071
  %v2117 = vpack.c.b16 %v2075, %v2072
  %v2118 = vpack.c.b16 %v2079, %v2076
  %v2119 = vpack.c.b16 %v2080, %v2077
  %v2120 = vpack.c.b16 %v2081, %v2078
  %v2121 = vpack.c.b16 %v2085, %v2082
  %v2122 = vpack.c.b16 %v2086, %v2083
  %v2123 = vpack.c.b16 %v2087, %v2084
  %v2124 = vpack.c.b16 %v2091, %v2088
  %v2125 = vpack.c.b16 %v2092, %v2089
  %v2126 = vpack.c.b16 %v2093, %v2090
  %v2127 = vpack.c.b16 %v2097, %v2094
  %v2128 = vpack.c.b16 %v2098, %v2095
  %v2129 = vpack.c.b16 %v2099, %v2096
  %v2130 = vpack.c.b16 %v2103, %v2100
  %v2131 = vpack.c.b16 %v2104, %v2101
  %v2132 = vpack.c.b16 %v2105, %v2102
  %v2133 = vpack.c.b16 %v2109, %v2106
  %v2134 = vpack.c.b16 %v2110, %v2107
  %v2135 = vpack.c.b16 %v2111, %v2108
  %2160 = vmatprep.subr.bf16.mxu0 %v2113
  %2161 = vmatpush1.bf16.msra.mxu0 %v2112
  %2162 = vmatprep.subr.bf16.mxu0 %v2116
  %2163 = vmatpush1.bf16.msra.mxu0 %v2115
  %2164 = vmatprep.subr.bf16.mxu0 %v2119
  %2165 = vmatpush1.bf16.msra.mxu0 %v2118
  %2166 = vmatprep.subr.bf16.mxu0 %v2122
  %2167 = vmatpush1.bf16.msra.mxu0 %v2121
  %2168 = vmatprep.subr.bf16.mxu0 %v2125
  %2169 = vmatpush1.bf16.msra.mxu0 %v2124
  %2170 = vmatprep.subr.bf16.mxu0 %v2128
  %2171 = vmatpush1.bf16.msra.mxu0 %v2127
  %2172 = vmatprep.subr.bf16.mxu0 %v2131
  %2173 = vmatpush1.bf16.msra.mxu0 %v2130
  %2174 = vmatprep.subr.bf16.mxu0 %v2134
  %2175 = vmatpush1.bf16.msra.mxu0 %v2133
  %2176 = vmatprep.subr.bf16.mxu0 0
  %2177 = vmatpush1.bf16.msra.mxu0 0
  %2178 = vmatprep.subr.bf16.mxu0 0
  %2179 = vmatpush1.bf16.msra.mxu0 0
  %2180 = vmatprep.subr.bf16.mxu0 0
  %2181 = vmatpush1.bf16.msra.mxu0 0
  %2182 = vmatprep.subr.bf16.mxu0 0
  %2183 = vmatpush1.bf16.msra.mxu0 0
  %2184 = vmatprep.subr.bf16.mxu0 0
  %2185 = vmatpush1.bf16.msra.mxu0 0
  %2186 = vmatprep.subr.bf16.mxu0 0
  %2187 = vmatpush1.bf16.msra.mxu0 0
  %2188 = vmatprep.subr.bf16.mxu0 0
  %2189 = vmatpush1.bf16.msra.mxu0 0
  %2190 = vmatprep.subr.bf16.mxu0 0
  %2191 = vmatpush1.bf16.msra.mxu0 0
  %2192 = vmatprep.mubr.bf16.mxu0 0
  %2193 = vmatmul.mubr.bf16.gmra.mrb[0].mxu0 %v1999
  %v2194 = vpop.f32.mrb[0].mxu0
  %v2195 = vadd.f32 0.0, %v2194
  %v2196 = vpop.f32.mrb[0].mxu0
  %v2197 = vadd.f32 0.0, %v2196
  %v2198 = vpop.f32.mrb[0].mxu0
  %v2199 = vpop.f32.mrb[0].mxu0
  %2200 = vdwg.mxu0
  %2201 = vmatprep.subr.bf16.mxu0 0
  %2202 = vmatpush1.bf16.msra.mxu0 %v2114
  %2203 = vmatprep.subr.bf16.mxu0 0
  %2204 = vmatpush1.bf16.msra.mxu0 %v2117
  %2205 = vmatprep.subr.bf16.mxu0 0
  %2206 = vmatpush1.bf16.msra.mxu0 %v2120
  %2207 = vmatprep.subr.bf16.mxu0 0
  %2208 = vmatpush1.bf16.msra.mxu0 %v2123
  %2209 = vmatprep.subr.bf16.mxu0 0
  %2210 = vmatpush1.bf16.msra.mxu0 %v2126
  %2211 = vmatprep.subr.bf16.mxu0 0
  %2212 = vmatpush1.bf16.msra.mxu0 %v2129
  %2213 = vmatprep.subr.bf16.mxu0 0
  %2214 = vmatpush1.bf16.msra.mxu0 %v2132
  %2215 = vmatprep.subr.bf16.mxu0 0
  %2216 = vmatpush1.bf16.msra.mxu0 %v2135
  %2217 = vmatprep.subr.bf16.mxu0 0
  %2218 = vmatpush1.bf16.msra.mxu0 0
  %2219 = vmatprep.subr.bf16.mxu0 0
  %2220 = vmatpush1.bf16.msra.mxu0 0
  %2221 = vmatprep.subr.bf16.mxu0 0
  %2222 = vmatpush1.bf16.msra.mxu0 0
  %2223 = vmatprep.subr.bf16.mxu0 0
  %2224 = vmatpush1.bf16.msra.mxu0 0
  %2225 = vmatprep.subr.bf16.mxu0 0
  %2226 = vmatpush1.bf16.msra.mxu0 0
  %2227 = vmatprep.subr.bf16.mxu0 0
  %2228 = vmatpush1.bf16.msra.mxu0 0
  %2229 = vmatprep.subr.bf16.mxu0 0
  %2230 = vmatpush1.bf16.msra.mxu0 0
  %2231 = vmatprep.subr.bf16.mxu0 0
  %2232 = vmatpush1.bf16.msra.mxu0 0
  %2233 = vmatprep.mubr.bf16.mxu0 0
  %2234 = vmatmul.mubr.bf16.gmra.mrb[0].mxu0 %v1999
  %v2235 = vpop.f32.mrb[0].mxu0
  %v2236 = vadd.f32 0.0, %v2235
  %v2237 = vpop.f32.mrb[0].mxu0
  %v2238 = vpop.f32.mrb[0].mxu0
  %v2239 = vpop.f32.mrb[0].mxu0
  %2240 = vdwg.mxu0
  %s2241 = scalar_lea.vmem %s2, 24
  %v2242 = vld [vmem:[%s2241] sm:$0x3f]
  %v2243 = vadd.f32 %v2242, %v2195
  %v2244 = vxor.u32 %v2243, 2147483648
  %v2245 = vmul.f32 %v2244, 1.442695
  %v2246 = vpow.pop %v2245
  %v2247 = vadd.f32 %v2246, 1.0
  %v2248 = vrcp.pop %v2247
  %v2249 = vmul.f32 1.0, %v2248
  %v2251 = vrot.slane %v2242, 2
  %v2253 = vadd.f32 %v2251, %v2197
  %v2254 = vxor.u32 %v2253, 2147483648
  %v2255 = vmul.f32 %v2254, 1.442695
  %v2256 = vpow.pop %v2255
  %v2257 = vadd.f32 %v2256, 1.0
  %v2258 = vrcp.pop %v2257
  %v2259 = vmul.f32 1.0, %v2258
  %v2260 = vadd.f32 %v2236, %v575
  %v2261 = vmul.f32 %v2249, %v2260
  %v2262 = vrot.slane %v2242, 4
  %v2264 = vadd.f32 %v2262, %v2261
  %v2265 = vtanh.pop %v2264
  %v2266 = vsub.f32 1.0, %v2259
  %v2267 = vmul.f32 %v2266, %v2265
  %v2268 = vmul.f32 %v2259, %v1725
  %v2269 = vadd.f32 %v2267, %v2268
  %v2270 = vsel %vm1726, 1, 0
  %2271 = vset.pattern.permute.xlu0 0
  %2272 = vperm.xlu0 %2271, %v2270
  %v2273 = vpop.permute.xlu0 %2272
  %vm2274 = vcmp.eq.s32.totalorder %v2273, 1
  %v2275 = vsel %vm2274, %v1998, 0.0
  %s2276 = scalar_lea.vmem %s7, 6
  %2277 = vst [vmem:[%s2276] sm:$0x3] %v2275
  %v2278 = vsel %vm1727, 1, 0
  %2279 = vset.pattern.permute.xlu0 0
  %2280 = vperm.xlu0 %2279, %v2278
  %v2281 = vpop.permute.xlu0 %2280
  %vm2282 = vcmp.eq.s32.totalorder %v2281, 1
  %v2283 = vsel %vm2282, %v2269, 0.0
  %s2284 = scalar_lea.vmem %s8, 8
  %2285 = vst [vmem:[%s2284] sm:$0x3] %v2283
  %v2286 = vsel %vm2274, %v1998, %v1724
  %v2287 = vsel %vm2282, %v2269, %v1725
  %v2288 = vpack.c.bf16 %v2286, %v2286
  %v2289 = vld [vmem:[%s3] sm:$0xff]
  %v2290 = vld [vmem:[%s3 + $0x8] sm:$0xf]
  %v2291 = vld [vmem:[%s3 + $0xc] sm:$0xff]
  %v2292 = vld [vmem:[%s3 + $0x14] sm:$0xf]
  %v2293 = vld [vmem:[%s3 + $0x18] sm:$0xff]
  %v2294 = vld [vmem:[%s3 + $0x20] sm:$0xf]
  %v2295 = vld [vmem:[%s3 + $0x24] sm:$0xff]
  %v2296 = vld [vmem:[%s3 + $0x2c] sm:$0xf]
  %v2297 = vld [vmem:[%s3 + $0x30] sm:$0xff]
  %v2298 = vld [vmem:[%s3 + $0x38] sm:$0xf]
  %v2299 = vld [vmem:[%s3 + $0x3c] sm:$0xff]
  %v2300 = vld [vmem:[%s3 + $0x44] sm:$0xf]
  %v2301 = vld [vmem:[%s3 + $0x48] sm:$0xff]
  %v2302 = vld [vmem:[%s3 + $0x50] sm:$0xf]
  %v2303 = vld [vmem:[%s3 + $0x54] sm:$0xff]
  %v2304 = vld [vmem:[%s3 + $0x5c] sm:$0xf]
  %v2305 = vld [vmem:[%s3 + $0x60] sm:$0xff]
  %v2306 = vld [vmem:[%s3 + $0x68] sm:$0xf]
  %v2307 = vld [vmem:[%s3 + $0x6c] sm:$0xff]
  %v2308 = vld [vmem:[%s3 + $0x74] sm:$0xf]
  %v2309 = vld [vmem:[%s3 + $0x78] sm:$0xff]
  %v2310 = vld [vmem:[%s3 + $0x80] sm:$0xf]
  %v2311 = vld [vmem:[%s3 + $0x84] sm:$0xff]
  %v2312 = vld [vmem:[%s3 + $0x8c] sm:$0xf]
  %v2313 = vld [vmem:[%s3 + $0x90] sm:$0xff]
  %v2314 = vld [vmem:[%s3 + $0x98] sm:$0xf]
  %v2315 = vld [vmem:[%s3 + $0x9c] sm:$0xff]
  %v2316 = vld [vmem:[%s3 + $0xa4] sm:$0xf]
  %v2317 = vld [vmem:[%s3 + $0xa8] sm:$0xff]
  %v2318 = vld [vmem:[%s3 + $0xb0] sm:$0xf]
  %v2319 = vld [vmem:[%s3 + $0xb4] sm:$0xff]
  %v2320 = vld [vmem:[%s3 + $0xbc] sm:$0xf]
  %v2353 = vunpack.c.l.b16 %v2289
  %v2354 = vunpack.c.h.b16 %v2289
  %v2355 = vunpack.c.l.b16 %v2290
  %v2356 = vunpack.c.l.b16 %v2291
  %v2357 = vunpack.c.h.b16 %v2291
  %v2358 = vunpack.c.l.b16 %v2292
  %v2359 = vunpack.c.l.b16 %v2293
  %v2360 = vunpack.c.h.b16 %v2293
  %v2361 = vunpack.c.l.b16 %v2294
  %v2362 = vunpack.c.l.b16 %v2295
  %v2363 = vunpack.c.h.b16 %v2295
  %v2364 = vunpack.c.l.b16 %v2296
  %v2365 = vunpack.c.l.b16 %v2297
  %v2366 = vunpack.c.h.b16 %v2297
  %v2367 = vunpack.c.l.b16 %v2298
  %v2368 = vunpack.c.l.b16 %v2299
  %v2369 = vunpack.c.h.b16 %v2299
  %v2370 = vunpack.c.l.b16 %v2300
  %v2371 = vunpack.c.l.b16 %v2301
  %v2372 = vunpack.c.h.b16 %v2301
  %v2373 = vunpack.c.l.b16 %v2302
  %v2374 = vunpack.c.l.b16 %v2303
  %v2375 = vunpack.c.h.b16 %v2303
  %v2376 = vunpack.c.l.b16 %v2304
  %v2377 = vunpack.c.l.b16 %v2305
  %v2378 = vunpack.c.h.b16 %v2305
  %v2379 = vunpack.c.l.b16 %v2306
  %v2380 = vunpack.c.l.b16 %v2307
  %v2381 = vunpack.c.h.b16 %v2307
  %v2382 = vunpack.c.l.b16 %v2308
  %v2383 = vunpack.c.l.b16 %v2309
  %v2384 = vunpack.c.h.b16 %v2309
  %v2385 = vunpack.c.l.b16 %v2310
  %v2386 = vunpack.c.l.b16 %v2311
  %v2387 = vunpack.c.h.b16 %v2311
  %v2388 = vunpack.c.l.b16 %v2312
  %v2389 = vunpack.c.l.b16 %v2313
  %v2390 = vunpack.c.h.b16 %v2313
  %v2391 = vunpack.c.l.b16 %v2314
  %v2392 = vunpack.c.l.b16 %v2315
  %v2393 = vunpack.c.h.b16 %v2315
  %v2394 = vunpack.c.l.b16 %v2316
  %v2395 = vunpack.c.l.b16 %v2317
  %v2396 = vunpack.c.h.b16 %v2317
  %v2397 = vunpack.c.l.b16 %v2318
  %v2398 = vunpack.c.l.b16 %v2319
  %v2399 = vunpack.c.h.b16 %v2319
  %v2400 = vunpack.c.l.b16 %v2320
  %v2401 = vpack.c.b16 %v2356, %v2353
  %v2402 = vpack.c.b16 %v2357, %v2354
  %v2403 = vpack.c.b16 %v2358, %v2355
  %v2404 = vpack.c.b16 %v2362, %v2359
  %v2405 = vpack.c.b16 %v2363, %v2360
  %v2406 = vpack.c.b16 %v2364, %v2361
  %v2407 = vpack.c.b16 %v2368, %v2365
  %v2408 = vpack.c.b16 %v2369, %v2366
  %v2409 = vpack.c.b16 %v2370, %v2367
  %v2410 = vpack.c.b16 %v2374, %v2371
  %v2411 = vpack.c.b16 %v2375, %v2372
  %v2412 = vpack.c.b16 %v2376, %v2373
  %v2413 = vpack.c.b16 %v2380, %v2377
  %v2414 = vpack.c.b16 %v2381, %v2378
  %v2415 = vpack.c.b16 %v2382, %v2379
  %v2416 = vpack.c.b16 %v2386, %v2383
  %v2417 = vpack.c.b16 %v2387, %v2384
  %v2418 = vpack.c.b16 %v2388, %v2385
  %v2419 = vpack.c.b16 %v2392, %v2389
  %v2420 = vpack.c.b16 %v2393, %v2390
  %v2421 = vpack.c.b16 %v2394, %v2391
  %v2422 = vpack.c.b16 %v2398, %v2395
  %v2423 = vpack.c.b16 %v2399, %v2396
  %v2424 = vpack.c.b16 %v2400, %v2397
  %2449 = vmatprep.subr.bf16.mxu0 %v2402
  %2450 = vmatpush1.bf16.msra.mxu0 %v2401
  %2451 = vmatprep.subr.bf16.mxu0 %v2405
  %2452 = vmatpush1.bf16.msra.mxu0 %v2404
  %2453 = vmatprep.subr.bf16.mxu0 %v2408
  %2454 = vmatpush1.bf16.msra.mxu0 %v2407
  %2455 = vmatprep.subr.bf16.mxu0 %v2411
  %2456 = vmatpush1.bf16.msra.mxu0 %v2410
  %2457 = vmatprep.subr.bf16.mxu0 %v2414
  %2458 = vmatpush1.bf16.msra.mxu0 %v2413
  %2459 = vmatprep.subr.bf16.mxu0 %v2417
  %2460 = vmatpush1.bf16.msra.mxu0 %v2416
  %2461 = vmatprep.subr.bf16.mxu0 %v2420
  %2462 = vmatpush1.bf16.msra.mxu0 %v2419
  %2463 = vmatprep.subr.bf16.mxu0 %v2423
  %2464 = vmatpush1.bf16.msra.mxu0 %v2422
  %2465 = vmatprep.subr.bf16.mxu0 0
  %2466 = vmatpush1.bf16.msra.mxu0 0
  %2467 = vmatprep.subr.bf16.mxu0 0
  %2468 = vmatpush1.bf16.msra.mxu0 0
  %2469 = vmatprep.subr.bf16.mxu0 0
  %2470 = vmatpush1.bf16.msra.mxu0 0
  %2471 = vmatprep.subr.bf16.mxu0 0
  %2472 = vmatpush1.bf16.msra.mxu0 0
  %2473 = vmatprep.subr.bf16.mxu0 0
  %2474 = vmatpush1.bf16.msra.mxu0 0
  %2475 = vmatprep.subr.bf16.mxu0 0
  %2476 = vmatpush1.bf16.msra.mxu0 0
  %2477 = vmatprep.subr.bf16.mxu0 0
  %2478 = vmatpush1.bf16.msra.mxu0 0
  %2479 = vmatprep.subr.bf16.mxu0 0
  %2480 = vmatpush1.bf16.msra.mxu0 0
  %2481 = vmatprep.mubr.bf16.mxu0 0
  %2482 = vmatmul.mubr.bf16.gmra.mrb[0].mxu0 %v2288
  %v2483 = vpop.f32.mrb[0].mxu0
  %v2484 = vadd.f32 0.0, %v2483
  %v2485 = vpop.f32.mrb[0].mxu0
  %v2486 = vadd.f32 0.0, %v2485
  %v2487 = vpop.f32.mrb[0].mxu0
  %v2488 = vpop.f32.mrb[0].mxu0
  %2489 = vdwg.mxu0
  %2490 = vmatprep.subr.bf16.mxu0 0
  %2491 = vmatpush1.bf16.msra.mxu0 %v2403
  %2492 = vmatprep.subr.bf16.mxu0 0
  %2493 = vmatpush1.bf16.msra.mxu0 %v2406
  %2494 = vmatprep.subr.bf16.mxu0 0
  %2495 = vmatpush1.bf16.msra.mxu0 %v2409
  %2496 = vmatprep.subr.bf16.mxu0 0
  %2497 = vmatpush1.bf16.msra.mxu0 %v2412
  %2498 = vmatprep.subr.bf16.mxu0 0
  %2499 = vmatpush1.bf16.msra.mxu0 %v2415
  %2500 = vmatprep.subr.bf16.mxu0 0
  %2501 = vmatpush1.bf16.msra.mxu0 %v2418
  %2502 = vmatprep.subr.bf16.mxu0 0
  %2503 = vmatpush1.bf16.msra.mxu0 %v2421
  %2504 = vmatprep.subr.bf16.mxu0 0
  %2505 = vmatpush1.bf16.msra.mxu0 %v2424
  %2506 = vmatprep.subr.bf16.mxu0 0
  %2507 = vmatpush1.bf16.msra.mxu0 0
  %2508 = vmatprep.subr.bf16.mxu0 0
  %2509 = vmatpush1.bf16.msra.mxu0 0
  %2510 = vmatprep.subr.bf16.mxu0 0
  %2511 = vmatpush1.bf16.msra.mxu0 0
  %2512 = vmatprep.subr.bf16.mxu0 0
  %2513 = vmatpush1.bf16.msra.mxu0 0
  %2514 = vmatprep.subr.bf16.mxu0 0
  %2515 = vmatpush1.bf16.msra.mxu0 0
  %2516 = vmatprep.subr.bf16.mxu0 0
  %2517 = vmatpush1.bf16.msra.mxu0 0
  %2518 = vmatprep.subr.bf16.mxu0 0
  %2519 = vmatpush1.bf16.msra.mxu0 0
  %2520 = vmatprep.subr.bf16.mxu0 0
  %2521 = vmatpush1.bf16.msra.mxu0 0
  %2522 = vmatprep.mubr.bf16.mxu0 0
  %2523 = vmatmul.mubr.bf16.gmra.mrb[0].mxu0 %v2288
  %v2524 = vpop.f32.mrb[0].mxu0
  %v2525 = vadd.f32 0.0, %v2524
  %v2526 = vpop.f32.mrb[0].mxu0
  %v2527 = vpop.f32.mrb[0].mxu0
  %v2528 = vpop.f32.mrb[0].mxu0
  %2529 = vdwg.mxu0
  %s2530 = scalar_lea.vmem %s1, 24
  %v2531 = vld [vmem:[%s2530] sm:$0x3f]
  %v2532 = vadd.f32 %v2531, %v2484
  %v2533 = vxor.u32 %v2532, 2147483648
  %v2534 = vmul.f32 %v2533, 1.442695
  %v2535 = vpow.pop %v2534
  %v2536 = vadd.f32 %v2535, 1.0
  %v2537 = vrcp.pop %v2536
  %v2538 = vmul.f32 1.0, %v2537
  %v2540 = vrot.slane %v2531, 2
  %v2542 = vadd.f32 %v2540, %v2486
  %v2543 = vxor.u32 %v2542, 2147483648
  %v2544 = vmul.f32 %v2543, 1.442695
  %v2545 = vpow.pop %v2544
  %v2546 = vadd.f32 %v2545, 1.0
  %v2547 = vrcp.pop %v2546
  %v2548 = vmul.f32 1.0, %v2547
  %v2549 = vadd.f32 %v2525, %v299
  %v2550 = vmul.f32 %v2538, %v2549
  %v2551 = vrot.slane %v2531, 4
  %v2553 = vadd.f32 %v2551, %v2550
  %v2554 = vtanh.pop %v2553
  %v2555 = vsub.f32 1.0, %v2548
  %v2556 = vmul.f32 %v2555, %v2554
  %v2557 = vmul.f32 %v2548, %v2286
  %v2558 = vadd.f32 %v2556, %v2557
  %v2559 = vpack.c.bf16 %v2287, %v2287
  %v2560 = vld [vmem:[%s4] sm:$0xff]
  %v2561 = vld [vmem:[%s4 + $0x8] sm:$0xf]
  %v2562 = vld [vmem:[%s4 + $0xc] sm:$0xff]
  %v2563 = vld [vmem:[%s4 + $0x14] sm:$0xf]
  %v2564 = vld [vmem:[%s4 + $0x18] sm:$0xff]
  %v2565 = vld [vmem:[%s4 + $0x20] sm:$0xf]
  %v2566 = vld [vmem:[%s4 + $0x24] sm:$0xff]
  %v2567 = vld [vmem:[%s4 + $0x2c] sm:$0xf]
  %v2568 = vld [vmem:[%s4 + $0x30] sm:$0xff]
  %v2569 = vld [vmem:[%s4 + $0x38] sm:$0xf]
  %v2570 = vld [vmem:[%s4 + $0x3c] sm:$0xff]
  %v2571 = vld [vmem:[%s4 + $0x44] sm:$0xf]
  %v2572 = vld [vmem:[%s4 + $0x48] sm:$0xff]
  %v2573 = vld [vmem:[%s4 + $0x50] sm:$0xf]
  %v2574 = vld [vmem:[%s4 + $0x54] sm:$0xff]
  %v2575 = vld [vmem:[%s4 + $0x5c] sm:$0xf]
  %v2576 = vld [vmem:[%s4 + $0x60] sm:$0xff]
  %v2577 = vld [vmem:[%s4 + $0x68] sm:$0xf]
  %v2578 = vld [vmem:[%s4 + $0x6c] sm:$0xff]
  %v2579 = vld [vmem:[%s4 + $0x74] sm:$0xf]
  %v2580 = vld [vmem:[%s4 + $0x78] sm:$0xff]
  %v2581 = vld [vmem:[%s4 + $0x80] sm:$0xf]
  %v2582 = vld [vmem:[%s4 + $0x84] sm:$0xff]
  %v2583 = vld [vmem:[%s4 + $0x8c] sm:$0xf]
  %v2584 = vld [vmem:[%s4 + $0x90] sm:$0xff]
  %v2585 = vld [vmem:[%s4 + $0x98] sm:$0xf]
  %v2586 = vld [vmem:[%s4 + $0x9c] sm:$0xff]
  %v2587 = vld [vmem:[%s4 + $0xa4] sm:$0xf]
  %v2588 = vld [vmem:[%s4 + $0xa8] sm:$0xff]
  %v2589 = vld [vmem:[%s4 + $0xb0] sm:$0xf]
  %v2590 = vld [vmem:[%s4 + $0xb4] sm:$0xff]
  %v2591 = vld [vmem:[%s4 + $0xbc] sm:$0xf]
  %v2624 = vunpack.c.l.b16 %v2560
  %v2625 = vunpack.c.h.b16 %v2560
  %v2626 = vunpack.c.l.b16 %v2561
  %v2627 = vunpack.c.l.b16 %v2562
  %v2628 = vunpack.c.h.b16 %v2562
  %v2629 = vunpack.c.l.b16 %v2563
  %v2630 = vunpack.c.l.b16 %v2564
  %v2631 = vunpack.c.h.b16 %v2564
  %v2632 = vunpack.c.l.b16 %v2565
  %v2633 = vunpack.c.l.b16 %v2566
  %v2634 = vunpack.c.h.b16 %v2566
  %v2635 = vunpack.c.l.b16 %v2567
  %v2636 = vunpack.c.l.b16 %v2568
  %v2637 = vunpack.c.h.b16 %v2568
  %v2638 = vunpack.c.l.b16 %v2569
  %v2639 = vunpack.c.l.b16 %v2570
  %v2640 = vunpack.c.h.b16 %v2570
  %v2641 = vunpack.c.l.b16 %v2571
  %v2642 = vunpack.c.l.b16 %v2572
  %v2643 = vunpack.c.h.b16 %v2572
  %v2644 = vunpack.c.l.b16 %v2573
  %v2645 = vunpack.c.l.b16 %v2574
  %v2646 = vunpack.c.h.b16 %v2574
  %v2647 = vunpack.c.l.b16 %v2575
  %v2648 = vunpack.c.l.b16 %v2576
  %v2649 = vunpack.c.h.b16 %v2576
  %v2650 = vunpack.c.l.b16 %v2577
  %v2651 = vunpack.c.l.b16 %v2578
  %v2652 = vunpack.c.h.b16 %v2578
  %v2653 = vunpack.c.l.b16 %v2579
  %v2654 = vunpack.c.l.b16 %v2580
  %v2655 = vunpack.c.h.b16 %v2580
  %v2656 = vunpack.c.l.b16 %v2581
  %v2657 = vunpack.c.l.b16 %v2582
  %v2658 = vunpack.c.h.b16 %v2582
  %v2659 = vunpack.c.l.b16 %v2583
  %v2660 = vunpack.c.l.b16 %v2584
  %v2661 = vunpack.c.h.b16 %v2584
  %v2662 = vunpack.c.l.b16 %v2585
  %v2663 = vunpack.c.l.b16 %v2586
  %v2664 = vunpack.c.h.b16 %v2586
  %v2665 = vunpack.c.l.b16 %v2587
  %v2666 = vunpack.c.l.b16 %v2588
  %v2667 = vunpack.c.h.b16 %v2588
  %v2668 = vunpack.c.l.b16 %v2589
  %v2669 = vunpack.c.l.b16 %v2590
  %v2670 = vunpack.c.h.b16 %v2590
  %v2671 = vunpack.c.l.b16 %v2591
  %v2672 = vpack.c.b16 %v2627, %v2624
  %v2673 = vpack.c.b16 %v2628, %v2625
  %v2674 = vpack.c.b16 %v2629, %v2626
  %v2675 = vpack.c.b16 %v2633, %v2630
  %v2676 = vpack.c.b16 %v2634, %v2631
  %v2677 = vpack.c.b16 %v2635, %v2632
  %v2678 = vpack.c.b16 %v2639, %v2636
  %v2679 = vpack.c.b16 %v2640, %v2637
  %v2680 = vpack.c.b16 %v2641, %v2638
  %v2681 = vpack.c.b16 %v2645, %v2642
  %v2682 = vpack.c.b16 %v2646, %v2643
  %v2683 = vpack.c.b16 %v2647, %v2644
  %v2684 = vpack.c.b16 %v2651, %v2648
  %v2685 = vpack.c.b16 %v2652, %v2649
  %v2686 = vpack.c.b16 %v2653, %v2650
  %v2687 = vpack.c.b16 %v2657, %v2654
  %v2688 = vpack.c.b16 %v2658, %v2655
  %v2689 = vpack.c.b16 %v2659, %v2656
  %v2690 = vpack.c.b16 %v2663, %v2660
  %v2691 = vpack.c.b16 %v2664, %v2661
  %v2692 = vpack.c.b16 %v2665, %v2662
  %v2693 = vpack.c.b16 %v2669, %v2666
  %v2694 = vpack.c.b16 %v2670, %v2667
  %v2695 = vpack.c.b16 %v2671, %v2668
  %2720 = vmatprep.subr.bf16.mxu0 %v2673
  %2721 = vmatpush1.bf16.msra.mxu0 %v2672
  %2722 = vmatprep.subr.bf16.mxu0 %v2676
  %2723 = vmatpush1.bf16.msra.mxu0 %v2675
  %2724 = vmatprep.subr.bf16.mxu0 %v2679
  %2725 = vmatpush1.bf16.msra.mxu0 %v2678
  %2726 = vmatprep.subr.bf16.mxu0 %v2682
  %2727 = vmatpush1.bf16.msra.mxu0 %v2681
  %2728 = vmatprep.subr.bf16.mxu0 %v2685
  %2729 = vmatpush1.bf16.msra.mxu0 %v2684
  %2730 = vmatprep.subr.bf16.mxu0 %v2688
  %2731 = vmatpush1.bf16.msra.mxu0 %v2687
  %2732 = vmatprep.subr.bf16.mxu0 %v2691
  %2733 = vmatpush1.bf16.msra.mxu0 %v2690
  %2734 = vmatprep.subr.bf16.mxu0 %v2694
  %2735 = vmatpush1.bf16.msra.mxu0 %v2693
  %2736 = vmatprep.subr.bf16.mxu0 0
  %2737 = vmatpush1.bf16.msra.mxu0 0
  %2738 = vmatprep.subr.bf16.mxu0 0
  %2739 = vmatpush1.bf16.msra.mxu0 0
  %2740 = vmatprep.subr.bf16.mxu0 0
  %2741 = vmatpush1.bf16.msra.mxu0 0
  %2742 = vmatprep.subr.bf16.mxu0 0
  %2743 = vmatpush1.bf16.msra.mxu0 0
  %2744 = vmatprep.subr.bf16.mxu0 0
  %2745 = vmatpush1.bf16.msra.mxu0 0
  %2746 = vmatprep.subr.bf16.mxu0 0
  %2747 = vmatpush1.bf16.msra.mxu0 0
  %2748 = vmatprep.subr.bf16.mxu0 0
  %2749 = vmatpush1.bf16.msra.mxu0 0
  %2750 = vmatprep.subr.bf16.mxu0 0
  %2751 = vmatpush1.bf16.msra.mxu0 0
  %2752 = vmatprep.mubr.bf16.mxu0 0
  %2753 = vmatmul.mubr.bf16.gmra.mrb[0].mxu0 %v2559
  %v2754 = vpop.f32.mrb[0].mxu0
  %v2755 = vadd.f32 0.0, %v2754
  %v2756 = vpop.f32.mrb[0].mxu0
  %v2757 = vadd.f32 0.0, %v2756
  %v2758 = vpop.f32.mrb[0].mxu0
  %v2759 = vpop.f32.mrb[0].mxu0
  %2760 = vdwg.mxu0
  %2761 = vmatprep.subr.bf16.mxu0 0
  %2762 = vmatpush1.bf16.msra.mxu0 %v2674
  %2763 = vmatprep.subr.bf16.mxu0 0
  %2764 = vmatpush1.bf16.msra.mxu0 %v2677
  %2765 = vmatprep.subr.bf16.mxu0 0
  %2766 = vmatpush1.bf16.msra.mxu0 %v2680
  %2767 = vmatprep.subr.bf16.mxu0 0
  %2768 = vmatpush1.bf16.msra.mxu0 %v2683
  %2769 = vmatprep.subr.bf16.mxu0 0
  %2770 = vmatpush1.bf16.msra.mxu0 %v2686
  %2771 = vmatprep.subr.bf16.mxu0 0
  %2772 = vmatpush1.bf16.msra.mxu0 %v2689
  %2773 = vmatprep.subr.bf16.mxu0 0
  %2774 = vmatpush1.bf16.msra.mxu0 %v2692
  %2775 = vmatprep.subr.bf16.mxu0 0
  %2776 = vmatpush1.bf16.msra.mxu0 %v2695
  %2777 = vmatprep.subr.bf16.mxu0 0
  %2778 = vmatpush1.bf16.msra.mxu0 0
  %2779 = vmatprep.subr.bf16.mxu0 0
  %2780 = vmatpush1.bf16.msra.mxu0 0
  %2781 = vmatprep.subr.bf16.mxu0 0
  %2782 = vmatpush1.bf16.msra.mxu0 0
  %2783 = vmatprep.subr.bf16.mxu0 0
  %2784 = vmatpush1.bf16.msra.mxu0 0
  %2785 = vmatprep.subr.bf16.mxu0 0
  %2786 = vmatpush1.bf16.msra.mxu0 0
  %2787 = vmatprep.subr.bf16.mxu0 0
  %2788 = vmatpush1.bf16.msra.mxu0 0
  %2789 = vmatprep.subr.bf16.mxu0 0
  %2790 = vmatpush1.bf16.msra.mxu0 0
  %2791 = vmatprep.subr.bf16.mxu0 0
  %2792 = vmatpush1.bf16.msra.mxu0 0
  %2793 = vmatprep.mubr.bf16.mxu0 0
  %2794 = vmatmul.mubr.bf16.gmra.mrb[0].mxu0 %v2559
  %v2795 = vpop.f32.mrb[0].mxu0
  %v2796 = vadd.f32 0.0, %v2795
  %v2797 = vpop.f32.mrb[0].mxu0
  %v2798 = vpop.f32.mrb[0].mxu0
  %v2799 = vpop.f32.mrb[0].mxu0
  %2800 = vdwg.mxu0
  %s2801 = scalar_lea.vmem %s2, 18
  %v2802 = vld [vmem:[%s2801] sm:$0x3f]
  %v2803 = vadd.f32 %v2802, %v2755
  %v2804 = vxor.u32 %v2803, 2147483648
  %v2805 = vmul.f32 %v2804, 1.442695
  %v2806 = vpow.pop %v2805
  %v2807 = vadd.f32 %v2806, 1.0
  %v2808 = vrcp.pop %v2807
  %v2809 = vmul.f32 1.0, %v2808
  %v2811 = vrot.slane %v2802, 2
  %v2813 = vadd.f32 %v2811, %v2757
  %v2814 = vxor.u32 %v2813, 2147483648
  %v2815 = vmul.f32 %v2814, 1.442695
  %v2816 = vpow.pop %v2815
  %v2817 = vadd.f32 %v2816, 1.0
  %v2818 = vrcp.pop %v2817
  %v2819 = vmul.f32 1.0, %v2818
  %v2820 = vadd.f32 %v2796, %v575
  %v2821 = vmul.f32 %v2809, %v2820
  %v2822 = vrot.slane %v2802, 4
  %v2824 = vadd.f32 %v2822, %v2821
  %v2825 = vtanh.pop %v2824
  %v2826 = vsub.f32 1.0, %v2819
  %v2827 = vmul.f32 %v2826, %v2825
  %v2828 = vmul.f32 %v2819, %v2287
  %v2829 = vadd.f32 %v2827, %v2828
  %v2830 = vsel %vm2282, %v2558, 0.0
  %s2831 = scalar_lea.vmem %s7, 8
  %2832 = vst [vmem:[%s2831] sm:$0x3] %v2830
  %v2833 = vsel %vm2274, %v2829, 0.0
  %s2834 = scalar_lea.vmem %s8, 6
  %2835 = vst [vmem:[%s2834] sm:$0x3] %v2833
  %v2836 = vsel %vm2282, %v2558, %v2286
  %v2837 = vsel %vm2274, %v2829, %v2287
  %v2838 = vpack.c.bf16 %v2836, %v2836
  %v2839 = vld [vmem:[%s3] sm:$0xff]
  %v2840 = vld [vmem:[%s3 + $0x8] sm:$0xf]
  %v2841 = vld [vmem:[%s3 + $0xc] sm:$0xff]
  %v2842 = vld [vmem:[%s3 + $0x14] sm:$0xf]
  %v2843 = vld [vmem:[%s3 + $0x18] sm:$0xff]
  %v2844 = vld [vmem:[%s3 + $0x20] sm:$0xf]
  %v2845 = vld [vmem:[%s3 + $0x24] sm:$0xff]
  %v2846 = vld [vmem:[%s3 + $0x2c] sm:$0xf]
  %v2847 = vld [vmem:[%s3 + $0x30] sm:$0xff]
  %v2848 = vld [vmem:[%s3 + $0x38] sm:$0xf]
  %v2849 = vld [vmem:[%s3 + $0x3c] sm:$0xff]
  %v2850 = vld [vmem:[%s3 + $0x44] sm:$0xf]
  %v2851 = vld [vmem:[%s3 + $0x48] sm:$0xff]
  %v2852 = vld [vmem:[%s3 + $0x50] sm:$0xf]
  %v2853 = vld [vmem:[%s3 + $0x54] sm:$0xff]
  %v2854 = vld [vmem:[%s3 + $0x5c] sm:$0xf]
  %v2855 = vld [vmem:[%s3 + $0x60] sm:$0xff]
  %v2856 = vld [vmem:[%s3 + $0x68] sm:$0xf]
  %v2857 = vld [vmem:[%s3 + $0x6c] sm:$0xff]
  %v2858 = vld [vmem:[%s3 + $0x74] sm:$0xf]
  %v2859 = vld [vmem:[%s3 + $0x78] sm:$0xff]
  %v2860 = vld [vmem:[%s3 + $0x80] sm:$0xf]
  %v2861 = vld [vmem:[%s3 + $0x84] sm:$0xff]
  %v2862 = vld [vmem:[%s3 + $0x8c] sm:$0xf]
  %v2863 = vld [vmem:[%s3 + $0x90] sm:$0xff]
  %v2864 = vld [vmem:[%s3 + $0x98] sm:$0xf]
  %v2865 = vld [vmem:[%s3 + $0x9c] sm:$0xff]
  %v2866 = vld [vmem:[%s3 + $0xa4] sm:$0xf]
  %v2867 = vld [vmem:[%s3 + $0xa8] sm:$0xff]
  %v2868 = vld [vmem:[%s3 + $0xb0] sm:$0xf]
  %v2869 = vld [vmem:[%s3 + $0xb4] sm:$0xff]
  %v2870 = vld [vmem:[%s3 + $0xbc] sm:$0xf]
  %v2903 = vunpack.c.l.b16 %v2839
  %v2904 = vunpack.c.h.b16 %v2839
  %v2905 = vunpack.c.l.b16 %v2840
  %v2906 = vunpack.c.l.b16 %v2841
  %v2907 = vunpack.c.h.b16 %v2841
  %v2908 = vunpack.c.l.b16 %v2842
  %v2909 = vunpack.c.l.b16 %v2843
  %v2910 = vunpack.c.h.b16 %v2843
  %v2911 = vunpack.c.l.b16 %v2844
  %v2912 = vunpack.c.l.b16 %v2845
  %v2913 = vunpack.c.h.b16 %v2845
  %v2914 = vunpack.c.l.b16 %v2846
  %v2915 = vunpack.c.l.b16 %v2847
  %v2916 = vunpack.c.h.b16 %v2847
  %v2917 = vunpack.c.l.b16 %v2848
  %v2918 = vunpack.c.l.b16 %v2849
  %v2919 = vunpack.c.h.b16 %v2849
  %v2920 = vunpack.c.l.b16 %v2850
  %v2921 = vunpack.c.l.b16 %v2851
  %v2922 = vunpack.c.h.b16 %v2851
  %v2923 = vunpack.c.l.b16 %v2852
  %v2924 = vunpack.c.l.b16 %v2853
  %v2925 = vunpack.c.h.b16 %v2853
  %v2926 = vunpack.c.l.b16 %v2854
  %v2927 = vunpack.c.l.b16 %v2855
  %v2928 = vunpack.c.h.b16 %v2855
  %v2929 = vunpack.c.l.b16 %v2856
  %v2930 = vunpack.c.l.b16 %v2857
  %v2931 = vunpack.c.h.b16 %v2857
  %v2932 = vunpack.c.l.b16 %v2858
  %v2933 = vunpack.c.l.b16 %v2859
  %v2934 = vunpack.c.h.b16 %v2859
  %v2935 = vunpack.c.l.b16 %v2860
  %v2936 = vunpack.c.l.b16 %v2861
  %v2937 = vunpack.c.h.b16 %v2861
  %v2938 = vunpack.c.l.b16 %v2862
  %v2939 = vunpack.c.l.b16 %v2863
  %v2940 = vunpack.c.h.b16 %v2863
  %v2941 = vunpack.c.l.b16 %v2864
  %v2942 = vunpack.c.l.b16 %v2865
  %v2943 = vunpack.c.h.b16 %v2865
  %v2944 = vunpack.c.l.b16 %v2866
  %v2945 = vunpack.c.l.b16 %v2867
  %v2946 = vunpack.c.h.b16 %v2867
  %v2947 = vunpack.c.l.b16 %v2868
  %v2948 = vunpack.c.l.b16 %v2869
  %v2949 = vunpack.c.h.b16 %v2869
  %v2950 = vunpack.c.l.b16 %v2870
  %v2951 = vpack.c.b16 %v2906, %v2903
  %v2952 = vpack.c.b16 %v2907, %v2904
  %v2953 = vpack.c.b16 %v2908, %v2905
  %v2954 = vpack.c.b16 %v2912, %v2909
  %v2955 = vpack.c.b16 %v2913, %v2910
  %v2956 = vpack.c.b16 %v2914, %v2911
  %v2957 = vpack.c.b16 %v2918, %v2915
  %v2958 = vpack.c.b16 %v2919, %v2916
  %v2959 = vpack.c.b16 %v2920, %v2917
  %v2960 = vpack.c.b16 %v2924, %v2921
  %v2961 = vpack.c.b16 %v2925, %v2922
  %v2962 = vpack.c.b16 %v2926, %v2923
  %v2963 = vpack.c.b16 %v2930, %v2927
  %v2964 = vpack.c.b16 %v2931, %v2928
  %v2965 = vpack.c.b16 %v2932, %v2929
  %v2966 = vpack.c.b16 %v2936, %v2933
  %v2967 = vpack.c.b16 %v2937, %v2934
  %v2968 = vpack.c.b16 %v2938, %v2935
  %v2969 = vpack.c.b16 %v2942, %v2939
  %v2970 = vpack.c.b16 %v2943, %v2940
  %v2971 = vpack.c.b16 %v2944, %v2941
  %v2972 = vpack.c.b16 %v2948, %v2945
  %v2973 = vpack.c.b16 %v2949, %v2946
  %v2974 = vpack.c.b16 %v2950, %v2947
  %2999 = vmatprep.subr.bf16.mxu0 %v2952
  %3000 = vmatpush1.bf16.msra.mxu0 %v2951
  %3001 = vmatprep.subr.bf16.mxu0 %v2955
  %3002 = vmatpush1.bf16.msra.mxu0 %v2954
  %3003 = vmatprep.subr.bf16.mxu0 %v2958
  %3004 = vmatpush1.bf16.msra.mxu0 %v2957
  %3005 = vmatprep.subr.bf16.mxu0 %v2961
  %3006 = vmatpush1.bf16.msra.mxu0 %v2960
  %3007 = vmatprep.subr.bf16.mxu0 %v2964
  %3008 = vmatpush1.bf16.msra.mxu0 %v2963
  %3009 = vmatprep.subr.bf16.mxu0 %v2967
  %3010 = vmatpush1.bf16.msra.mxu0 %v2966
  %3011 = vmatprep.subr.bf16.mxu0 %v2970
  %3012 = vmatpush1.bf16.msra.mxu0 %v2969
  %3013 = vmatprep.subr.bf16.mxu0 %v2973
  %3014 = vmatpush1.bf16.msra.mxu0 %v2972
  %3015 = vmatprep.subr.bf16.mxu0 0
  %3016 = vmatpush1.bf16.msra.mxu0 0
  %3017 = vmatprep.subr.bf16.mxu0 0
  %3018 = vmatpush1.bf16.msra.mxu0 0
  %3019 = vmatprep.subr.bf16.mxu0 0
  %3020 = vmatpush1.bf16.msra.mxu0 0
  %3021 = vmatprep.subr.bf16.mxu0 0
  %3022 = vmatpush1.bf16.msra.mxu0 0
  %3023 = vmatprep.subr.bf16.mxu0 0
  %3024 = vmatpush1.bf16.msra.mxu0 0
  %3025 = vmatprep.subr.bf16.mxu0 0
  %3026 = vmatpush1.bf16.msra.mxu0 0
  %3027 = vmatprep.subr.bf16.mxu0 0
  %3028 = vmatpush1.bf16.msra.mxu0 0
  %3029 = vmatprep.subr.bf16.mxu0 0
  %3030 = vmatpush1.bf16.msra.mxu0 0
  %3031 = vmatprep.mubr.bf16.mxu0 0
  %3032 = vmatmul.mubr.bf16.gmra.mrb[0].mxu0 %v2838
  %v3033 = vpop.f32.mrb[0].mxu0
  %v3034 = vadd.f32 0.0, %v3033
  %v3035 = vpop.f32.mrb[0].mxu0
  %v3036 = vadd.f32 0.0, %v3035
  %v3037 = vpop.f32.mrb[0].mxu0
  %v3038 = vpop.f32.mrb[0].mxu0
  %3039 = vdwg.mxu0
  %3040 = vmatprep.subr.bf16.mxu0 0
  %3041 = vmatpush1.bf16.msra.mxu0 %v2953
  %3042 = vmatprep.subr.bf16.mxu0 0
  %3043 = vmatpush1.bf16.msra.mxu0 %v2956
  %3044 = vmatprep.subr.bf16.mxu0 0
  %3045 = vmatpush1.bf16.msra.mxu0 %v2959
  %3046 = vmatprep.subr.bf16.mxu0 0
  %3047 = vmatpush1.bf16.msra.mxu0 %v2962
  %3048 = vmatprep.subr.bf16.mxu0 0
  %3049 = vmatpush1.bf16.msra.mxu0 %v2965
  %3050 = vmatprep.subr.bf16.mxu0 0
  %3051 = vmatpush1.bf16.msra.mxu0 %v2968
  %3052 = vmatprep.subr.bf16.mxu0 0
  %3053 = vmatpush1.bf16.msra.mxu0 %v2971
  %3054 = vmatprep.subr.bf16.mxu0 0
  %3055 = vmatpush1.bf16.msra.mxu0 %v2974
  %3056 = vmatprep.subr.bf16.mxu0 0
  %3057 = vmatpush1.bf16.msra.mxu0 0
  %3058 = vmatprep.subr.bf16.mxu0 0
  %3059 = vmatpush1.bf16.msra.mxu0 0
  %3060 = vmatprep.subr.bf16.mxu0 0
  %3061 = vmatpush1.bf16.msra.mxu0 0
  %3062 = vmatprep.subr.bf16.mxu0 0
  %3063 = vmatpush1.bf16.msra.mxu0 0
  %3064 = vmatprep.subr.bf16.mxu0 0
  %3065 = vmatpush1.bf16.msra.mxu0 0
  %3066 = vmatprep.subr.bf16.mxu0 0
  %3067 = vmatpush1.bf16.msra.mxu0 0
  %3068 = vmatprep.subr.bf16.mxu0 0
  %3069 = vmatpush1.bf16.msra.mxu0 0
  %3070 = vmatprep.subr.bf16.mxu0 0
  %3071 = vmatpush1.bf16.msra.mxu0 0
  %3072 = vmatprep.mubr.bf16.mxu0 0
  %3073 = vmatmul.mubr.bf16.gmra.mrb[0].mxu0 %v2838
  %v3074 = vpop.f32.mrb[0].mxu0
  %v3075 = vadd.f32 0.0, %v3074
  %v3076 = vpop.f32.mrb[0].mxu0
  %v3077 = vpop.f32.mrb[0].mxu0
  %v3078 = vpop.f32.mrb[0].mxu0
  %3079 = vdwg.mxu0
  %s3080 = scalar_lea.vmem %s1, 30
  %v3081 = vld [vmem:[%s3080] sm:$0x3f]
  %v3082 = vadd.f32 %v3081, %v3034
  %v3083 = vxor.u32 %v3082, 2147483648
  %v3084 = vmul.f32 %v3083, 1.442695
  %v3085 = vpow.pop %v3084
  %v3086 = vadd.f32 %v3085, 1.0
  %v3087 = vrcp.pop %v3086
  %v3088 = vmul.f32 1.0, %v3087
  %v3090 = vrot.slane %v3081, 2
  %v3092 = vadd.f32 %v3090, %v3036
  %v3093 = vxor.u32 %v3092, 2147483648
  %v3094 = vmul.f32 %v3093, 1.442695
  %v3095 = vpow.pop %v3094
  %v3096 = vadd.f32 %v3095, 1.0
  %v3097 = vrcp.pop %v3096
  %v3098 = vmul.f32 1.0, %v3097
  %v3099 = vadd.f32 %v3075, %v299
  %v3100 = vmul.f32 %v3088, %v3099
  %v3101 = vrot.slane %v3081, 4
  %v3103 = vadd.f32 %v3101, %v3100
  %v3104 = vtanh.pop %v3103
  %v3105 = vsub.f32 1.0, %v3098
  %v3106 = vmul.f32 %v3105, %v3104
  %v3107 = vmul.f32 %v3098, %v2836
  %v3108 = vadd.f32 %v3106, %v3107
  %v3109 = vpack.c.bf16 %v2837, %v2837
  %v3110 = vld [vmem:[%s4] sm:$0xff]
  %v3111 = vld [vmem:[%s4 + $0x8] sm:$0xf]
  %v3112 = vld [vmem:[%s4 + $0xc] sm:$0xff]
  %v3113 = vld [vmem:[%s4 + $0x14] sm:$0xf]
  %v3114 = vld [vmem:[%s4 + $0x18] sm:$0xff]
  %v3115 = vld [vmem:[%s4 + $0x20] sm:$0xf]
  %v3116 = vld [vmem:[%s4 + $0x24] sm:$0xff]
  %v3117 = vld [vmem:[%s4 + $0x2c] sm:$0xf]
  %v3118 = vld [vmem:[%s4 + $0x30] sm:$0xff]
  %v3119 = vld [vmem:[%s4 + $0x38] sm:$0xf]
  %v3120 = vld [vmem:[%s4 + $0x3c] sm:$0xff]
  %v3121 = vld [vmem:[%s4 + $0x44] sm:$0xf]
  %v3122 = vld [vmem:[%s4 + $0x48] sm:$0xff]
  %v3123 = vld [vmem:[%s4 + $0x50] sm:$0xf]
  %v3124 = vld [vmem:[%s4 + $0x54] sm:$0xff]
  %v3125 = vld [vmem:[%s4 + $0x5c] sm:$0xf]
  %v3126 = vld [vmem:[%s4 + $0x60] sm:$0xff]
  %v3127 = vld [vmem:[%s4 + $0x68] sm:$0xf]
  %v3128 = vld [vmem:[%s4 + $0x6c] sm:$0xff]
  %v3129 = vld [vmem:[%s4 + $0x74] sm:$0xf]
  %v3130 = vld [vmem:[%s4 + $0x78] sm:$0xff]
  %v3131 = vld [vmem:[%s4 + $0x80] sm:$0xf]
  %v3132 = vld [vmem:[%s4 + $0x84] sm:$0xff]
  %v3133 = vld [vmem:[%s4 + $0x8c] sm:$0xf]
  %v3134 = vld [vmem:[%s4 + $0x90] sm:$0xff]
  %v3135 = vld [vmem:[%s4 + $0x98] sm:$0xf]
  %v3136 = vld [vmem:[%s4 + $0x9c] sm:$0xff]
  %v3137 = vld [vmem:[%s4 + $0xa4] sm:$0xf]
  %v3138 = vld [vmem:[%s4 + $0xa8] sm:$0xff]
  %v3139 = vld [vmem:[%s4 + $0xb0] sm:$0xf]
  %v3140 = vld [vmem:[%s4 + $0xb4] sm:$0xff]
  %v3141 = vld [vmem:[%s4 + $0xbc] sm:$0xf]
  %v3174 = vunpack.c.l.b16 %v3110
  %v3175 = vunpack.c.h.b16 %v3110
  %v3176 = vunpack.c.l.b16 %v3111
  %v3177 = vunpack.c.l.b16 %v3112
  %v3178 = vunpack.c.h.b16 %v3112
  %v3179 = vunpack.c.l.b16 %v3113
  %v3180 = vunpack.c.l.b16 %v3114
  %v3181 = vunpack.c.h.b16 %v3114
  %v3182 = vunpack.c.l.b16 %v3115
  %v3183 = vunpack.c.l.b16 %v3116
  %v3184 = vunpack.c.h.b16 %v3116
  %v3185 = vunpack.c.l.b16 %v3117
  %v3186 = vunpack.c.l.b16 %v3118
  %v3187 = vunpack.c.h.b16 %v3118
  %v3188 = vunpack.c.l.b16 %v3119
  %v3189 = vunpack.c.l.b16 %v3120
  %v3190 = vunpack.c.h.b16 %v3120
  %v3191 = vunpack.c.l.b16 %v3121
  %v3192 = vunpack.c.l.b16 %v3122
  %v3193 = vunpack.c.h.b16 %v3122
  %v3194 = vunpack.c.l.b16 %v3123
  %v3195 = vunpack.c.l.b16 %v3124
  %v3196 = vunpack.c.h.b16 %v3124
  %v3197 = vunpack.c.l.b16 %v3125
  %v3198 = vunpack.c.l.b16 %v3126
  %v3199 = vunpack.c.h.b16 %v3126
  %v3200 = vunpack.c.l.b16 %v3127
  %v3201 = vunpack.c.l.b16 %v3128
  %v3202 = vunpack.c.h.b16 %v3128
  %v3203 = vunpack.c.l.b16 %v3129
  %v3204 = vunpack.c.l.b16 %v3130
  %v3205 = vunpack.c.h.b16 %v3130
  %v3206 = vunpack.c.l.b16 %v3131
  %v3207 = vunpack.c.l.b16 %v3132
  %v3208 = vunpack.c.h.b16 %v3132
  %v3209 = vunpack.c.l.b16 %v3133
  %v3210 = vunpack.c.l.b16 %v3134
  %v3211 = vunpack.c.h.b16 %v3134
  %v3212 = vunpack.c.l.b16 %v3135
  %v3213 = vunpack.c.l.b16 %v3136
  %v3214 = vunpack.c.h.b16 %v3136
  %v3215 = vunpack.c.l.b16 %v3137
  %v3216 = vunpack.c.l.b16 %v3138
  %v3217 = vunpack.c.h.b16 %v3138
  %v3218 = vunpack.c.l.b16 %v3139
  %v3219 = vunpack.c.l.b16 %v3140
  %v3220 = vunpack.c.h.b16 %v3140
  %v3221 = vunpack.c.l.b16 %v3141
  %v3222 = vpack.c.b16 %v3177, %v3174
  %v3223 = vpack.c.b16 %v3178, %v3175
  %v3224 = vpack.c.b16 %v3179, %v3176
  %v3225 = vpack.c.b16 %v3183, %v3180
  %v3226 = vpack.c.b16 %v3184, %v3181
  %v3227 = vpack.c.b16 %v3185, %v3182
  %v3228 = vpack.c.b16 %v3189, %v3186
  %v3229 = vpack.c.b16 %v3190, %v3187
  %v3230 = vpack.c.b16 %v3191, %v3188
  %v3231 = vpack.c.b16 %v3195, %v3192
  %v3232 = vpack.c.b16 %v3196, %v3193
  %v3233 = vpack.c.b16 %v3197, %v3194
  %v3234 = vpack.c.b16 %v3201, %v3198
  %v3235 = vpack.c.b16 %v3202, %v3199
  %v3236 = vpack.c.b16 %v3203, %v3200
  %v3237 = vpack.c.b16 %v3207, %v3204
  %v3238 = vpack.c.b16 %v3208, %v3205
  %v3239 = vpack.c.b16 %v3209, %v3206
  %v3240 = vpack.c.b16 %v3213, %v3210
  %v3241 = vpack.c.b16 %v3214, %v3211
  %v3242 = vpack.c.b16 %v3215, %v3212
  %v3243 = vpack.c.b16 %v3219, %v3216
  %v3244 = vpack.c.b16 %v3220, %v3217
  %v3245 = vpack.c.b16 %v3221, %v3218
  %3270 = vmatprep.subr.bf16.mxu0 %v3223
  %3271 = vmatpush1.bf16.msra.mxu0 %v3222
  %3272 = vmatprep.subr.bf16.mxu0 %v3226
  %3273 = vmatpush1.bf16.msra.mxu0 %v3225
  %3274 = vmatprep.subr.bf16.mxu0 %v3229
  %3275 = vmatpush1.bf16.msra.mxu0 %v3228
  %3276 = vmatprep.subr.bf16.mxu0 %v3232
  %3277 = vmatpush1.bf16.msra.mxu0 %v3231
  %3278 = vmatprep.subr.bf16.mxu0 %v3235
  %3279 = vmatpush1.bf16.msra.mxu0 %v3234
  %3280 = vmatprep.subr.bf16.mxu0 %v3238
  %3281 = vmatpush1.bf16.msra.mxu0 %v3237
  %3282 = vmatprep.subr.bf16.mxu0 %v3241
  %3283 = vmatpush1.bf16.msra.mxu0 %v3240
  %3284 = vmatprep.subr.bf16.mxu0 %v3244
  %3285 = vmatpush1.bf16.msra.mxu0 %v3243
  %3286 = vmatprep.subr.bf16.mxu0 0
  %3287 = vmatpush1.bf16.msra.mxu0 0
  %3288 = vmatprep.subr.bf16.mxu0 0
  %3289 = vmatpush1.bf16.msra.mxu0 0
  %3290 = vmatprep.subr.bf16.mxu0 0
  %3291 = vmatpush1.bf16.msra.mxu0 0
  %3292 = vmatprep.subr.bf16.mxu0 0
  %3293 = vmatpush1.bf16.msra.mxu0 0
  %3294 = vmatprep.subr.bf16.mxu0 0
  %3295 = vmatpush1.bf16.msra.mxu0 0
  %3296 = vmatprep.subr.bf16.mxu0 0
  %3297 = vmatpush1.bf16.msra.mxu0 0
  %3298 = vmatprep.subr.bf16.mxu0 0
  %3299 = vmatpush1.bf16.msra.mxu0 0
  %3300 = vmatprep.subr.bf16.mxu0 0
  %3301 = vmatpush1.bf16.msra.mxu0 0
  %3302 = vmatprep.mubr.bf16.mxu0 0
  %3303 = vmatmul.mubr.bf16.gmra.mrb[0].mxu0 %v3109
  %v3304 = vpop.f32.mrb[0].mxu0
  %v3305 = vadd.f32 0.0, %v3304
  %v3306 = vpop.f32.mrb[0].mxu0
  %v3307 = vadd.f32 0.0, %v3306
  %v3308 = vpop.f32.mrb[0].mxu0
  %v3309 = vpop.f32.mrb[0].mxu0
  %3310 = vdwg.mxu0
  %3311 = vmatprep.subr.bf16.mxu0 0
  %3312 = vmatpush1.bf16.msra.mxu0 %v3224
  %3313 = vmatprep.subr.bf16.mxu0 0
  %3314 = vmatpush1.bf16.msra.mxu0 %v3227
  %3315 = vmatprep.subr.bf16.mxu0 0
  %3316 = vmatpush1.bf16.msra.mxu0 %v3230
  %3317 = vmatprep.subr.bf16.mxu0 0
  %3318 = vmatpush1.bf16.msra.mxu0 %v3233
  %3319 = vmatprep.subr.bf16.mxu0 0
  %3320 = vmatpush1.bf16.msra.mxu0 %v3236
  %3321 = vmatprep.subr.bf16.mxu0 0
  %3322 = vmatpush1.bf16.msra.mxu0 %v3239
  %3323 = vmatprep.subr.bf16.mxu0 0
  %3324 = vmatpush1.bf16.msra.mxu0 %v3242
  %3325 = vmatprep.subr.bf16.mxu0 0
  %3326 = vmatpush1.bf16.msra.mxu0 %v3245
  %3327 = vmatprep.subr.bf16.mxu0 0
  %3328 = vmatpush1.bf16.msra.mxu0 0
  %3329 = vmatprep.subr.bf16.mxu0 0
  %3330 = vmatpush1.bf16.msra.mxu0 0
  %3331 = vmatprep.subr.bf16.mxu0 0
  %3332 = vmatpush1.bf16.msra.mxu0 0
  %3333 = vmatprep.subr.bf16.mxu0 0
  %3334 = vmatpush1.bf16.msra.mxu0 0
  %3335 = vmatprep.subr.bf16.mxu0 0
  %3336 = vmatpush1.bf16.msra.mxu0 0
  %3337 = vmatprep.subr.bf16.mxu0 0
  %3338 = vmatpush1.bf16.msra.mxu0 0
  %3339 = vmatprep.subr.bf16.mxu0 0
  %3340 = vmatpush1.bf16.msra.mxu0 0
  %3341 = vmatprep.subr.bf16.mxu0 0
  %3342 = vmatpush1.bf16.msra.mxu0 0
  %3343 = vmatprep.mubr.bf16.mxu0 0
  %3344 = vmatmul.mubr.bf16.gmra.mrb[0].mxu0 %v3109
  %v3345 = vpop.f32.mrb[0].mxu0
  %v3346 = vadd.f32 0.0, %v3345
  %v3347 = vpop.f32.mrb[0].mxu0
  %v3348 = vpop.f32.mrb[0].mxu0
  %v3349 = vpop.f32.mrb[0].mxu0
  %3350 = vdwg.mxu0
  %s3351 = scalar_lea.vmem %s2, 12
  %v3352 = vld [vmem:[%s3351] sm:$0x3f]
  %v3353 = vadd.f32 %v3352, %v3305
  %v3354 = vxor.u32 %v3353, 2147483648
  %v3355 = vmul.f32 %v3354, 1.442695
  %v3356 = vpow.pop %v3355
  %v3357 = vadd.f32 %v3356, 1.0
  %v3358 = vrcp.pop %v3357
  %v3359 = vmul.f32 1.0, %v3358
  %v3361 = vrot.slane %v3352, 2
  %v3363 = vadd.f32 %v3361, %v3307
  %v3364 = vxor.u32 %v3363, 2147483648
  %v3365 = vmul.f32 %v3364, 1.442695
  %v3366 = vpow.pop %v3365
  %v3367 = vadd.f32 %v3366, 1.0
  %v3368 = vrcp.pop %v3367
  %v3369 = vmul.f32 1.0, %v3368
  %v3370 = vadd.f32 %v3346, %v575
  %v3371 = vmul.f32 %v3359, %v3370
  %v3372 = vrot.slane %v3352, 4
  %v3374 = vadd.f32 %v3372, %v3371
  %v3375 = vtanh.pop %v3374
  %v3376 = vsub.f32 1.0, %v3369
  %v3377 = vmul.f32 %v3376, %v3375
  %v3378 = vmul.f32 %v3369, %v2837
  %v3379 = vadd.f32 %v3377, %v3378
  %v3380 = vsel %vm1720, %v3108, 0.0
  %s3381 = scalar_lea.vmem %s7, 10
  %3382 = vst [vmem:[%s3381] sm:$0x3] %v3380
  %v3383 = vsel %vm1712, %v3379, 0.0
  %s3384 = scalar_lea.vmem %s8, 4
  %3385 = vst [vmem:[%s3384] sm:$0x3] %v3383
  %v3386 = vsel %vm1720, %v3108, %v2836
  %v3387 = vsel %vm1712, %v3379, %v2837
  %v3388 = vpack.c.bf16 %v3386, %v3386
  %v3389 = vld [vmem:[%s3] sm:$0xff]
  %v3390 = vld [vmem:[%s3 + $0x8] sm:$0xf]
  %v3391 = vld [vmem:[%s3 + $0xc] sm:$0xff]
  %v3392 = vld [vmem:[%s3 + $0x14] sm:$0xf]
  %v3393 = vld [vmem:[%s3 + $0x18] sm:$0xff]
  %v3394 = vld [vmem:[%s3 + $0x20] sm:$0xf]
  %v3395 = vld [vmem:[%s3 + $0x24] sm:$0xff]
  %v3396 = vld [vmem:[%s3 + $0x2c] sm:$0xf]
  %v3397 = vld [vmem:[%s3 + $0x30] sm:$0xff]
  %v3398 = vld [vmem:[%s3 + $0x38] sm:$0xf]
  %v3399 = vld [vmem:[%s3 + $0x3c] sm:$0xff]
  %v3400 = vld [vmem:[%s3 + $0x44] sm:$0xf]
  %v3401 = vld [vmem:[%s3 + $0x48] sm:$0xff]
  %v3402 = vld [vmem:[%s3 + $0x50] sm:$0xf]
  %v3403 = vld [vmem:[%s3 + $0x54] sm:$0xff]
  %v3404 = vld [vmem:[%s3 + $0x5c] sm:$0xf]
  %v3405 = vld [vmem:[%s3 + $0x60] sm:$0xff]
  %v3406 = vld [vmem:[%s3 + $0x68] sm:$0xf]
  %v3407 = vld [vmem:[%s3 + $0x6c] sm:$0xff]
  %v3408 = vld [vmem:[%s3 + $0x74] sm:$0xf]
  %v3409 = vld [vmem:[%s3 + $0x78] sm:$0xff]
  %v3410 = vld [vmem:[%s3 + $0x80] sm:$0xf]
  %v3411 = vld [vmem:[%s3 + $0x84] sm:$0xff]
  %v3412 = vld [vmem:[%s3 + $0x8c] sm:$0xf]
  %v3413 = vld [vmem:[%s3 + $0x90] sm:$0xff]
  %v3414 = vld [vmem:[%s3 + $0x98] sm:$0xf]
  %v3415 = vld [vmem:[%s3 + $0x9c] sm:$0xff]
  %v3416 = vld [vmem:[%s3 + $0xa4] sm:$0xf]
  %v3417 = vld [vmem:[%s3 + $0xa8] sm:$0xff]
  %v3418 = vld [vmem:[%s3 + $0xb0] sm:$0xf]
  %v3419 = vld [vmem:[%s3 + $0xb4] sm:$0xff]
  %v3420 = vld [vmem:[%s3 + $0xbc] sm:$0xf]
  %v3453 = vunpack.c.l.b16 %v3389
  %v3454 = vunpack.c.h.b16 %v3389
  %v3455 = vunpack.c.l.b16 %v3390
  %v3456 = vunpack.c.l.b16 %v3391
  %v3457 = vunpack.c.h.b16 %v3391
  %v3458 = vunpack.c.l.b16 %v3392
  %v3459 = vunpack.c.l.b16 %v3393
  %v3460 = vunpack.c.h.b16 %v3393
  %v3461 = vunpack.c.l.b16 %v3394
  %v3462 = vunpack.c.l.b16 %v3395
  %v3463 = vunpack.c.h.b16 %v3395
  %v3464 = vunpack.c.l.b16 %v3396
  %v3465 = vunpack.c.l.b16 %v3397
  %v3466 = vunpack.c.h.b16 %v3397
  %v3467 = vunpack.c.l.b16 %v3398
  %v3468 = vunpack.c.l.b16 %v3399
  %v3469 = vunpack.c.h.b16 %v3399
  %v3470 = vunpack.c.l.b16 %v3400
  %v3471 = vunpack.c.l.b16 %v3401
  %v3472 = vunpack.c.h.b16 %v3401
  %v3473 = vunpack.c.l.b16 %v3402
  %v3474 = vunpack.c.l.b16 %v3403
  %v3475 = vunpack.c.h.b16 %v3403
  %v3476 = vunpack.c.l.b16 %v3404
  %v3477 = vunpack.c.l.b16 %v3405
  %v3478 = vunpack.c.h.b16 %v3405
  %v3479 = vunpack.c.l.b16 %v3406
  %v3480 = vunpack.c.l.b16 %v3407
  %v3481 = vunpack.c.h.b16 %v3407
  %v3482 = vunpack.c.l.b16 %v3408
  %v3483 = vunpack.c.l.b16 %v3409
  %v3484 = vunpack.c.h.b16 %v3409
  %v3485 = vunpack.c.l.b16 %v3410
  %v3486 = vunpack.c.l.b16 %v3411
  %v3487 = vunpack.c.h.b16 %v3411
  %v3488 = vunpack.c.l.b16 %v3412
  %v3489 = vunpack.c.l.b16 %v3413
  %v3490 = vunpack.c.h.b16 %v3413
  %v3491 = vunpack.c.l.b16 %v3414
  %v3492 = vunpack.c.l.b16 %v3415
  %v3493 = vunpack.c.h.b16 %v3415
  %v3494 = vunpack.c.l.b16 %v3416
  %v3495 = vunpack.c.l.b16 %v3417
  %v3496 = vunpack.c.h.b16 %v3417
  %v3497 = vunpack.c.l.b16 %v3418
  %v3498 = vunpack.c.l.b16 %v3419
  %v3499 = vunpack.c.h.b16 %v3419
  %v3500 = vunpack.c.l.b16 %v3420
  %v3501 = vpack.c.b16 %v3456, %v3453
  %v3502 = vpack.c.b16 %v3457, %v3454
  %v3503 = vpack.c.b16 %v3458, %v3455
  %v3504 = vpack.c.b16 %v3462, %v3459
  %v3505 = vpack.c.b16 %v3463, %v3460
  %v3506 = vpack.c.b16 %v3464, %v3461
  %v3507 = vpack.c.b16 %v3468, %v3465
  %v3508 = vpack.c.b16 %v3469, %v3466
  %v3509 = vpack.c.b16 %v3470, %v3467
  %v3510 = vpack.c.b16 %v3474, %v3471
  %v3511 = vpack.c.b16 %v3475, %v3472
  %v3512 = vpack.c.b16 %v3476, %v3473
  %v3513 = vpack.c.b16 %v3480, %v3477
  %v3514 = vpack.c.b16 %v3481, %v3478
  %v3515 = vpack.c.b16 %v3482, %v3479
  %v3516 = vpack.c.b16 %v3486, %v3483
  %v3517 = vpack.c.b16 %v3487, %v3484
  %v3518 = vpack.c.b16 %v3488, %v3485
  %v3519 = vpack.c.b16 %v3492, %v3489
  %v3520 = vpack.c.b16 %v3493, %v3490
  %v3521 = vpack.c.b16 %v3494, %v3491
  %v3522 = vpack.c.b16 %v3498, %v3495
  %v3523 = vpack.c.b16 %v3499, %v3496
  %v3524 = vpack.c.b16 %v3500, %v3497
  %3549 = vmatprep.subr.bf16.mxu0 %v3502
  %3550 = vmatpush1.bf16.msra.mxu0 %v3501
  %3551 = vmatprep.subr.bf16.mxu0 %v3505
  %3552 = vmatpush1.bf16.msra.mxu0 %v3504
  %3553 = vmatprep.subr.bf16.mxu0 %v3508
  %3554 = vmatpush1.bf16.msra.mxu0 %v3507
  %3555 = vmatprep.subr.bf16.mxu0 %v3511
  %3556 = vmatpush1.bf16.msra.mxu0 %v3510
  %3557 = vmatprep.subr.bf16.mxu0 %v3514
  %3558 = vmatpush1.bf16.msra.mxu0 %v3513
  %3559 = vmatprep.subr.bf16.mxu0 %v3517
  %3560 = vmatpush1.bf16.msra.mxu0 %v3516
  %3561 = vmatprep.subr.bf16.mxu0 %v3520
  %3562 = vmatpush1.bf16.msra.mxu0 %v3519
  %3563 = vmatprep.subr.bf16.mxu0 %v3523
  %3564 = vmatpush1.bf16.msra.mxu0 %v3522
  %3565 = vmatprep.subr.bf16.mxu0 0
  %3566 = vmatpush1.bf16.msra.mxu0 0
  %3567 = vmatprep.subr.bf16.mxu0 0
  %3568 = vmatpush1.bf16.msra.mxu0 0
  %3569 = vmatprep.subr.bf16.mxu0 0
  %3570 = vmatpush1.bf16.msra.mxu0 0
  %3571 = vmatprep.subr.bf16.mxu0 0
  %3572 = vmatpush1.bf16.msra.mxu0 0
  %3573 = vmatprep.subr.bf16.mxu0 0
  %3574 = vmatpush1.bf16.msra.mxu0 0
  %3575 = vmatprep.subr.bf16.mxu0 0
  %3576 = vmatpush1.bf16.msra.mxu0 0
  %3577 = vmatprep.subr.bf16.mxu0 0
  %3578 = vmatpush1.bf16.msra.mxu0 0
  %3579 = vmatprep.subr.bf16.mxu0 0
  %3580 = vmatpush1.bf16.msra.mxu0 0
  %3581 = vmatprep.mubr.bf16.mxu0 0
  %3582 = vmatmul.mubr.bf16.gmra.mrb[0].mxu0 %v3388
  %v3583 = vpop.f32.mrb[0].mxu0
  %v3584 = vadd.f32 0.0, %v3583
  %v3585 = vpop.f32.mrb[0].mxu0
  %v3586 = vadd.f32 0.0, %v3585
  %v3587 = vpop.f32.mrb[0].mxu0
  %v3588 = vpop.f32.mrb[0].mxu0
  %3589 = vdwg.mxu0
  %3590 = vmatprep.subr.bf16.mxu0 0
  %3591 = vmatpush1.bf16.msra.mxu0 %v3503
  %3592 = vmatprep.subr.bf16.mxu0 0
  %3593 = vmatpush1.bf16.msra.mxu0 %v3506
  %3594 = vmatprep.subr.bf16.mxu0 0
  %3595 = vmatpush1.bf16.msra.mxu0 %v3509
  %3596 = vmatprep.subr.bf16.mxu0 0
  %3597 = vmatpush1.bf16.msra.mxu0 %v3512
  %3598 = vmatprep.subr.bf16.mxu0 0
  %3599 = vmatpush1.bf16.msra.mxu0 %v3515
  %3600 = vmatprep.subr.bf16.mxu0 0
  %3601 = vmatpush1.bf16.msra.mxu0 %v3518
  %3602 = vmatprep.subr.bf16.mxu0 0
  %3603 = vmatpush1.bf16.msra.mxu0 %v3521
  %3604 = vmatprep.subr.bf16.mxu0 0
  %3605 = vmatpush1.bf16.msra.mxu0 %v3524
  %3606 = vmatprep.subr.bf16.mxu0 0
  %3607 = vmatpush1.bf16.msra.mxu0 0
  %3608 = vmatprep.subr.bf16.mxu0 0
  %3609 = vmatpush1.bf16.msra.mxu0 0
  %3610 = vmatprep.subr.bf16.mxu0 0
  %3611 = vmatpush1.bf16.msra.mxu0 0
  %3612 = vmatprep.subr.bf16.mxu0 0
  %3613 = vmatpush1.bf16.msra.mxu0 0
  %3614 = vmatprep.subr.bf16.mxu0 0
  %3615 = vmatpush1.bf16.msra.mxu0 0
  %3616 = vmatprep.subr.bf16.mxu0 0
  %3617 = vmatpush1.bf16.msra.mxu0 0
  %3618 = vmatprep.subr.bf16.mxu0 0
  %3619 = vmatpush1.bf16.msra.mxu0 0
  %3620 = vmatprep.subr.bf16.mxu0 0
  %3621 = vmatpush1.bf16.msra.mxu0 0
  %3622 = vmatprep.mubr.bf16.mxu0 0
  %3623 = vmatmul.mubr.bf16.gmra.mrb[0].mxu0 %v3388
  %v3624 = vpop.f32.mrb[0].mxu0
  %v3625 = vadd.f32 0.0, %v3624
  %v3626 = vpop.f32.mrb[0].mxu0
  %v3627 = vpop.f32.mrb[0].mxu0
  %v3628 = vpop.f32.mrb[0].mxu0
  %3629 = vdwg.mxu0
  %s3630 = scalar_lea.vmem %s1, 36
  %v3631 = vld [vmem:[%s3630] sm:$0x3f]
  %v3632 = vadd.f32 %v3631, %v3584
  %v3633 = vxor.u32 %v3632, 2147483648
  %v3634 = vmul.f32 %v3633, 1.442695
  %v3635 = vpow.pop %v3634
  %v3636 = vadd.f32 %v3635, 1.0
  %v3637 = vrcp.pop %v3636
  %v3638 = vmul.f32 1.0, %v3637
  %v3640 = vrot.slane %v3631, 2
  %v3642 = vadd.f32 %v3640, %v3586
  %v3643 = vxor.u32 %v3642, 2147483648
  %v3644 = vmul.f32 %v3643, 1.442695
  %v3645 = vpow.pop %v3644
  %v3646 = vadd.f32 %v3645, 1.0
  %v3647 = vrcp.pop %v3646
  %v3648 = vmul.f32 1.0, %v3647
  %v3649 = vadd.f32 %v3625, %v299
  %v3650 = vmul.f32 %v3638, %v3649
  %v3651 = vrot.slane %v3631, 4
  %v3653 = vadd.f32 %v3651, %v3650
  %v3654 = vtanh.pop %v3653
  %v3655 = vsub.f32 1.0, %v3648
  %v3656 = vmul.f32 %v3655, %v3654
  %v3657 = vmul.f32 %v3648, %v3386
  %v3658 = vadd.f32 %v3656, %v3657
  %v3659 = vpack.c.bf16 %v3387, %v3387
  %v3660 = vld [vmem:[%s4] sm:$0xff]
  %v3661 = vld [vmem:[%s4 + $0x8] sm:$0xf]
  %v3662 = vld [vmem:[%s4 + $0xc] sm:$0xff]
  %v3663 = vld [vmem:[%s4 + $0x14] sm:$0xf]
  %v3664 = vld [vmem:[%s4 + $0x18] sm:$0xff]
  %v3665 = vld [vmem:[%s4 + $0x20] sm:$0xf]
  %v3666 = vld [vmem:[%s4 + $0x24] sm:$0xff]
  %v3667 = vld [vmem:[%s4 + $0x2c] sm:$0xf]
  %v3668 = vld [vmem:[%s4 + $0x30] sm:$0xff]
  %v3669 = vld [vmem:[%s4 + $0x38] sm:$0xf]
  %v3670 = vld [vmem:[%s4 + $0x3c] sm:$0xff]
  %v3671 = vld [vmem:[%s4 + $0x44] sm:$0xf]
  %v3672 = vld [vmem:[%s4 + $0x48] sm:$0xff]
  %v3673 = vld [vmem:[%s4 + $0x50] sm:$0xf]
  %v3674 = vld [vmem:[%s4 + $0x54] sm:$0xff]
  %v3675 = vld [vmem:[%s4 + $0x5c] sm:$0xf]
  %v3676 = vld [vmem:[%s4 + $0x60] sm:$0xff]
  %v3677 = vld [vmem:[%s4 + $0x68] sm:$0xf]
  %v3678 = vld [vmem:[%s4 + $0x6c] sm:$0xff]
  %v3679 = vld [vmem:[%s4 + $0x74] sm:$0xf]
  %v3680 = vld [vmem:[%s4 + $0x78] sm:$0xff]
  %v3681 = vld [vmem:[%s4 + $0x80] sm:$0xf]
  %v3682 = vld [vmem:[%s4 + $0x84] sm:$0xff]
  %v3683 = vld [vmem:[%s4 + $0x8c] sm:$0xf]
  %v3684 = vld [vmem:[%s4 + $0x90] sm:$0xff]
  %v3685 = vld [vmem:[%s4 + $0x98] sm:$0xf]
  %v3686 = vld [vmem:[%s4 + $0x9c] sm:$0xff]
  %v3687 = vld [vmem:[%s4 + $0xa4] sm:$0xf]
  %v3688 = vld [vmem:[%s4 + $0xa8] sm:$0xff]
  %v3689 = vld [vmem:[%s4 + $0xb0] sm:$0xf]
  %v3690 = vld [vmem:[%s4 + $0xb4] sm:$0xff]
  %v3691 = vld [vmem:[%s4 + $0xbc] sm:$0xf]
  %v3724 = vunpack.c.l.b16 %v3660
  %v3725 = vunpack.c.h.b16 %v3660
  %v3726 = vunpack.c.l.b16 %v3661
  %v3727 = vunpack.c.l.b16 %v3662
  %v3728 = vunpack.c.h.b16 %v3662
  %v3729 = vunpack.c.l.b16 %v3663
  %v3730 = vunpack.c.l.b16 %v3664
  %v3731 = vunpack.c.h.b16 %v3664
  %v3732 = vunpack.c.l.b16 %v3665
  %v3733 = vunpack.c.l.b16 %v3666
  %v3734 = vunpack.c.h.b16 %v3666
  %v3735 = vunpack.c.l.b16 %v3667
  %v3736 = vunpack.c.l.b16 %v3668
  %v3737 = vunpack.c.h.b16 %v3668
  %v3738 = vunpack.c.l.b16 %v3669
  %v3739 = vunpack.c.l.b16 %v3670
  %v3740 = vunpack.c.h.b16 %v3670
  %v3741 = vunpack.c.l.b16 %v3671
  %v3742 = vunpack.c.l.b16 %v3672
  %v3743 = vunpack.c.h.b16 %v3672
  %v3744 = vunpack.c.l.b16 %v3673
  %v3745 = vunpack.c.l.b16 %v3674
  %v3746 = vunpack.c.h.b16 %v3674
  %v3747 = vunpack.c.l.b16 %v3675
  %v3748 = vunpack.c.l.b16 %v3676
  %v3749 = vunpack.c.h.b16 %v3676
  %v3750 = vunpack.c.l.b16 %v3677
  %v3751 = vunpack.c.l.b16 %v3678
  %v3752 = vunpack.c.h.b16 %v3678
  %v3753 = vunpack.c.l.b16 %v3679
  %v3754 = vunpack.c.l.b16 %v3680
  %v3755 = vunpack.c.h.b16 %v3680
  %v3756 = vunpack.c.l.b16 %v3681
  %v3757 = vunpack.c.l.b16 %v3682
  %v3758 = vunpack.c.h.b16 %v3682
  %v3759 = vunpack.c.l.b16 %v3683
  %v3760 = vunpack.c.l.b16 %v3684
  %v3761 = vunpack.c.h.b16 %v3684
  %v3762 = vunpack.c.l.b16 %v3685
  %v3763 = vunpack.c.l.b16 %v3686
  %v3764 = vunpack.c.h.b16 %v3686
  %v3765 = vunpack.c.l.b16 %v3687
  %v3766 = vunpack.c.l.b16 %v3688
  %v3767 = vunpack.c.h.b16 %v3688
  %v3768 = vunpack.c.l.b16 %v3689
  %v3769 = vunpack.c.l.b16 %v3690
  %v3770 = vunpack.c.h.b16 %v3690
  %v3771 = vunpack.c.l.b16 %v3691
  %v3772 = vpack.c.b16 %v3727, %v3724
  %v3773 = vpack.c.b16 %v3728, %v3725
  %v3774 = vpack.c.b16 %v3729, %v3726
  %v3775 = vpack.c.b16 %v3733, %v3730
  %v3776 = vpack.c.b16 %v3734, %v3731
  %v3777 = vpack.c.b16 %v3735, %v3732
  %v3778 = vpack.c.b16 %v3739, %v3736
  %v3779 = vpack.c.b16 %v3740, %v3737
  %v3780 = vpack.c.b16 %v3741, %v3738
  %v3781 = vpack.c.b16 %v3745, %v3742
  %v3782 = vpack.c.b16 %v3746, %v3743
  %v3783 = vpack.c.b16 %v3747, %v3744
  %v3784 = vpack.c.b16 %v3751, %v3748
  %v3785 = vpack.c.b16 %v3752, %v3749
  %v3786 = vpack.c.b16 %v3753, %v3750
  %v3787 = vpack.c.b16 %v3757, %v3754
  %v3788 = vpack.c.b16 %v3758, %v3755
  %v3789 = vpack.c.b16 %v3759, %v3756
  %v3790 = vpack.c.b16 %v3763, %v3760
  %v3791 = vpack.c.b16 %v3764, %v3761
  %v3792 = vpack.c.b16 %v3765, %v3762
  %v3793 = vpack.c.b16 %v3769, %v3766
  %v3794 = vpack.c.b16 %v3770, %v3767
  %v3795 = vpack.c.b16 %v3771, %v3768
  %3820 = vmatprep.subr.bf16.mxu0 %v3773
  %3821 = vmatpush1.bf16.msra.mxu0 %v3772
  %3822 = vmatprep.subr.bf16.mxu0 %v3776
  %3823 = vmatpush1.bf16.msra.mxu0 %v3775
  %3824 = vmatprep.subr.bf16.mxu0 %v3779
  %3825 = vmatpush1.bf16.msra.mxu0 %v3778
  %3826 = vmatprep.subr.bf16.mxu0 %v3782
  %3827 = vmatpush1.bf16.msra.mxu0 %v3781
  %3828 = vmatprep.subr.bf16.mxu0 %v3785
  %3829 = vmatpush1.bf16.msra.mxu0 %v3784
  %3830 = vmatprep.subr.bf16.mxu0 %v3788
  %3831 = vmatpush1.bf16.msra.mxu0 %v3787
  %3832 = vmatprep.subr.bf16.mxu0 %v3791
  %3833 = vmatpush1.bf16.msra.mxu0 %v3790
  %3834 = vmatprep.subr.bf16.mxu0 %v3794
  %3835 = vmatpush1.bf16.msra.mxu0 %v3793
  %3836 = vmatprep.subr.bf16.mxu0 0
  %3837 = vmatpush1.bf16.msra.mxu0 0
  %3838 = vmatprep.subr.bf16.mxu0 0
  %3839 = vmatpush1.bf16.msra.mxu0 0
  %3840 = vmatprep.subr.bf16.mxu0 0
  %3841 = vmatpush1.bf16.msra.mxu0 0
  %3842 = vmatprep.subr.bf16.mxu0 0
  %3843 = vmatpush1.bf16.msra.mxu0 0
  %3844 = vmatprep.subr.bf16.mxu0 0
  %3845 = vmatpush1.bf16.msra.mxu0 0
  %3846 = vmatprep.subr.bf16.mxu0 0
  %3847 = vmatpush1.bf16.msra.mxu0 0
  %3848 = vmatprep.subr.bf16.mxu0 0
  %3849 = vmatpush1.bf16.msra.mxu0 0
  %3850 = vmatprep.subr.bf16.mxu0 0
  %3851 = vmatpush1.bf16.msra.mxu0 0
  %3852 = vmatprep.mubr.bf16.mxu0 0
  %3853 = vmatmul.mubr.bf16.gmra.mrb[0].mxu0 %v3659
  %v3854 = vpop.f32.mrb[0].mxu0
  %v3855 = vadd.f32 0.0, %v3854
  %v3856 = vpop.f32.mrb[0].mxu0
  %v3857 = vadd.f32 0.0, %v3856
  %v3858 = vpop.f32.mrb[0].mxu0
  %v3859 = vpop.f32.mrb[0].mxu0
  %3860 = vdwg.mxu0
  %3861 = vmatprep.subr.bf16.mxu0 0
  %3862 = vmatpush1.bf16.msra.mxu0 %v3774
  %3863 = vmatprep.subr.bf16.mxu0 0
  %3864 = vmatpush1.bf16.msra.mxu0 %v3777
  %3865 = vmatprep.subr.bf16.mxu0 0
  %3866 = vmatpush1.bf16.msra.mxu0 %v3780
  %3867 = vmatprep.subr.bf16.mxu0 0
  %3868 = vmatpush1.bf16.msra.mxu0 %v3783
  %3869 = vmatprep.subr.bf16.mxu0 0
  %3870 = vmatpush1.bf16.msra.mxu0 %v3786
  %3871 = vmatprep.subr.bf16.mxu0 0
  %3872 = vmatpush1.bf16.msra.mxu0 %v3789
  %3873 = vmatprep.subr.bf16.mxu0 0
  %3874 = vmatpush1.bf16.msra.mxu0 %v3792
  %3875 = vmatprep.subr.bf16.mxu0 0
  %3876 = vmatpush1.bf16.msra.mxu0 %v3795
  %3877 = vmatprep.subr.bf16.mxu0 0
  %3878 = vmatpush1.bf16.msra.mxu0 0
  %3879 = vmatprep.subr.bf16.mxu0 0
  %3880 = vmatpush1.bf16.msra.mxu0 0
  %3881 = vmatprep.subr.bf16.mxu0 0
  %3882 = vmatpush1.bf16.msra.mxu0 0
  %3883 = vmatprep.subr.bf16.mxu0 0
  %3884 = vmatpush1.bf16.msra.mxu0 0
  %3885 = vmatprep.subr.bf16.mxu0 0
  %3886 = vmatpush1.bf16.msra.mxu0 0
  %3887 = vmatprep.subr.bf16.mxu0 0
  %3888 = vmatpush1.bf16.msra.mxu0 0
  %3889 = vmatprep.subr.bf16.mxu0 0
  %3890 = vmatpush1.bf16.msra.mxu0 0
  %3891 = vmatprep.subr.bf16.mxu0 0
  %3892 = vmatpush1.bf16.msra.mxu0 0
  %3893 = vmatprep.mubr.bf16.mxu0 0
  %3894 = vmatmul.mubr.bf16.gmra.mrb[0].mxu0 %v3659
  %v3895 = vpop.f32.mrb[0].mxu0
  %v3896 = vadd.f32 0.0, %v3895
  %v3897 = vpop.f32.mrb[0].mxu0
  %v3898 = vpop.f32.mrb[0].mxu0
  %v3899 = vpop.f32.mrb[0].mxu0
  %3900 = vdwg.mxu0
  %s3901 = scalar_lea.vmem %s2, 6
  %v3902 = vld [vmem:[%s3901] sm:$0x3f]
  %v3903 = vadd.f32 %v3902, %v3855
  %v3904 = vxor.u32 %v3903, 2147483648
  %v3905 = vmul.f32 %v3904, 1.442695
  %v3906 = vpow.pop %v3905
  %v3907 = vadd.f32 %v3906, 1.0
  %v3908 = vrcp.pop %v3907
  %v3909 = vmul.f32 1.0, %v3908
  %v3911 = vrot.slane %v3902, 2
  %v3913 = vadd.f32 %v3911, %v3857
  %v3914 = vxor.u32 %v3913, 2147483648
  %v3915 = vmul.f32 %v3914, 1.442695
  %v3916 = vpow.pop %v3915
  %v3917 = vadd.f32 %v3916, 1.0
  %v3918 = vrcp.pop %v3917
  %v3919 = vmul.f32 1.0, %v3918
  %v3920 = vadd.f32 %v3896, %v575
  %v3921 = vmul.f32 %v3909, %v3920
  %v3922 = vrot.slane %v3902, 4
  %v3924 = vadd.f32 %v3922, %v3921
  %v3925 = vtanh.pop %v3924
  %v3926 = vsub.f32 1.0, %v3919
  %v3927 = vmul.f32 %v3926, %v3925
  %v3928 = vmul.f32 %v3919, %v3387
  %v3929 = vadd.f32 %v3927, %v3928
  %v3930 = vsel %vm1158, %v3658, 0.0
  %s3931 = scalar_lea.vmem %s7, 12
  %3932 = vst [vmem:[%s3931] sm:$0x3] %v3930
  %v3933 = vsel %vm1150, %v3929, 0.0
  %s3934 = scalar_lea.vmem %s8, 2
  %3935 = vst [vmem:[%s3934] sm:$0x3] %v3933
  %v3936 = vsel %vm1158, %v3658, %v3386
  %v3937 = vsel %vm1150, %v3929, %v3387
  %v3938 = vpack.c.bf16 %v3936, %v3936
  %v3939 = vld [vmem:[%s3] sm:$0xff]
  %v3940 = vld [vmem:[%s3 + $0x8] sm:$0xf]
  %v3941 = vld [vmem:[%s3 + $0xc] sm:$0xff]
  %v3942 = vld [vmem:[%s3 + $0x14] sm:$0xf]
  %v3943 = vld [vmem:[%s3 + $0x18] sm:$0xff]
  %v3944 = vld [vmem:[%s3 + $0x20] sm:$0xf]
  %v3945 = vld [vmem:[%s3 + $0x24] sm:$0xff]
  %v3946 = vld [vmem:[%s3 + $0x2c] sm:$0xf]
  %v3947 = vld [vmem:[%s3 + $0x30] sm:$0xff]
  %v3948 = vld [vmem:[%s3 + $0x38] sm:$0xf]
  %v3949 = vld [vmem:[%s3 + $0x3c] sm:$0xff]
  %v3950 = vld [vmem:[%s3 + $0x44] sm:$0xf]
  %v3951 = vld [vmem:[%s3 + $0x48] sm:$0xff]
  %v3952 = vld [vmem:[%s3 + $0x50] sm:$0xf]
  %v3953 = vld [vmem:[%s3 + $0x54] sm:$0xff]
  %v3954 = vld [vmem:[%s3 + $0x5c] sm:$0xf]
  %v3955 = vld [vmem:[%s3 + $0x60] sm:$0xff]
  %v3956 = vld [vmem:[%s3 + $0x68] sm:$0xf]
  %v3957 = vld [vmem:[%s3 + $0x6c] sm:$0xff]
  %v3958 = vld [vmem:[%s3 + $0x74] sm:$0xf]
  %v3959 = vld [vmem:[%s3 + $0x78] sm:$0xff]
  %v3960 = vld [vmem:[%s3 + $0x80] sm:$0xf]
  %v3961 = vld [vmem:[%s3 + $0x84] sm:$0xff]
  %v3962 = vld [vmem:[%s3 + $0x8c] sm:$0xf]
  %v3963 = vld [vmem:[%s3 + $0x90] sm:$0xff]
  %v3964 = vld [vmem:[%s3 + $0x98] sm:$0xf]
  %v3965 = vld [vmem:[%s3 + $0x9c] sm:$0xff]
  %v3966 = vld [vmem:[%s3 + $0xa4] sm:$0xf]
  %v3967 = vld [vmem:[%s3 + $0xa8] sm:$0xff]
  %v3968 = vld [vmem:[%s3 + $0xb0] sm:$0xf]
  %v3969 = vld [vmem:[%s3 + $0xb4] sm:$0xff]
  %v3970 = vld [vmem:[%s3 + $0xbc] sm:$0xf]
  %v4003 = vunpack.c.l.b16 %v3939
  %v4004 = vunpack.c.h.b16 %v3939
  %v4005 = vunpack.c.l.b16 %v3940
  %v4006 = vunpack.c.l.b16 %v3941
  %v4007 = vunpack.c.h.b16 %v3941
  %v4008 = vunpack.c.l.b16 %v3942
  %v4009 = vunpack.c.l.b16 %v3943
  %v4010 = vunpack.c.h.b16 %v3943
  %v4011 = vunpack.c.l.b16 %v3944
  %v4012 = vunpack.c.l.b16 %v3945
  %v4013 = vunpack.c.h.b16 %v3945
  %v4014 = vunpack.c.l.b16 %v3946
  %v4015 = vunpack.c.l.b16 %v3947
  %v4016 = vunpack.c.h.b16 %v3947
  %v4017 = vunpack.c.l.b16 %v3948
  %v4018 = vunpack.c.l.b16 %v3949
  %v4019 = vunpack.c.h.b16 %v3949
  %v4020 = vunpack.c.l.b16 %v3950
  %v4021 = vunpack.c.l.b16 %v3951
  %v4022 = vunpack.c.h.b16 %v3951
  %v4023 = vunpack.c.l.b16 %v3952
  %v4024 = vunpack.c.l.b16 %v3953
  %v4025 = vunpack.c.h.b16 %v3953
  %v4026 = vunpack.c.l.b16 %v3954
  %v4027 = vunpack.c.l.b16 %v3955
  %v4028 = vunpack.c.h.b16 %v3955
  %v4029 = vunpack.c.l.b16 %v3956
  %v4030 = vunpack.c.l.b16 %v3957
  %v4031 = vunpack.c.h.b16 %v3957
  %v4032 = vunpack.c.l.b16 %v3958
  %v4033 = vunpack.c.l.b16 %v3959
  %v4034 = vunpack.c.h.b16 %v3959
  %v4035 = vunpack.c.l.b16 %v3960
  %v4036 = vunpack.c.l.b16 %v3961
  %v4037 = vunpack.c.h.b16 %v3961
  %v4038 = vunpack.c.l.b16 %v3962
  %v4039 = vunpack.c.l.b16 %v3963
  %v4040 = vunpack.c.h.b16 %v3963
  %v4041 = vunpack.c.l.b16 %v3964
  %v4042 = vunpack.c.l.b16 %v3965
  %v4043 = vunpack.c.h.b16 %v3965
  %v4044 = vunpack.c.l.b16 %v3966
  %v4045 = vunpack.c.l.b16 %v3967
  %v4046 = vunpack.c.h.b16 %v3967
  %v4047 = vunpack.c.l.b16 %v3968
  %v4048 = vunpack.c.l.b16 %v3969
  %v4049 = vunpack.c.h.b16 %v3969
  %v4050 = vunpack.c.l.b16 %v3970
  %v4051 = vpack.c.b16 %v4006, %v4003
  %v4052 = vpack.c.b16 %v4007, %v4004
  %v4053 = vpack.c.b16 %v4008, %v4005
  %v4054 = vpack.c.b16 %v4012, %v4009
  %v4055 = vpack.c.b16 %v4013, %v4010
  %v4056 = vpack.c.b16 %v4014, %v4011
  %v4057 = vpack.c.b16 %v4018, %v4015
  %v4058 = vpack.c.b16 %v4019, %v4016
  %v4059 = vpack.c.b16 %v4020, %v4017
  %v4060 = vpack.c.b16 %v4024, %v4021
  %v4061 = vpack.c.b16 %v4025, %v4022
  %v4062 = vpack.c.b16 %v4026, %v4023
  %v4063 = vpack.c.b16 %v4030, %v4027
  %v4064 = vpack.c.b16 %v4031, %v4028
  %v4065 = vpack.c.b16 %v4032, %v4029
  %v4066 = vpack.c.b16 %v4036, %v4033
  %v4067 = vpack.c.b16 %v4037, %v4034
  %v4068 = vpack.c.b16 %v4038, %v4035
  %v4069 = vpack.c.b16 %v4042, %v4039
  %v4070 = vpack.c.b16 %v4043, %v4040
  %v4071 = vpack.c.b16 %v4044, %v4041
  %v4072 = vpack.c.b16 %v4048, %v4045
  %v4073 = vpack.c.b16 %v4049, %v4046
  %v4074 = vpack.c.b16 %v4050, %v4047
  %4099 = vmatprep.subr.bf16.mxu0 %v4052
  %4100 = vmatpush1.bf16.msra.mxu0 %v4051
  %4101 = vmatprep.subr.bf16.mxu0 %v4055
  %4102 = vmatpush1.bf16.msra.mxu0 %v4054
  %4103 = vmatprep.subr.bf16.mxu0 %v4058
  %4104 = vmatpush1.bf16.msra.mxu0 %v4057
  %4105 = vmatprep.subr.bf16.mxu0 %v4061
  %4106 = vmatpush1.bf16.msra.mxu0 %v4060
  %4107 = vmatprep.subr.bf16.mxu0 %v4064
  %4108 = vmatpush1.bf16.msra.mxu0 %v4063
  %4109 = vmatprep.subr.bf16.mxu0 %v4067
  %4110 = vmatpush1.bf16.msra.mxu0 %v4066
  %4111 = vmatprep.subr.bf16.mxu0 %v4070
  %4112 = vmatpush1.bf16.msra.mxu0 %v4069
  %4113 = vmatprep.subr.bf16.mxu0 %v4073
  %4114 = vmatpush1.bf16.msra.mxu0 %v4072
  %4115 = vmatprep.subr.bf16.mxu0 0
  %4116 = vmatpush1.bf16.msra.mxu0 0
  %4117 = vmatprep.subr.bf16.mxu0 0
  %4118 = vmatpush1.bf16.msra.mxu0 0
  %4119 = vmatprep.subr.bf16.mxu0 0
  %4120 = vmatpush1.bf16.msra.mxu0 0
  %4121 = vmatprep.subr.bf16.mxu0 0
  %4122 = vmatpush1.bf16.msra.mxu0 0
  %4123 = vmatprep.subr.bf16.mxu0 0
  %4124 = vmatpush1.bf16.msra.mxu0 0
  %4125 = vmatprep.subr.bf16.mxu0 0
  %4126 = vmatpush1.bf16.msra.mxu0 0
  %4127 = vmatprep.subr.bf16.mxu0 0
  %4128 = vmatpush1.bf16.msra.mxu0 0
  %4129 = vmatprep.subr.bf16.mxu0 0
  %4130 = vmatpush1.bf16.msra.mxu0 0
  %4131 = vmatprep.mubr.bf16.mxu0 0
  %4132 = vmatmul.mubr.bf16.gmra.mrb[0].mxu0 %v3938
  %v4133 = vpop.f32.mrb[0].mxu0
  %v4134 = vadd.f32 0.0, %v4133
  %v4135 = vpop.f32.mrb[0].mxu0
  %v4136 = vadd.f32 0.0, %v4135
  %v4137 = vpop.f32.mrb[0].mxu0
  %v4138 = vpop.f32.mrb[0].mxu0
  %4139 = vdwg.mxu0
  %4140 = vmatprep.subr.bf16.mxu0 0
  %4141 = vmatpush1.bf16.msra.mxu0 %v4053
  %4142 = vmatprep.subr.bf16.mxu0 0
  %4143 = vmatpush1.bf16.msra.mxu0 %v4056
  %4144 = vmatprep.subr.bf16.mxu0 0
  %4145 = vmatpush1.bf16.msra.mxu0 %v4059
  %4146 = vmatprep.subr.bf16.mxu0 0
  %4147 = vmatpush1.bf16.msra.mxu0 %v4062
  %4148 = vmatprep.subr.bf16.mxu0 0
  %4149 = vmatpush1.bf16.msra.mxu0 %v4065
  %4150 = vmatprep.subr.bf16.mxu0 0
  %4151 = vmatpush1.bf16.msra.mxu0 %v4068
  %4152 = vmatprep.subr.bf16.mxu0 0
  %4153 = vmatpush1.bf16.msra.mxu0 %v4071
  %4154 = vmatprep.subr.bf16.mxu0 0
  %4155 = vmatpush1.bf16.msra.mxu0 %v4074
  %4156 = vmatprep.subr.bf16.mxu0 0
  %4157 = vmatpush1.bf16.msra.mxu0 0
  %4158 = vmatprep.subr.bf16.mxu0 0
  %4159 = vmatpush1.bf16.msra.mxu0 0
  %4160 = vmatprep.subr.bf16.mxu0 0
  %4161 = vmatpush1.bf16.msra.mxu0 0
  %4162 = vmatprep.subr.bf16.mxu0 0
  %4163 = vmatpush1.bf16.msra.mxu0 0
  %4164 = vmatprep.subr.bf16.mxu0 0
  %4165 = vmatpush1.bf16.msra.mxu0 0
  %4166 = vmatprep.subr.bf16.mxu0 0
  %4167 = vmatpush1.bf16.msra.mxu0 0
  %4168 = vmatprep.subr.bf16.mxu0 0
  %4169 = vmatpush1.bf16.msra.mxu0 0
  %4170 = vmatprep.subr.bf16.mxu0 0
  %4171 = vmatpush1.bf16.msra.mxu0 0
  %4172 = vmatprep.mubr.bf16.mxu0 0
  %4173 = vmatmul.mubr.bf16.gmra.mrb[0].mxu0 %v3938
  %v4174 = vpop.f32.mrb[0].mxu0
  %v4175 = vadd.f32 0.0, %v4174
  %v4176 = vpop.f32.mrb[0].mxu0
  %v4177 = vpop.f32.mrb[0].mxu0
  %v4178 = vpop.f32.mrb[0].mxu0
  %4179 = vdwg.mxu0
  %s4180 = scalar_lea.vmem %s1, 42
  %v4181 = vld [vmem:[%s4180] sm:$0x3f]
  %v4182 = vadd.f32 %v4181, %v4134
  %v4183 = vxor.u32 %v4182, 2147483648
  %v4184 = vmul.f32 %v4183, 1.442695
  %v4185 = vpow.pop %v4184
  %v4186 = vadd.f32 %v4185, 1.0
  %v4187 = vrcp.pop %v4186
  %v4188 = vmul.f32 1.0, %v4187
  %v4190 = vrot.slane %v4181, 2
  %v4192 = vadd.f32 %v4190, %v4136
  %v4193 = vxor.u32 %v4192, 2147483648
  %v4194 = vmul.f32 %v4193, 1.442695
  %v4195 = vpow.pop %v4194
  %v4196 = vadd.f32 %v4195, 1.0
  %v4197 = vrcp.pop %v4196
  %v4198 = vmul.f32 1.0, %v4197
  %v4199 = vadd.f32 %v4175, %v299
  %v4200 = vmul.f32 %v4188, %v4199
  %v4201 = vrot.slane %v4181, 4
  %v4203 = vadd.f32 %v4201, %v4200
  %v4204 = vtanh.pop %v4203
  %v4205 = vsub.f32 1.0, %v4198
  %v4206 = vmul.f32 %v4205, %v4204
  %v4207 = vmul.f32 %v4198, %v3936
  %v4208 = vadd.f32 %v4206, %v4207
  %v4209 = vpack.c.bf16 %v3937, %v3937
  %v4210 = vld [vmem:[%s4] sm:$0xff]
  %v4211 = vld [vmem:[%s4 + $0x8] sm:$0xf]
  %v4212 = vld [vmem:[%s4 + $0xc] sm:$0xff]
  %v4213 = vld [vmem:[%s4 + $0x14] sm:$0xf]
  %v4214 = vld [vmem:[%s4 + $0x18] sm:$0xff]
  %v4215 = vld [vmem:[%s4 + $0x20] sm:$0xf]
  %v4216 = vld [vmem:[%s4 + $0x24] sm:$0xff]
  %v4217 = vld [vmem:[%s4 + $0x2c] sm:$0xf]
  %v4218 = vld [vmem:[%s4 + $0x30] sm:$0xff]
  %v4219 = vld [vmem:[%s4 + $0x38] sm:$0xf]
  %v4220 = vld [vmem:[%s4 + $0x3c] sm:$0xff]
  %v4221 = vld [vmem:[%s4 + $0x44] sm:$0xf]
  %v4222 = vld [vmem:[%s4 + $0x48] sm:$0xff]
  %v4223 = vld [vmem:[%s4 + $0x50] sm:$0xf]
  %v4224 = vld [vmem:[%s4 + $0x54] sm:$0xff]
  %v4225 = vld [vmem:[%s4 + $0x5c] sm:$0xf]
  %v4226 = vld [vmem:[%s4 + $0x60] sm:$0xff]
  %v4227 = vld [vmem:[%s4 + $0x68] sm:$0xf]
  %v4228 = vld [vmem:[%s4 + $0x6c] sm:$0xff]
  %v4229 = vld [vmem:[%s4 + $0x74] sm:$0xf]
  %v4230 = vld [vmem:[%s4 + $0x78] sm:$0xff]
  %v4231 = vld [vmem:[%s4 + $0x80] sm:$0xf]
  %v4232 = vld [vmem:[%s4 + $0x84] sm:$0xff]
  %v4233 = vld [vmem:[%s4 + $0x8c] sm:$0xf]
  %v4234 = vld [vmem:[%s4 + $0x90] sm:$0xff]
  %v4235 = vld [vmem:[%s4 + $0x98] sm:$0xf]
  %v4236 = vld [vmem:[%s4 + $0x9c] sm:$0xff]
  %v4237 = vld [vmem:[%s4 + $0xa4] sm:$0xf]
  %v4238 = vld [vmem:[%s4 + $0xa8] sm:$0xff]
  %v4239 = vld [vmem:[%s4 + $0xb0] sm:$0xf]
  %v4240 = vld [vmem:[%s4 + $0xb4] sm:$0xff]
  %v4241 = vld [vmem:[%s4 + $0xbc] sm:$0xf]
  %v4274 = vunpack.c.l.b16 %v4210
  %v4275 = vunpack.c.h.b16 %v4210
  %v4276 = vunpack.c.l.b16 %v4211
  %v4277 = vunpack.c.l.b16 %v4212
  %v4278 = vunpack.c.h.b16 %v4212
  %v4279 = vunpack.c.l.b16 %v4213
  %v4280 = vunpack.c.l.b16 %v4214
  %v4281 = vunpack.c.h.b16 %v4214
  %v4282 = vunpack.c.l.b16 %v4215
  %v4283 = vunpack.c.l.b16 %v4216
  %v4284 = vunpack.c.h.b16 %v4216
  %v4285 = vunpack.c.l.b16 %v4217
  %v4286 = vunpack.c.l.b16 %v4218
  %v4287 = vunpack.c.h.b16 %v4218
  %v4288 = vunpack.c.l.b16 %v4219
  %v4289 = vunpack.c.l.b16 %v4220
  %v4290 = vunpack.c.h.b16 %v4220
  %v4291 = vunpack.c.l.b16 %v4221
  %v4292 = vunpack.c.l.b16 %v4222
  %v4293 = vunpack.c.h.b16 %v4222
  %v4294 = vunpack.c.l.b16 %v4223
  %v4295 = vunpack.c.l.b16 %v4224
  %v4296 = vunpack.c.h.b16 %v4224
  %v4297 = vunpack.c.l.b16 %v4225
  %v4298 = vunpack.c.l.b16 %v4226
  %v4299 = vunpack.c.h.b16 %v4226
  %v4300 = vunpack.c.l.b16 %v4227
  %v4301 = vunpack.c.l.b16 %v4228
  %v4302 = vunpack.c.h.b16 %v4228
  %v4303 = vunpack.c.l.b16 %v4229
  %v4304 = vunpack.c.l.b16 %v4230
  %v4305 = vunpack.c.h.b16 %v4230
  %v4306 = vunpack.c.l.b16 %v4231
  %v4307 = vunpack.c.l.b16 %v4232
  %v4308 = vunpack.c.h.b16 %v4232
  %v4309 = vunpack.c.l.b16 %v4233
  %v4310 = vunpack.c.l.b16 %v4234
  %v4311 = vunpack.c.h.b16 %v4234
  %v4312 = vunpack.c.l.b16 %v4235
  %v4313 = vunpack.c.l.b16 %v4236
  %v4314 = vunpack.c.h.b16 %v4236
  %v4315 = vunpack.c.l.b16 %v4237
  %v4316 = vunpack.c.l.b16 %v4238
  %v4317 = vunpack.c.h.b16 %v4238
  %v4318 = vunpack.c.l.b16 %v4239
  %v4319 = vunpack.c.l.b16 %v4240
  %v4320 = vunpack.c.h.b16 %v4240
  %v4321 = vunpack.c.l.b16 %v4241
  %v4322 = vpack.c.b16 %v4277, %v4274
  %v4323 = vpack.c.b16 %v4278, %v4275
  %v4324 = vpack.c.b16 %v4279, %v4276
  %v4325 = vpack.c.b16 %v4283, %v4280
  %v4326 = vpack.c.b16 %v4284, %v4281
  %v4327 = vpack.c.b16 %v4285, %v4282
  %v4328 = vpack.c.b16 %v4289, %v4286
  %v4329 = vpack.c.b16 %v4290, %v4287
  %v4330 = vpack.c.b16 %v4291, %v4288
  %v4331 = vpack.c.b16 %v4295, %v4292
  %v4332 = vpack.c.b16 %v4296, %v4293
  %v4333 = vpack.c.b16 %v4297, %v4294
  %v4334 = vpack.c.b16 %v4301, %v4298
  %v4335 = vpack.c.b16 %v4302, %v4299
  %v4336 = vpack.c.b16 %v4303, %v4300
  %v4337 = vpack.c.b16 %v4307, %v4304
  %v4338 = vpack.c.b16 %v4308, %v4305
  %v4339 = vpack.c.b16 %v4309, %v4306
  %v4340 = vpack.c.b16 %v4313, %v4310
  %v4341 = vpack.c.b16 %v4314, %v4311
  %v4342 = vpack.c.b16 %v4315, %v4312
  %v4343 = vpack.c.b16 %v4319, %v4316
  %v4344 = vpack.c.b16 %v4320, %v4317
  %v4345 = vpack.c.b16 %v4321, %v4318
  %4370 = vmatprep.subr.bf16.mxu0 %v4323
  %4371 = vmatpush1.bf16.msra.mxu0 %v4322
  %4372 = vmatprep.subr.bf16.mxu0 %v4326
  %4373 = vmatpush1.bf16.msra.mxu0 %v4325
  %4374 = vmatprep.subr.bf16.mxu0 %v4329
  %4375 = vmatpush1.bf16.msra.mxu0 %v4328
  %4376 = vmatprep.subr.bf16.mxu0 %v4332
  %4377 = vmatpush1.bf16.msra.mxu0 %v4331
  %4378 = vmatprep.subr.bf16.mxu0 %v4335
  %4379 = vmatpush1.bf16.msra.mxu0 %v4334
  %4380 = vmatprep.subr.bf16.mxu0 %v4338
  %4381 = vmatpush1.bf16.msra.mxu0 %v4337
  %4382 = vmatprep.subr.bf16.mxu0 %v4341
  %4383 = vmatpush1.bf16.msra.mxu0 %v4340
  %4384 = vmatprep.subr.bf16.mxu0 %v4344
  %4385 = vmatpush1.bf16.msra.mxu0 %v4343
  %4386 = vmatprep.subr.bf16.mxu0 0
  %4387 = vmatpush1.bf16.msra.mxu0 0
  %4388 = vmatprep.subr.bf16.mxu0 0
  %4389 = vmatpush1.bf16.msra.mxu0 0
  %4390 = vmatprep.subr.bf16.mxu0 0
  %4391 = vmatpush1.bf16.msra.mxu0 0
  %4392 = vmatprep.subr.bf16.mxu0 0
  %4393 = vmatpush1.bf16.msra.mxu0 0
  %4394 = vmatprep.subr.bf16.mxu0 0
  %4395 = vmatpush1.bf16.msra.mxu0 0
  %4396 = vmatprep.subr.bf16.mxu0 0
  %4397 = vmatpush1.bf16.msra.mxu0 0
  %4398 = vmatprep.subr.bf16.mxu0 0
  %4399 = vmatpush1.bf16.msra.mxu0 0
  %4400 = vmatprep.subr.bf16.mxu0 0
  %4401 = vmatpush1.bf16.msra.mxu0 0
  %4402 = vmatprep.mubr.bf16.mxu0 0
  %4403 = vmatmul.mubr.bf16.gmra.mrb[0].mxu0 %v4209
  %v4404 = vpop.f32.mrb[0].mxu0
  %v4405 = vadd.f32 0.0, %v4404
  %v4406 = vpop.f32.mrb[0].mxu0
  %v4407 = vadd.f32 0.0, %v4406
  %v4408 = vpop.f32.mrb[0].mxu0
  %v4409 = vpop.f32.mrb[0].mxu0
  %4410 = vdwg.mxu0
  %4411 = vmatprep.subr.bf16.mxu0 0
  %4412 = vmatpush1.bf16.msra.mxu0 %v4324
  %4413 = vmatprep.subr.bf16.mxu0 0
  %4414 = vmatpush1.bf16.msra.mxu0 %v4327
  %4415 = vmatprep.subr.bf16.mxu0 0
  %4416 = vmatpush1.bf16.msra.mxu0 %v4330
  %4417 = vmatprep.subr.bf16.mxu0 0
  %4418 = vmatpush1.bf16.msra.mxu0 %v4333
  %4419 = vmatprep.subr.bf16.mxu0 0
  %4420 = vmatpush1.bf16.msra.mxu0 %v4336
  %4421 = vmatprep.subr.bf16.mxu0 0
  %4422 = vmatpush1.bf16.msra.mxu0 %v4339
  %4423 = vmatprep.subr.bf16.mxu0 0
  %4424 = vmatpush1.bf16.msra.mxu0 %v4342
  %4425 = vmatprep.subr.bf16.mxu0 0
  %4426 = vmatpush1.bf16.msra.mxu0 %v4345
  %4427 = vmatprep.subr.bf16.mxu0 0
  %4428 = vmatpush1.bf16.msra.mxu0 0
  %4429 = vmatprep.subr.bf16.mxu0 0
  %4430 = vmatpush1.bf16.msra.mxu0 0
  %4431 = vmatprep.subr.bf16.mxu0 0
  %4432 = vmatpush1.bf16.msra.mxu0 0
  %4433 = vmatprep.subr.bf16.mxu0 0
  %4434 = vmatpush1.bf16.msra.mxu0 0
  %4435 = vmatprep.subr.bf16.mxu0 0
  %4436 = vmatpush1.bf16.msra.mxu0 0
  %4437 = vmatprep.subr.bf16.mxu0 0
  %4438 = vmatpush1.bf16.msra.mxu0 0
  %4439 = vmatprep.subr.bf16.mxu0 0
  %4440 = vmatpush1.bf16.msra.mxu0 0
  %4441 = vmatprep.subr.bf16.mxu0 0
  %4442 = vmatpush1.bf16.msra.mxu0 0
  %4443 = vmatprep.mubr.bf16.mxu0 0
  %4444 = vmatmul.mubr.bf16.gmra.mrb[0].mxu0 %v4209
  %v4445 = vpop.f32.mrb[0].mxu0
  %v4446 = vadd.f32 0.0, %v4445
  %v4447 = vpop.f32.mrb[0].mxu0
  %v4448 = vpop.f32.mrb[0].mxu0
  %v4449 = vpop.f32.mrb[0].mxu0
  %4450 = vdwg.mxu0
  %v4451 = vld [vmem:[%s2] sm:$0x3f]
  %v4452 = vadd.f32 %v4451, %v4405
  %v4453 = vxor.u32 %v4452, 2147483648
  %v4454 = vmul.f32 %v4453, 1.442695
  %v4455 = vpow.pop %v4454
  %v4456 = vadd.f32 %v4455, 1.0
  %v4457 = vrcp.pop %v4456
  %v4458 = vmul.f32 1.0, %v4457
  %v4460 = vrot.slane %v4451, 2
  %v4462 = vadd.f32 %v4460, %v4407
  %v4463 = vxor.u32 %v4462, 2147483648
  %v4464 = vmul.f32 %v4463, 1.442695
  %v4465 = vpow.pop %v4464
  %v4466 = vadd.f32 %v4465, 1.0
  %v4467 = vrcp.pop %v4466
  %v4468 = vmul.f32 1.0, %v4467
  %v4469 = vadd.f32 %v4446, %v575
  %v4470 = vmul.f32 %v4458, %v4469
  %v4471 = vrot.slane %v4451, 4
  %v4473 = vadd.f32 %v4471, %v4470
  %v4474 = vtanh.pop %v4473
  %v4475 = vsub.f32 1.0, %v4468
  %v4476 = vmul.f32 %v4475, %v4474
  %v4477 = vmul.f32 %v4468, %v3937
  %v4478 = vadd.f32 %v4476, %v4477
  %v4479 = vsel %vm598, %v4208, 0.0
  %s4480 = scalar_lea.vmem %s7, 14
  %4481 = vst [vmem:[%s4480] sm:$0x3] %v4479
  %v4482 = vsel %vm591, %v4478, 0.0
  %4483 = vst [vmem:[%s8] sm:$0x3] %v4482
  %v4484 = vsel %vm598, %v4208, %v3936
  %v4485 = vsel %vm591, %v4478, %v3937
  %4486 = vst [vmem:[%s9] sm:$0x3] %v4484
  %4487 = vst [vmem:[%s10] sm:$0x3] %v4485
  // Predicated region
  $region30: #{block_1_forward.2} parent=0 // pred_check
    _
  $region31: #{block_1_forward.2} parent=0 // pred_check_branch
    %4489 = sbr.rel (0) target = $region33
  $region32: #{block_1_forward.2} parent=0 // pred_region
    _
  $region33: #{block_1_forward.2} parent=0 // pred_fallthru
    _
  // Predicated region
  $region34: #{block_1_forward.2} parent=0 // pred_check
    _
  $region35: #{block_1_forward.2} parent=0 // pred_check_branch
    %4491 = sbr.rel (0) target = $region37
  $region36: #{block_1_forward.2} parent=0 // pred_region
    _
  $region37: #{block_1_forward.2} parent=0 // pred_fallthru
    _
  // Predicated region
  $region38: #{block_1_forward.2} parent=0 // pred_check
    _
  $region39: #{block_1_forward.2} parent=0 // pred_check_branch
    %4493 = sbr.rel (0) target = $region41
  $region40: #{block_1_forward.2} parent=0 // pred_region
    _
  $region41: #{block_1_forward.2} parent=0 // pred_fallthru
    _
  // Predicated region
  $region42: #{block_1_forward.2} parent=0 // pred_check
    _
  $region43: #{block_1_forward.2} parent=0 // pred_check_branch
    %4495 = sbr.rel (0) target = $region45
  $region44: #{block_1_forward.2} parent=0 // pred_region
    _
  $region45: #{block_1_forward.2} parent=0 // pred_fallthru
    _
  // Predicated region
  $region46: #{block_1_forward.2} parent=0 // pred_check
    _
  $region47: #{block_1_forward.2} parent=0 // pred_check_branch
    %4497 = sbr.rel (0) target = $region49
  $region48: #{block_1_forward.2} parent=0 // pred_region
    _
  $region49: #{block_1_forward.2} parent=0 // pred_fallthru
    _
  // Predicated region
  $region50: #{block_1_forward.2} parent=0 // pred_check
    _
  $region51: #{block_1_forward.2} parent=0 // pred_check_branch
    %4499 = sbr.rel (0) target = $region53
  $region52: #{block_1_forward.2} parent=0 // pred_region
    _
  $region53: #{block_1_forward.2} parent=0 // pred_fallthru
    _
  // Predicated region
  $region54: #{block_1_forward.2} parent=0 // pred_check
    _
  $region55: #{block_1_forward.2} parent=0 // pred_check_branch
    %4501 = sbr.rel (0) target = $region57
  $region56: #{block_1_forward.2} parent=0 // pred_region
    _
  $region57: #{block_1_forward.2} parent=0 // pred_fallthru
    _
  // Predicated region
  $region58: #{block_1_forward.2} parent=0 // pred_check
    _
  $region59: #{block_1_forward.2} parent=0 // pred_check_branch
    %4503 = sbr.rel (0) target = $region61
  $region60: #{block_1_forward.2} parent=0 // pred_region
    _
  $region61: #{block_1_forward.2} parent=0 // pred_fallthru
    _

</llo_original>
